<compile_context>
chip_gen: v7x
topology: tpu7x:2x2x1
jax: 0.10.0
libtpu: 0.0.40
codegen_flags: <defaults>
</compile_context>

<pallas_src>
import functools

import jax
import jax.numpy as jnp
from jax.experimental import pallas as pl
from jax.experimental.pallas import tpu as pltpu


C_PAD = 128          # pad channel axis to a full lane width (lane-dense stores/VPU)
BN_EPS = 1e-5
VMEM_LIMIT = 32 * 1024 * 1024   # safe scoped-VMEM budget on v5e/v6e/v7x


# ----------------------------------------------------------------------------
# Kernel 1: fused 3x3 conv (pad=1) + bias + per-image BN statistics.
# ----------------------------------------------------------------------------
def _conv_bnstat_kernel(xp_ref, w_ref, b_ref, feat_ref, stat_ref, *, H, W, Cin):
    xp = xp_ref[0]                                     # [H+2, W+2, Cin] bf16
    acc = jnp.zeros((H * W, C_PAD), jnp.float32)
    k = 0
    for dy in range(3):                                # im2col stays in VMEM:
        for dx in range(3):                            # 9 shifted [HW,Cin]@[Cin,C] matmuls
            patch = xp[dy:dy + H, dx:dx + W, :].reshape(H * W, Cin)
            acc = acc + jnp.dot(patch, w_ref[k],
                                preferred_element_type=jnp.float32)
            k += 1
    y = acc + b_ref[...]                               # [H*W, C_PAD] f32
    feat_ref[0, :, :] = y
    s = jnp.sum(y, axis=0, keepdims=True)              # [1, C_PAD]
    ss = jnp.sum(y * y, axis=0, keepdims=True)         # [1, C_PAD]
    stat_ref[0, :, :] = jnp.concatenate([s, ss], axis=0)


def conv_bnstats(xp, w, b, *, H, W):
    N = xp.shape[0]
    Cin = xp.shape[-1]
    HW = H * W
    kernel = functools.partial(_conv_bnstat_kernel, H=H, W=W, Cin=Cin)
    return pl.pallas_call(
        kernel,
        out_shape=(
            jax.ShapeDtypeStruct((N, HW, C_PAD), jnp.float32),   # conv features
            jax.ShapeDtypeStruct((N, 2, C_PAD), jnp.float32),    # per-image sum / sumsq
        ),
        grid=(N,),
        in_specs=[
            pl.BlockSpec((1, H + 2, W + 2, Cin), lambda n: (n, 0, 0, 0)),
            pl.BlockSpec((9, Cin, C_PAD), lambda n: (0, 0, 0)),
            pl.BlockSpec((1, C_PAD), lambda n: (0, 0)),
        ],
        out_specs=(
            pl.BlockSpec((1, HW, C_PAD), lambda n: (n, 0, 0)),
            pl.BlockSpec((1, 2, C_PAD), lambda n: (n, 0, 0)),
        ),
        compiler_params=pltpu.CompilerParams(
            dimension_semantics=("parallel",),
            vmem_limit_bytes=VMEM_LIMIT,
        ),
    )(xp, w, b)


# ----------------------------------------------------------------------------
# Kernel 2: batch-statistic BN apply + ReLU + pooled partial sums (lane-dense).
#   scale/shift are precomputed from the kernel-1 statistics, so each tile is
#   independent -> fully pipelined, both grid axes "parallel" (megacore).
# ----------------------------------------------------------------------------
def _bn_relu_pool_kernel(f_ref, scale_ref, shift_ref, pool_ref):
    x = f_ref[0, :, :]                                  # [TILE_HW, C_PAD] f32
    y = jnp.maximum(x * scale_ref[...] + shift_ref[...], 0.0)
    t, c = y.shape
    part = jnp.sum(y.reshape(t // 8, 8, c), axis=0)     # [8, C_PAD] partial pooled sums
    pool_ref[0, 0, :, :] = part


def bn_relu_pool(feat, scale, shift, *, tile_hw):
    N, HW, C = feat.shape
    assert HW % tile_hw == 0 and tile_hw % 8 == 0
    nblk = HW // tile_hw
    return pl.pallas_call(
        _bn_relu_pool_kernel,
        out_shape=jax.ShapeDtypeStruct((N, nblk, 8, C), jnp.float32),
        grid=(N, nblk),
        in_specs=[
            pl.BlockSpec((1, tile_hw, C), lambda n, j: (n, j, 0)),
            pl.BlockSpec((1, C), lambda n, j: (0, 0)),
            pl.BlockSpec((1, C), lambda n, j: (0, 0)),
        ],
        out_specs=pl.BlockSpec((1, 1, 8, C), lambda n, j: (n, j, 0, 0)),
        compiler_params=pltpu.CompilerParams(
            dimension_semantics=("parallel", "parallel"),
            vmem_limit_bytes=VMEM_LIMIT,
        ),
    )(feat, scale, shift)


# ----------------------------------------------------------------------------
# Wrapper: layout conversion, stat combination, tiny head — plain XLA glue.
# ----------------------------------------------------------------------------
def ours_forward(x_nchw, params):
    N, Cin, H, W = x_nchw.shape
    HW = H * W

    # NCHW -> NHWC (channels on lanes), spatial pad=1, bf16 MXU operands.
    x = jnp.transpose(x_nchw, (0, 2, 3, 1)).astype(jnp.bfloat16)
    xp = jnp.pad(x, ((0, 0), (1, 1), (1, 1), (0, 0)))

    feat, stats = conv_bnstats(xp, params["conv_w"], params["conv_b"], H=H, W=W)

    # Batch-wise "Norm" statistics from the per-image partial sums (tiny f32 math).
    # TODO(synk): switch to a Welford-style merge for very large M (cancellation).
    M = N * HW
    s = jnp.sum(stats[:, 0, :], axis=0)
    ss = jnp.sum(stats[:, 1, :], axis=0)
    mean = s / M
    var = ss / M - mean * mean
    inv = jax.lax.rsqrt(var + BN_EPS)
    scale = params["bn_gamma"] * inv                    # [C_PAD]
    shift = params["bn_beta"] - mean * scale            # [C_PAD]

    tile_hw = 128 if HW % 128 == 0 else HW
    parts = bn_relu_pool(feat, scale[None, :], shift[None, :], tile_hw=tile_hw)
    pooled = jnp.sum(parts, axis=(1, 2)) / HW           # [N, C_PAD] global avg pool

    # Tiny classifier head: far below one MXU pass -> plain XLA.
    cout = params["head_w"].shape[0]
    logits = pooled[:, :cout] @ params["head_w"] + params["head_b"]
    return logits


def init_params(key, cin=4, cout=32, ncls=10):
    k1, k2, k3 = jax.random.split(key, 3)
    # conv weight stored as [9, Cin, C_PAD] (PyTorch [Cout,Cin,3,3] permuted to
    # [3,3,Cin,Cout], channel-padded to 128 lanes with zeros).
    conv_w = jnp.zeros((9, cin, C_PAD), jnp.float32)
    conv_w = conv_w.at[:, :, :cout].set(
        jax.random.normal(k1, (9, cin, cout), jnp.float32) * 0.05)
    conv_b = jnp.zeros((1, C_PAD), jnp.float32)
    bn_gamma = jnp.zeros((C_PAD,), jnp.float32).at[:cout].set(1.0)
    bn_beta = jnp.zeros((C_PAD,), jnp.float32)
    head_w = jax.random.normal(k2, (cout, ncls), jnp.float32) * 0.05
    head_b = jax.random.normal(k3, (ncls,), jnp.float32) * 0.01
    return dict(conv_w=conv_w.astype(jnp.bfloat16), conv_b=conv_b,
                bn_gamma=bn_gamma, bn_beta=bn_beta,
                head_w=head_w, head_b=head_b)


if __name__ == "__main__":
    key = jax.random.PRNGKey(0)
    kx, kp = jax.random.split(key)

    N, Cin, H, W = 2, 4, 16, 16
    x = jax.random.normal(kx, (N, Cin, H, W), jnp.float32)        # NCHW, like PyTorch
    params = init_params(kp, cin=Cin, cout=32, ncls=10)

    logits = jax.jit(ours_forward)(x, params)
    jax.block_until_ready(logits)
    assert logits.shape == (N, 10) and logits.dtype == jnp.float32
    print("KERNEL_OK")
</pallas_src>

<mosaic_0001>
module attributes {stable_mosaic.version = 11 : i64} {
  func.func @_conv_bnstat_kernel(%arg0: i32, %arg1: memref<1x18x18x4xbf16, #tpu.memory_space<vmem>>, %arg2: memref<9x4x128xbf16, #tpu.memory_space<vmem>>, %arg3: memref<1x128xf32, #tpu.memory_space<vmem>>, %arg4: memref<1x256x128xf32, #tpu.memory_space<vmem>>, %arg5: memref<1x2x128xf32, #tpu.memory_space<vmem>>) attributes {dimension_semantics = [#tpu.dimension_semantics<parallel>], iteration_bounds = array<i64: 2>, scalar_prefetch = 0 : i64, scratch_operands = 0 : i64, tpu.core_type = #tpu.core_type<tc>, window_params = [{transform_indices = @transform_0, window_bounds = array<i64: 1, 18, 18, 4>}, {pipeline_mode = #tpu.pipeline_mode<synchronous>, transform_indices = @transform_1, window_bounds = array<i64: 9, 4, 128>}, {pipeline_mode = #tpu.pipeline_mode<synchronous>, transform_indices = @transform_2, window_bounds = array<i64: 1, 128>}, {transform_indices = @transform_3, window_bounds = array<i64: 1, 256, 128>}, {transform_indices = @transform_4, window_bounds = array<i64: 1, 2, 128>}]} {
    %c0 = arith.constant 0 : index
    %c0_0 = arith.constant 0 : index
    %c0_1 = arith.constant 0 : index
    %c0_2 = arith.constant 0 : index
    %0 = vector.load %arg1[%c0, %c0_0, %c0_1, %c0_2] : memref<1x18x18x4xbf16, #tpu.memory_space<vmem>>, vector<1x18x18x4xbf16>
    %1 = vector.shape_cast %0 : vector<1x18x18x4xbf16> to vector<18x18x4xbf16>
    %cst = arith.constant 0.000000e+00 : f32
    %2 = vector.broadcast %cst : f32 to vector<256x128xf32>
    %3 = vector.extract_strided_slice %1 {offsets = [0, 0, 0], sizes = [16, 16, 4], strides = [1, 1, 1]} : vector<18x18x4xbf16> to vector<16x16x4xbf16>
    %4 = vector.shape_cast %3 : vector<16x16x4xbf16> to vector<256x4xbf16>
    %c0_3 = arith.constant 0 : index
    %c0_4 = arith.constant 0 : index
    %c0_5 = arith.constant 0 : index
    %5 = vector.load %arg2[%c0_3, %c0_4, %c0_5] : memref<9x4x128xbf16, #tpu.memory_space<vmem>>, vector<1x4x128xbf16>
    %6 = vector.shape_cast %5 : vector<1x4x128xbf16> to vector<4x128xbf16>
    %cst_6 = arith.constant dense<0.000000e+00> : vector<256x128xf32>
    %7 = tpu.matmul %4, %6, %cst_6 {dimension_numbers = #tpu.dot_dimension_numbers<[1], [0], [0], [1], [0, 0, 1, 1], [], []>} : vector<256x4xbf16>, vector<4x128xbf16>, vector<256x128xf32> -> vector<256x128xf32>
    %8 = arith.addf %2, %7 : vector<256x128xf32>
    %9 = vector.extract_strided_slice %1 {offsets = [0, 1, 0], sizes = [16, 16, 4], strides = [1, 1, 1]} : vector<18x18x4xbf16> to vector<16x16x4xbf16>
    %10 = vector.shape_cast %9 : vector<16x16x4xbf16> to vector<256x4xbf16>
    %c1 = arith.constant 1 : index
    %c0_7 = arith.constant 0 : index
    %c0_8 = arith.constant 0 : index
    %11 = vector.load %arg2[%c1, %c0_7, %c0_8] : memref<9x4x128xbf16, #tpu.memory_space<vmem>>, vector<1x4x128xbf16>
    %12 = vector.shape_cast %11 : vector<1x4x128xbf16> to vector<4x128xbf16>
    %cst_9 = arith.constant dense<0.000000e+00> : vector<256x128xf32>
    %13 = tpu.matmul %10, %12, %cst_9 {dimension_numbers = #tpu.dot_dimension_numbers<[1], [0], [0], [1], [0, 0, 1, 1], [], []>} : vector<256x4xbf16>, vector<4x128xbf16>, vector<256x128xf32> -> vector<256x128xf32>
    %14 = arith.addf %8, %13 : vector<256x128xf32>
    %15 = vector.extract_strided_slice %1 {offsets = [0, 2, 0], sizes = [16, 16, 4], strides = [1, 1, 1]} : vector<18x18x4xbf16> to vector<16x16x4xbf16>
    %16 = vector.shape_cast %15 : vector<16x16x4xbf16> to vector<256x4xbf16>
    %c2 = arith.constant 2 : index
    %c0_10 = arith.constant 0 : index
    %c0_11 = arith.constant 0 : index
    %17 = vector.load %arg2[%c2, %c0_10, %c0_11] : memref<9x4x128xbf16, #tpu.memory_space<vmem>>, vector<1x4x128xbf16>
    %18 = vector.shape_cast %17 : vector<1x4x128xbf16> to vector<4x128xbf16>
    %cst_12 = arith.constant dense<0.000000e+00> : vector<256x128xf32>
    %19 = tpu.matmul %16, %18, %cst_12 {dimension_numbers = #tpu.dot_dimension_numbers<[1], [0], [0], [1], [0, 0, 1, 1], [], []>} : vector<256x4xbf16>, vector<4x128xbf16>, vector<256x128xf32> -> vector<256x128xf32>
    %20 = arith.addf %14, %19 : vector<256x128xf32>
    %21 = vector.extract_strided_slice %1 {offsets = [1, 0, 0], sizes = [16, 16, 4], strides = [1, 1, 1]} : vector<18x18x4xbf16> to vector<16x16x4xbf16>
    %22 = vector.shape_cast %21 : vector<16x16x4xbf16> to vector<256x4xbf16>
    %c3 = arith.constant 3 : index
    %c0_13 = arith.constant 0 : index
    %c0_14 = arith.constant 0 : index
    %23 = vector.load %arg2[%c3, %c0_13, %c0_14] : memref<9x4x128xbf16, #tpu.memory_space<vmem>>, vector<1x4x128xbf16>
    %24 = vector.shape_cast %23 : vector<1x4x128xbf16> to vector<4x128xbf16>
    %cst_15 = arith.constant dense<0.000000e+00> : vector<256x128xf32>
    %25 = tpu.matmul %22, %24, %cst_15 {dimension_numbers = #tpu.dot_dimension_numbers<[1], [0], [0], [1], [0, 0, 1, 1], [], []>} : vector<256x4xbf16>, vector<4x128xbf16>, vector<256x128xf32> -> vector<256x128xf32>
    %26 = arith.addf %20, %25 : vector<256x128xf32>
    %27 = vector.extract_strided_slice %1 {offsets = [1, 1, 0], sizes = [16, 16, 4], strides = [1, 1, 1]} : vector<18x18x4xbf16> to vector<16x16x4xbf16>
    %28 = vector.shape_cast %27 : vector<16x16x4xbf16> to vector<256x4xbf16>
    %c4 = arith.constant 4 : index
    %c0_16 = arith.constant 0 : index
    %c0_17 = arith.constant 0 : index
    %29 = vector.load %arg2[%c4, %c0_16, %c0_17] : memref<9x4x128xbf16, #tpu.memory_space<vmem>>, vector<1x4x128xbf16>
    %30 = vector.shape_cast %29 : vector<1x4x128xbf16> to vector<4x128xbf16>
    %cst_18 = arith.constant dense<0.000000e+00> : vector<256x128xf32>
    %31 = tpu.matmul %28, %30, %cst_18 {dimension_numbers = #tpu.dot_dimension_numbers<[1], [0], [0], [1], [0, 0, 1, 1], [], []>} : vector<256x4xbf16>, vector<4x128xbf16>, vector<256x128xf32> -> vector<256x128xf32>
    %32 = arith.addf %26, %31 : vector<256x128xf32>
    %33 = vector.extract_strided_slice %1 {offsets = [1, 2, 0], sizes = [16, 16, 4], strides = [1, 1, 1]} : vector<18x18x4xbf16> to vector<16x16x4xbf16>
    %34 = vector.shape_cast %33 : vector<16x16x4xbf16> to vector<256x4xbf16>
    %c5 = arith.constant 5 : index
    %c0_19 = arith.constant 0 : index
    %c0_20 = arith.constant 0 : index
    %35 = vector.load %arg2[%c5, %c0_19, %c0_20] : memref<9x4x128xbf16, #tpu.memory_space<vmem>>, vector<1x4x128xbf16>
    %36 = vector.shape_cast %35 : vector<1x4x128xbf16> to vector<4x128xbf16>
    %cst_21 = arith.constant dense<0.000000e+00> : vector<256x128xf32>
    %37 = tpu.matmul %34, %36, %cst_21 {dimension_numbers = #tpu.dot_dimension_numbers<[1], [0], [0], [1], [0, 0, 1, 1], [], []>} : vector<256x4xbf16>, vector<4x128xbf16>, vector<256x128xf32> -> vector<256x128xf32>
    %38 = arith.addf %32, %37 : vector<256x128xf32>
    %39 = vector.extract_strided_slice %1 {offsets = [2, 0, 0], sizes = [16, 16, 4], strides = [1, 1, 1]} : vector<18x18x4xbf16> to vector<16x16x4xbf16>
    %40 = vector.shape_cast %39 : vector<16x16x4xbf16> to vector<256x4xbf16>
    %c6 = arith.constant 6 : index
    %c0_22 = arith.constant 0 : index
    %c0_23 = arith.constant 0 : index
    %41 = vector.load %arg2[%c6, %c0_22, %c0_23] : memref<9x4x128xbf16, #tpu.memory_space<vmem>>, vector<1x4x128xbf16>
    %42 = vector.shape_cast %41 : vector<1x4x128xbf16> to vector<4x128xbf16>
    %cst_24 = arith.constant dense<0.000000e+00> : vector<256x128xf32>
    %43 = tpu.matmul %40, %42, %cst_24 {dimension_numbers = #tpu.dot_dimension_numbers<[1], [0], [0], [1], [0, 0, 1, 1], [], []>} : vector<256x4xbf16>, vector<4x128xbf16>, vector<256x128xf32> -> vector<256x128xf32>
    %44 = arith.addf %38, %43 : vector<256x128xf32>
    %45 = vector.extract_strided_slice %1 {offsets = [2, 1, 0], sizes = [16, 16, 4], strides = [1, 1, 1]} : vector<18x18x4xbf16> to vector<16x16x4xbf16>
    %46 = vector.shape_cast %45 : vector<16x16x4xbf16> to vector<256x4xbf16>
    %c7 = arith.constant 7 : index
    %c0_25 = arith.constant 0 : index
    %c0_26 = arith.constant 0 : index
    %47 = vector.load %arg2[%c7, %c0_25, %c0_26] : memref<9x4x128xbf16, #tpu.memory_space<vmem>>, vector<1x4x128xbf16>
    %48 = vector.shape_cast %47 : vector<1x4x128xbf16> to vector<4x128xbf16>
    %cst_27 = arith.constant dense<0.000000e+00> : vector<256x128xf32>
    %49 = tpu.matmul %46, %48, %cst_27 {dimension_numbers = #tpu.dot_dimension_numbers<[1], [0], [0], [1], [0, 0, 1, 1], [], []>} : vector<256x4xbf16>, vector<4x128xbf16>, vector<256x128xf32> -> vector<256x128xf32>
    %50 = arith.addf %44, %49 : vector<256x128xf32>
    %51 = vector.extract_strided_slice %1 {offsets = [2, 2, 0], sizes = [16, 16, 4], strides = [1, 1, 1]} : vector<18x18x4xbf16> to vector<16x16x4xbf16>
    %52 = vector.shape_cast %51 : vector<16x16x4xbf16> to vector<256x4xbf16>
    %c8 = arith.constant 8 : index
    %c0_28 = arith.constant 0 : index
    %c0_29 = arith.constant 0 : index
    %53 = vector.load %arg2[%c8, %c0_28, %c0_29] : memref<9x4x128xbf16, #tpu.memory_space<vmem>>, vector<1x4x128xbf16>
    %54 = vector.shape_cast %53 : vector<1x4x128xbf16> to vector<4x128xbf16>
    %cst_30 = arith.constant dense<0.000000e+00> : vector<256x128xf32>
    %55 = tpu.matmul %52, %54, %cst_30 {dimension_numbers = #tpu.dot_dimension_numbers<[1], [0], [0], [1], [0, 0, 1, 1], [], []>} : vector<256x4xbf16>, vector<4x128xbf16>, vector<256x128xf32> -> vector<256x128xf32>
    %56 = arith.addf %50, %55 : vector<256x128xf32>
    %c0_31 = arith.constant 0 : index
    %c0_32 = arith.constant 0 : index
    %57 = vector.load %arg3[%c0_31, %c0_32] : memref<1x128xf32, #tpu.memory_space<vmem>>, vector<1x128xf32>
    %58 = vector.broadcast %57 : vector<1x128xf32> to vector<256x128xf32>
    %59 = arith.addf %56, %58 : vector<256x128xf32>
    %c0_33 = arith.constant 0 : index
    %c0_34 = arith.constant 0 : index
    %c0_35 = arith.constant 0 : index
    %60 = vector.load %arg4[%c0_33, %c0_34, %c0_35] : memref<1x256x128xf32, #tpu.memory_space<vmem>>, vector<1x256x128xf32>
    %61 = vector.shape_cast %60 : vector<1x256x128xf32> to vector<256x128xf32>
    %62 = vector.shape_cast %59 : vector<256x128xf32> to vector<1x256x128xf32>
    tpu.vector_store %arg4[%c0_33, %c0_34, %c0_35], %62 {strides = array<i32>} : memref<1x256x128xf32, #tpu.memory_space<vmem>>, vector<1x256x128xf32>,
    %cst_36 = arith.constant dense<0.000000e+00> : vector<128xf32>
    %63 = vector.multi_reduction <add>, %59, %cst_36 [0] : vector<256x128xf32> to vector<128xf32>
    %64 = vector.shape_cast %63 : vector<128xf32> to vector<1x128xf32>
    %65 = arith.mulf %59, %59 : vector<256x128xf32>
    %cst_37 = arith.constant dense<0.000000e+00> : vector<128xf32>
    %66 = vector.multi_reduction <add>, %65, %cst_37 [0] : vector<256x128xf32> to vector<128xf32>
    %67 = vector.shape_cast %66 : vector<128xf32> to vector<1x128xf32>
    %68 = tpu.concatenate %64, %67 in 0 : vector<1x128xf32>, vector<1x128xf32> -> vector<2x128xf32>
    %c0_38 = arith.constant 0 : index
    %c0_39 = arith.constant 0 : index
    %c0_40 = arith.constant 0 : index
    %69 = vector.load %arg5[%c0_38, %c0_39, %c0_40] : memref<1x2x128xf32, #tpu.memory_space<vmem>>, vector<1x2x128xf32>
    %70 = vector.shape_cast %69 : vector<1x2x128xf32> to vector<2x128xf32>
    %71 = vector.shape_cast %68 : vector<2x128xf32> to vector<1x2x128xf32>
    tpu.vector_store %arg5[%c0_38, %c0_39, %c0_40], %71 {strides = array<i32>} : memref<1x2x128xf32, #tpu.memory_space<vmem>>, vector<1x2x128xf32>,
    return
  }
  func.func @transform_0(%arg0: i32) -> (i32, i32, i32, i32) {
    %c0_i32 = arith.constant 0 : i32
    %c0_i32_0 = arith.constant 0 : i32
    %c0_i32_1 = arith.constant 0 : i32
    %c0_i32_2 = arith.constant 0 : i32
    return %arg0, %c0_i32, %c0_i32_0, %c0_i32_1 : i32, i32, i32, i32
  }
  func.func @transform_1(%arg0: i32) -> (i32, i32, i32) {
    %c0_i32 = arith.constant 0 : i32
    %c0_i32_0 = arith.constant 0 : i32
    %c0_i32_1 = arith.constant 0 : i32
    %c0_i32_2 = arith.constant 0 : i32
    return %c0_i32, %c0_i32_0, %c0_i32_1 : i32, i32, i32
  }
  func.func @transform_2(%arg0: i32) -> (i32, i32) {
    %c0_i32 = arith.constant 0 : i32
    %c0_i32_0 = arith.constant 0 : i32
    %c0_i32_1 = arith.constant 0 : i32
    return %c0_i32, %c0_i32_0 : i32, i32
  }
  func.func @transform_3(%arg0: i32) -> (i32, i32, i32) {
    %c0_i32 = arith.constant 0 : i32
    %c0_i32_0 = arith.constant 0 : i32
    %c0_i32_1 = arith.constant 0 : i32
    return %arg0, %c0_i32, %c0_i32_0 : i32, i32, i32
  }
  func.func @transform_4(%arg0: i32) -> (i32, i32, i32) {
    %c0_i32 = arith.constant 0 : i32
    %c0_i32_0 = arith.constant 0 : i32
    %c0_i32_1 = arith.constant 0 : i32
    return %arg0, %c0_i32, %c0_i32_0 : i32, i32, i32
  }
}

module attributes {stable_mosaic.version = 11 : i64} {
  func.func @_bn_relu_pool_kernel(%arg0: i32, %arg1: i32, %arg2: memref<1x128x128xf32, #tpu.memory_space<vmem>>, %arg3: memref<1x128xf32, #tpu.memory_space<vmem>>, %arg4: memref<1x128xf32, #tpu.memory_space<vmem>>, %arg5: memref<1x1x8x128xf32, #tpu.memory_space<vmem>>) attributes {dimension_semantics = [#tpu.dimension_semantics<parallel>, #tpu.dimension_semantics<parallel>], iteration_bounds = array<i64: 2, 2>, scalar_prefetch = 0 : i64, scratch_operands = 0 : i64, tpu.core_type = #tpu.core_type<tc>, window_params = [{transform_indices = @transform_0, window_bounds = array<i64: 1, 128, 128>}, {pipeline_mode = #tpu.pipeline_mode<synchronous>, transform_indices = @transform_1, window_bounds = array<i64: 1, 128>}, {pipeline_mode = #tpu.pipeline_mode<synchronous>, transform_indices = @transform_2, window_bounds = array<i64: 1, 128>}, {transform_indices = @transform_3, window_bounds = array<i64: 1, 1, 8, 128>}]} {
    %c0 = arith.constant 0 : index
    %c0_0 = arith.constant 0 : index
    %c0_1 = arith.constant 0 : index
    %0 = vector.load %arg2[%c0, %c0_0, %c0_1] : memref<1x128x128xf32, #tpu.memory_space<vmem>>, vector<1x128x128xf32>
    %1 = vector.shape_cast %0 : vector<1x128x128xf32> to vector<128x128xf32>
    %c0_2 = arith.constant 0 : index
    %c0_3 = arith.constant 0 : index
    %2 = vector.load %arg3[%c0_2, %c0_3] : memref<1x128xf32, #tpu.memory_space<vmem>>, vector<1x128xf32>
    %3 = vector.broadcast %2 : vector<1x128xf32> to vector<128x128xf32>
    %4 = arith.mulf %1, %3 : vector<128x128xf32>
    %c0_4 = arith.constant 0 : index
    %c0_5 = arith.constant 0 : index
    %5 = vector.load %arg4[%c0_4, %c0_5] : memref<1x128xf32, #tpu.memory_space<vmem>>, vector<1x128xf32>
    %6 = vector.broadcast %5 : vector<1x128xf32> to vector<128x128xf32>
    %7 = arith.addf %4, %6 : vector<128x128xf32>
    %cst = arith.constant 0.000000e+00 : f32
    %8 = vector.broadcast %cst : f32 to vector<128x128xf32>
    %9 = arith.maximumf %7, %8 : vector<128x128xf32>
    %10 = vector.shape_cast %9 : vector<128x128xf32> to vector<16x8x128xf32>
    %cst_6 = arith.constant dense<0.000000e+00> : vector<8x128xf32>
    %11 = vector.multi_reduction <add>, %10, %cst_6 [0] : vector<16x8x128xf32> to vector<8x128xf32>
    %c0_7 = arith.constant 0 : index
    %c0_8 = arith.constant 0 : index
    %c0_9 = arith.constant 0 : index
    %c0_10 = arith.constant 0 : index
    %12 = vector.load %arg5[%c0_7, %c0_8, %c0_9, %c0_10] : memref<1x1x8x128xf32, #tpu.memory_space<vmem>>, vector<1x1x8x128xf32>
    %13 = vector.shape_cast %12 : vector<1x1x8x128xf32> to vector<8x128xf32>
    %14 = vector.shape_cast %11 : vector<8x128xf32> to vector<1x1x8x128xf32>
    tpu.vector_store %arg5[%c0_7, %c0_8, %c0_9, %c0_10], %14 {strides = array<i32>} : memref<1x1x8x128xf32, #tpu.memory_space<vmem>>, vector<1x1x8x128xf32>,
    return
  }
  func.func @transform_0(%arg0: i32, %arg1: i32) -> (i32, i32, i32) {
    %c0_i32 = arith.constant 0 : i32
    %c0_i32_0 = arith.constant 0 : i32
    return %arg0, %arg1, %c0_i32 : i32, i32, i32
  }
  func.func @transform_1(%arg0: i32, %arg1: i32) -> (i32, i32) {
    %c0_i32 = arith.constant 0 : i32
    %c0_i32_0 = arith.constant 0 : i32
    %c0_i32_1 = arith.constant 0 : i32
    return %c0_i32, %c0_i32_0 : i32, i32
  }
  func.func @transform_2(%arg0: i32, %arg1: i32) -> (i32, i32) {
    %c0_i32 = arith.constant 0 : i32
    %c0_i32_0 = arith.constant 0 : i32
    %c0_i32_1 = arith.constant 0 : i32
    return %c0_i32, %c0_i32_0 : i32, i32
  }
  func.func @transform_3(%arg0: i32, %arg1: i32) -> (i32, i32, i32, i32) {
    %c0_i32 = arith.constant 0 : i32
    %c0_i32_0 = arith.constant 0 : i32
    %c0_i32_1 = arith.constant 0 : i32
    return %arg0, %arg1, %c0_i32, %c0_i32_0 : i32, i32, i32, i32
  }
}

</mosaic_0001>

<llo_original>
// kernel: ours_forward.3
$region0: #{ours_forward.3}
  #allocation0 [shape = 'u32[]', space=smem, size = 0x4, offset = 0x4, fixed_abs, tag = 'smem constant byte address 0x4 - core index']
  #allocation1 [shape = 'u32[144,128]{1,0:T(1,128)}', space=vmem, size = 0x12000, scoped, tag = 'internal scratch']
  %s0 = inlined_call_operand.vmem [shape: f32[2,256,128], index: 0, kind: input, shape index: {}]
  %s1 = inlined_call_operand.vmem [shape: f32[1,128], index: 1, kind: input, shape index: {}]
  %s2 = inlined_call_operand.vmem [shape: f32[1,128], index: 2, kind: input, shape index: {}]
  %s3 = inlined_call_operand.vmem [shape: f32[2,2,8,128], index: 3, kind: output, shape index: {}]
  %s4 = sld [smem:[#allocation0]]
  $region45: #{ours_forward.3} parent=0
    _
  %s6 = ssub.s32 1, %s4
  %s7 = scalar_select 0, %s6, %s4
  loop: start=0, step=1, limit=6
  $region2: #{ours_forward.3} parent=0 // loop_pre_header
    _
  $region3: #{ours_forward.3} parent=0 // loop_header
    %s9 = sphi 0, %s13
    %p10 = scmp.ge.s32.totalorder %s9, 6
    %s16 = sphi 0, %s28
    %s17 = sphi 0, %s24
    %s18 = sphi 0, %s16
    %s19 = sphi 0, %s17
    %s20 = sphi 0, %s18
    %s21 = sphi 0, %s19
    %s33 = sphi 0, %s35
    %s36 = sphi 0, %s33
    %s37 = sphi 0, %s36
    %s53 = sphi 0, %s37
    %s57 = sphi 0, %s57
    %s59 = sphi 0, %s57
    %s60 = sphi 0, %s59
    %s74 = sphi 0, %s60
    %s78 = sphi 0, %s78
    %s80 = sphi 0, %s78
    %s81 = sphi 0, %s80
    %s95 = sphi 0, %s81
    %s103 = sphi 0, %s105
    %s106 = sphi 0, %s103
    %s107 = sphi 0, %s106
    %s123 = sphi 0, %s107
  $region4: #{ours_forward.3} parent=0 // loop_header_branch
    %12 = sbr.rel (%p10) target = $region8
  $region5: #{ours_forward.3} parent=0 // loop_body
    %s14 = ssub.s32 %s9, 1
    %s15 = ssub.s32 %s9, 2
    %s22 = sadd.s32 1, %s17
    %p23 = scmp.ge.s32.totalorder %s22, 2
    %s24 = scalar_select %p23, 0, %s22
    %s25 = sadd.s32 1, %s16
    %s26 = scalar_select %p23, %s25, %s16
    %p27 = scmp.ge.s32.totalorder %s26, 2
    %s28 = scalar_select %p27, 0, %s26
    %s29 = ssub.s32 %s16, %s28
    %s30 = ssub.s32 %s17, %s24
    %s31 = sor.u32 %s29, %s30
    %p32 = scmp.eq.s32.totalorder %s31, 0
    %s34 = sadd.s32 %s33, 1
    %s35 = scalar_select %p32, %s33, %s34
    %p38 = pneg %p32
    %p39 = scmp.eq.s32.totalorder %s9, 3
    %p40 = por %p38, %p39
    %p41 = scmp.ne.s32.totalorder %s33, %s36
    %p42 = scmp.eq.s32.totalorder %s9, 0
    %p43 = por %p41, %p42
    %p44 = scmp.ne.s32.totalorder %s33, %s36
    %p45 = scmp.eq.s32.totalorder %s14, 3
    %p46 = por %p44, %p45
    %p47 = scmp.ne.s32.totalorder %s36, %s37
    %p48 = scmp.eq.s32.totalorder %s14, 0
    %p49 = por %p47, %p48
    %p50 = scmp.ne.s32.totalorder %s36, %s37
    %p51 = scmp.eq.s32.totalorder %s15, 3
    %p52 = por %p50, %p51
    %p54 = scmp.ne.s32.totalorder %s37, %s53
    %p55 = scmp.eq.s32.totalorder %s15, 0
    %p56 = por %p54, %p55
    %s58 = sadd.s32 %s57, 1
    %p61 = scmp.eq.s32.totalorder %s9, 3
    %p62 = scmp.ne.s32.totalorder %s57, %s59
    %p63 = scmp.eq.s32.totalorder %s9, 0
    %p64 = por %p62, %p63
    %p65 = scmp.ne.s32.totalorder %s57, %s59
    %p66 = scmp.eq.s32.totalorder %s14, 3
    %p67 = por %p65, %p66
    %p68 = scmp.ne.s32.totalorder %s59, %s60
    %p69 = scmp.eq.s32.totalorder %s14, 0
    %p70 = por %p68, %p69
    %p71 = scmp.ne.s32.totalorder %s59, %s60
    %p72 = scmp.eq.s32.totalorder %s15, 3
    %p73 = por %p71, %p72
    %p75 = scmp.ne.s32.totalorder %s60, %s74
    %p76 = scmp.eq.s32.totalorder %s15, 0
    %p77 = por %p75, %p76
    %s79 = sadd.s32 %s78, 1
    %p82 = scmp.eq.s32.totalorder %s9, 3
    %p83 = scmp.ne.s32.totalorder %s78, %s80
    %p84 = scmp.eq.s32.totalorder %s9, 0
    %p85 = por %p83, %p84
    %p86 = scmp.ne.s32.totalorder %s78, %s80
    %p87 = scmp.eq.s32.totalorder %s14, 3
    %p88 = por %p86, %p87
    %p89 = scmp.ne.s32.totalorder %s80, %s81
    %p90 = scmp.eq.s32.totalorder %s14, 0
    %p91 = por %p89, %p90
    %p92 = scmp.ne.s32.totalorder %s80, %s81
    %p93 = scmp.eq.s32.totalorder %s15, 3
    %p94 = por %p92, %p93
    %p96 = scmp.ne.s32.totalorder %s81, %s95
    %p97 = scmp.eq.s32.totalorder %s15, 0
    %p98 = por %p96, %p97
    %s99 = ssub.s32 %s16, %s28
    %s100 = ssub.s32 %s17, %s24
    %s101 = sor.u32 %s99, %s100
    %p102 = scmp.eq.s32.totalorder %s101, 0
    %s104 = sadd.s32 %s103, 1
    %s105 = scalar_select %p102, %s103, %s104
    %p108 = pneg %p102
    %p109 = scmp.eq.s32.totalorder %s9, 3
    %p110 = por %p108, %p109
    %p111 = scmp.ne.s32.totalorder %s103, %s106
    %p112 = scmp.eq.s32.totalorder %s9, 0
    %p113 = por %p111, %p112
    %p114 = scmp.ne.s32.totalorder %s103, %s106
    %p115 = scmp.eq.s32.totalorder %s14, 3
    %p116 = por %p114, %p115
    %p117 = scmp.ne.s32.totalorder %s106, %s107
    %p118 = scmp.eq.s32.totalorder %s14, 0
    %p119 = por %p117, %p118
    %p120 = scmp.ne.s32.totalorder %s106, %s107
    %p121 = scmp.eq.s32.totalorder %s15, 3
    %p122 = por %p120, %p121
    %p124 = scmp.ne.s32.totalorder %s107, %s123
    %p125 = scmp.eq.s32.totalorder %s15, 0
    %p126 = por %p124, %p125
    %p127 = scmp.le.s32.totalorder 1, %s9
    %p128 = scmp.lt.s32.totalorder %s9, 5
    %p129 = pnand %p127, %p128
    %p130 = pneg %p129
    // Predicated region
    $region9: #{ours_forward.3} parent=5 // pred_check
      _
    $region10: #{ours_forward.3} parent=5 // pred_check_branch
      %132 = sbr.rel (%p129) target = $region12
    $region11: #{ours_forward.3} parent=5 // pred_region
      %s133 = ssub.s32 %s9, 1
      // Predicated region
      $region13: #{ours_forward.3} parent=11 // pred_check
        %p134 = pneg %p70
      $region14: #{ours_forward.3} parent=11 // pred_check_branch
        %136 = sbr.rel (%p134) target = $region16
      $region15: #{ours_forward.3} parent=11 // pred_region
        _
      $region16: #{ours_forward.3} parent=11 // pred_fallthru
        _
      // Predicated region
      $region17: #{ours_forward.3} parent=11 // pred_check
        %p137 = pneg %p91
      $region18: #{ours_forward.3} parent=11 // pred_check_branch
        %139 = sbr.rel (%p137) target = $region20
      $region19: #{ours_forward.3} parent=11 // pred_region
        _
      $region20: #{ours_forward.3} parent=11 // pred_fallthru
        _
    $region12: #{ours_forward.3} parent=5 // pred_fallthru
      _
    %p140 = scmp.lt.s32.totalorder %s9, 4
    // Predicated region
    $region21: #{ours_forward.3} parent=5 // pred_check
      %p141 = pneg %p140
    $region22: #{ours_forward.3} parent=5 // pred_check_branch
      %143 = sbr.rel (%p141) target = $region24
    $region23: #{ours_forward.3} parent=5 // pred_region
      // Predicated region
      $region25: #{ours_forward.3} parent=23 // pred_check
        %p144 = pneg %p43
      $region26: #{ours_forward.3} parent=23 // pred_check_branch
        %146 = sbr.rel (%p144) target = $region28
      $region27: #{ours_forward.3} parent=23 // pred_region
        %s147 = smul.u32 16, %s17
        %p148 = scmp.lt.s32.totalorder %s16, 1
        %s149 = scalar_select %p148, %s16, 1
        %p150 = scmp.lt.s32.totalorder %s147, 31
        %s151 = scalar_select %p150, %s147, 31
        %s152 = smul.addr %s149, 32
        %s153 = sadd.s32 %s151, %s152
        %s154 = smul.addr %s153, 8
        %s155 = scalar_lea.vmem %s0, %s154
        %s156 = smul.u32 16, %s17
      $region28: #{ours_forward.3} parent=23 // pred_fallthru
        _
    $region24: #{ours_forward.3} parent=5 // pred_fallthru
      _
    %p157 = scmp.le.s32.totalorder 1, %s9
    %p158 = scmp.lt.s32.totalorder %s9, 5
    %p159 = pnand %p157, %p158
    %p160 = pneg %p159
    // Predicated region
    $region29: #{ours_forward.3} parent=5 // pred_check
      _
    $region30: #{ours_forward.3} parent=5 // pred_check_branch
      %162 = sbr.rel (%p159) target = $region32
    $region31: #{ours_forward.3} parent=5 // pred_region
      %s163 = ssub.s32 %s9, 1
      %s164 = smul.u32 16, %s19
      %p165 = scmp.lt.s32.totalorder %s18, 1
      %s166 = scalar_select %p165, %s18, 1
      %p167 = scmp.lt.s32.totalorder %s164, 31
      %s168 = scalar_select %p167, %s164, 31
      %s169 = smul.addr %s166, 32
      %s170 = sadd.s32 %s168, %s169
      %s171 = smul.addr %s170, 8
      %s172 = scalar_lea.vmem %s0, %s171
      %p173 = pneg %p49
      %p174 = pneg %p46
      %p175 = pneg %p70
      %p176 = pneg %p67
      %p177 = pneg %p91
      %p178 = pneg %p88
      %p179 = pneg %p119
      %p180 = pneg %p116
      %p181 = scmp.lt.s32.totalorder %s18, 1
      %s182 = scalar_select %p181, %s18, 1
      %p183 = scmp.lt.s32.totalorder %s19, 1
      %s184 = scalar_select %p183, %s19, 1
      %s185 = smul.addr %s182, 2
      %s186 = sadd.s32 %s184, %s185
      %s187 = smul.addr %s186, 8
      %s188 = scalar_lea.vmem %s3, %s187
      %s189 = smul.u32 16, %s19
      %p190 = scmp.lt.s32.totalorder %s18, 1
      %s191 = scalar_select %p190, %s18, 1
      %p192 = scmp.lt.s32.totalorder %s189, 31
      %s193 = scalar_select %p192, %s189, 31
      %s194 = smul.addr %s191, 32
      %s195 = sadd.s32 %s193, %s194
      %s196 = smul.addr %s195, 8
      %s197 = scalar_lea.vmem %s0, %s196
      %s198 = smul.u32 16, %s19
      %p199 = scmp.lt.s32.totalorder %s18, 1
      %s200 = scalar_select %p199, %s18, 1
      %p201 = scmp.lt.s32.totalorder %s19, 1
      %s202 = scalar_select %p201, %s19, 1
      %s203 = smul.addr %s200, 2
      %s204 = sadd.s32 %s202, %s203
      %s205 = smul.addr %s204, 8
      %s206 = scalar_lea.vmem %s3, %s205
      %v207 = vld [vmem:[%s197] sm:$0xff]
      %v208 = vld [vmem:[%s197 + $0x8] sm:$0xff]
      %v209 = vld [vmem:[%s197 + $0x10] sm:$0xff]
      %v210 = vld [vmem:[%s197 + $0x18] sm:$0xff]
      %v211 = vld [vmem:[%s197 + $0x20] sm:$0xff]
      %v212 = vld [vmem:[%s197 + $0x28] sm:$0xff]
      %v213 = vld [vmem:[%s197 + $0x30] sm:$0xff]
      %v214 = vld [vmem:[%s197 + $0x38] sm:$0xff]
      %v215 = vld [vmem:[%s197 + $0x40] sm:$0xff]
      %v216 = vld [vmem:[%s197 + $0x48] sm:$0xff]
      %v217 = vld [vmem:[%s197 + $0x50] sm:$0xff]
      %v218 = vld [vmem:[%s197 + $0x58] sm:$0xff]
      %v219 = vld [vmem:[%s197 + $0x60] sm:$0xff]
      %v220 = vld [vmem:[%s197 + $0x68] sm:$0xff]
      %v221 = vld [vmem:[%s197 + $0x70] sm:$0xff]
      %v222 = vld [vmem:[%s197 + $0x78] sm:$0xff]
      %v223 = vld [vmem:[%s1] sm:$0x1]
      %v225 = vlaneseq
      %v226 = vshrl.u32 %v225, 7
      %v227 = vsub.s32 0, %v226
      %v228 = vrot.slane %v223, %v227
      %v230 = vmul.f32 %v207, %v228
      %v231 = vmul.f32 %v208, %v228
      %v232 = vmul.f32 %v209, %v228
      %v233 = vmul.f32 %v210, %v228
      %v234 = vmul.f32 %v211, %v228
      %v235 = vmul.f32 %v212, %v228
      %v236 = vmul.f32 %v213, %v228
      %v237 = vmul.f32 %v214, %v228
      %v238 = vmul.f32 %v215, %v228
      %v239 = vmul.f32 %v216, %v228
      %v240 = vmul.f32 %v217, %v228
      %v241 = vmul.f32 %v218, %v228
      %v242 = vmul.f32 %v219, %v228
      %v243 = vmul.f32 %v220, %v228
      %v244 = vmul.f32 %v221, %v228
      %v245 = vmul.f32 %v222, %v228
      %v246 = vld [vmem:[%s2] sm:$0x1]
      %v248 = vlaneseq
      %v249 = vshrl.u32 %v248, 7
      %v250 = vsub.s32 0, %v249
      %v251 = vrot.slane %v246, %v250
      %v253 = vadd.f32 %v230, %v251
      %v254 = vadd.f32 %v231, %v251
      %v255 = vadd.f32 %v232, %v251
      %v256 = vadd.f32 %v233, %v251
      %v257 = vadd.f32 %v234, %v251
      %v258 = vadd.f32 %v235, %v251
      %v259 = vadd.f32 %v236, %v251
      %v260 = vadd.f32 %v237, %v251
      %v261 = vadd.f32 %v238, %v251
      %v262 = vadd.f32 %v239, %v251
      %v263 = vadd.f32 %v240, %v251
      %v264 = vadd.f32 %v241, %v251
      %v265 = vadd.f32 %v242, %v251
      %v266 = vadd.f32 %v243, %v251
      %v267 = vadd.f32 %v244, %v251
      %v268 = vadd.f32 %v245, %v251
      %v269 = vmax.f32 %v253, 0.0
      %v270 = vmax.f32 %v254, 0.0
      %v271 = vmax.f32 %v255, 0.0
      %v272 = vmax.f32 %v256, 0.0
      %v273 = vmax.f32 %v257, 0.0
      %v274 = vmax.f32 %v258, 0.0
      %v275 = vmax.f32 %v259, 0.0
      %v276 = vmax.f32 %v260, 0.0
      %v277 = vmax.f32 %v261, 0.0
      %v278 = vmax.f32 %v262, 0.0
      %v279 = vmax.f32 %v263, 0.0
      %v280 = vmax.f32 %v264, 0.0
      %v281 = vmax.f32 %v265, 0.0
      %v282 = vmax.f32 %v266, 0.0
      %v283 = vmax.f32 %v267, 0.0
      %v284 = vmax.f32 %v268, 0.0
      %v285 = vadd.f32 %v269, %v270
      %v286 = vadd.f32 %v285, %v271
      %v287 = vadd.f32 %v286, %v272
      %v288 = vadd.f32 %v287, %v273
      %v289 = vadd.f32 %v288, %v274
      %v290 = vadd.f32 %v289, %v275
      %v291 = vadd.f32 %v290, %v276
      %v292 = vadd.f32 %v291, %v277
      %v293 = vadd.f32 %v292, %v278
      %v294 = vadd.f32 %v293, %v279
      %v295 = vadd.f32 %v294, %v280
      %v296 = vadd.f32 %v295, %v281
      %v297 = vadd.f32 %v296, %v282
      %v298 = vadd.f32 %v297, %v283
      %v299 = vadd.f32 %v298, %v284
      %300 = vst [vmem:[%s206] sm:$0xff] %v299
      %p301 = scmp.lt.s32.totalorder %s18, 1
      %s302 = scalar_select %p301, %s18, 1
      %p303 = scmp.lt.s32.totalorder %s19, 1
      %s304 = scalar_select %p303, %s19, 1
      %s305 = smul.addr %s302, 2
      %s306 = sadd.s32 %s304, %s305
      %s307 = smul.addr %s306, 8
      %s308 = scalar_lea.vmem %s3, %s307
      // Predicated region
      $region33: #{ours_forward.3} parent=31 // pred_check
        %p309 = pneg %p116
      $region34: #{ours_forward.3} parent=31 // pred_check_branch
        %311 = sbr.rel (%p309) target = $region36
      $region35: #{ours_forward.3} parent=31 // pred_region
        _
      $region36: #{ours_forward.3} parent=31 // pred_fallthru
        _
    $region32: #{ours_forward.3} parent=5 // pred_fallthru
      _
    %p312 = scmp.le.s32.totalorder 2, %s9
    // Predicated region
    $region37: #{ours_forward.3} parent=5 // pred_check
      %p313 = pneg %p312
    $region38: #{ours_forward.3} parent=5 // pred_check_branch
      %315 = sbr.rel (%p313) target = $region40
    $region39: #{ours_forward.3} parent=5 // pred_region
      %s316 = ssub.s32 %s9, 2
      // Predicated region
      $region41: #{ours_forward.3} parent=39 // pred_check
        %p317 = pneg %p122
      $region42: #{ours_forward.3} parent=39 // pred_check_branch
        %319 = sbr.rel (%p317) target = $region44
      $region43: #{ours_forward.3} parent=39 // pred_region
        %p320 = scmp.lt.s32.totalorder %s20, 1
        %s321 = scalar_select %p320, %s20, 1
        %p322 = scmp.lt.s32.totalorder %s21, 1
        %s323 = scalar_select %p322, %s21, 1
        %s324 = smul.addr %s321, 2
        %s325 = sadd.s32 %s323, %s324
        %s326 = smul.addr %s325, 8
        %s327 = scalar_lea.vmem %s3, %s326
      $region44: #{ours_forward.3} parent=39 // pred_fallthru
        _
    $region40: #{ours_forward.3} parent=5 // pred_fallthru
      _
  $region6: #{ours_forward.3} parent=0 // loop_footer
    %s13 = sadd.s32 1, %s9
  $region7: #{ours_forward.3} parent=0 // loop_footer_branch
    %8 = sbr.rel target = $region3
  $region8: #{ours_forward.3} parent=0 // loop_exit
    _

// kernel: ours_forward.2
$region0: #{ours_forward.2}
  #allocation0 [shape = 'u32[]', space=smem, size = 0x4, offset = 0x4, fixed_abs, tag = 'smem constant byte address 0x4 - core index']
  #allocation1 [shape = 'u32[144,128]{1,0:T(1,128)}', space=vmem, size = 0x12000, scoped, tag = 'internal scratch']
  %s0 = inlined_call_operand.vmem [shape: bf16[2,18,18,4], index: 0, kind: input, shape index: {}]
  %s1 = inlined_call_operand.vmem [shape: bf16[9,4,128], index: 1, kind: input, shape index: {}]
  %s2 = inlined_call_operand.vmem [shape: f32[1,128], index: 2, kind: input, shape index: {}]
  %s3 = inlined_call_operand.vmem [shape: f32[2,256,128], index: 3, kind: output, shape index: {0}]
  %s4 = inlined_call_operand.vmem [shape: f32[2,2,128], index: 4, kind: output, shape index: {1}]
  %5 = xla_tuple %s3, %s4
  %s6 = sld [smem:[#allocation0]]
  $region53: #{ours_forward.2} parent=0
    _
  %s8 = ssub.s32 1, %s6
  %s9 = scalar_select 0, %s8, %s6
  loop: start=0, step=1, limit=4
  $region2: #{ours_forward.2} parent=0 // loop_pre_header
    _
  $region3: #{ours_forward.2} parent=0 // loop_header
    %s11 = sphi 0, %s15
    %p12 = scmp.ge.s32.totalorder %s11, 4
    %s21 = sphi 0, %s23
    %s24 = sphi 0, %s21
    %s25 = sphi 0, %s24
    %s41 = sphi 0, %s25
    %s45 = sphi 0, %s45
    %s47 = sphi 0, %s45
    %s48 = sphi 0, %s47
    %s62 = sphi 0, %s48
    %s66 = sphi 0, %s66
    %s68 = sphi 0, %s66
    %s69 = sphi 0, %s68
    %s83 = sphi 0, %s69
    %s89 = sphi 0, %s91
    %s92 = sphi 0, %s89
    %s93 = sphi 0, %s92
    %s109 = sphi 0, %s93
    %s115 = sphi 0, %s117
    %s118 = sphi 0, %s115
    %s119 = sphi 0, %s118
    %s135 = sphi 0, %s119
  $region4: #{ours_forward.2} parent=0 // loop_header_branch
    %14 = sbr.rel (%p12) target = $region8
  $region5: #{ours_forward.2} parent=0 // loop_body
    %s16 = ssub.s32 %s11, 1
    %s17 = ssub.s32 %s11, 2
    %s18 = sadd.s32 %s11, 1
    %s19 = ssub.s32 %s11, %s18
    %p20 = scmp.eq.s32.totalorder %s19, 0
    %s22 = sadd.s32 %s21, 1
    %s23 = scalar_select %p20, %s21, %s22
    %p26 = pneg %p20
    %p27 = scmp.eq.s32.totalorder %s11, 1
    %p28 = por %p26, %p27
    %p29 = scmp.ne.s32.totalorder %s21, %s24
    %p30 = scmp.eq.s32.totalorder %s11, 0
    %p31 = por %p29, %p30
    %p32 = scmp.ne.s32.totalorder %s21, %s24
    %p33 = scmp.eq.s32.totalorder %s16, 1
    %p34 = por %p32, %p33
    %p35 = scmp.ne.s32.totalorder %s24, %s25
    %p36 = scmp.eq.s32.totalorder %s16, 0
    %p37 = por %p35, %p36
    %p38 = scmp.ne.s32.totalorder %s24, %s25
    %p39 = scmp.eq.s32.totalorder %s17, 1
    %p40 = por %p38, %p39
    %p42 = scmp.ne.s32.totalorder %s25, %s41
    %p43 = scmp.eq.s32.totalorder %s17, 0
    %p44 = por %p42, %p43
    %s46 = sadd.s32 %s45, 1
    %p49 = scmp.eq.s32.totalorder %s11, 1
    %p50 = scmp.ne.s32.totalorder %s45, %s47
    %p51 = scmp.eq.s32.totalorder %s11, 0
    %p52 = por %p50, %p51
    %p53 = scmp.ne.s32.totalorder %s45, %s47
    %p54 = scmp.eq.s32.totalorder %s16, 1
    %p55 = por %p53, %p54
    %p56 = scmp.ne.s32.totalorder %s47, %s48
    %p57 = scmp.eq.s32.totalorder %s16, 0
    %p58 = por %p56, %p57
    %p59 = scmp.ne.s32.totalorder %s47, %s48
    %p60 = scmp.eq.s32.totalorder %s17, 1
    %p61 = por %p59, %p60
    %p63 = scmp.ne.s32.totalorder %s48, %s62
    %p64 = scmp.eq.s32.totalorder %s17, 0
    %p65 = por %p63, %p64
    %s67 = sadd.s32 %s66, 1
    %p70 = scmp.eq.s32.totalorder %s11, 1
    %p71 = scmp.ne.s32.totalorder %s66, %s68
    %p72 = scmp.eq.s32.totalorder %s11, 0
    %p73 = por %p71, %p72
    %p74 = scmp.ne.s32.totalorder %s66, %s68
    %p75 = scmp.eq.s32.totalorder %s16, 1
    %p76 = por %p74, %p75
    %p77 = scmp.ne.s32.totalorder %s68, %s69
    %p78 = scmp.eq.s32.totalorder %s16, 0
    %p79 = por %p77, %p78
    %p80 = scmp.ne.s32.totalorder %s68, %s69
    %p81 = scmp.eq.s32.totalorder %s17, 1
    %p82 = por %p80, %p81
    %p84 = scmp.ne.s32.totalorder %s69, %s83
    %p85 = scmp.eq.s32.totalorder %s17, 0
    %p86 = por %p84, %p85
    %s87 = ssub.s32 %s11, %s18
    %p88 = scmp.eq.s32.totalorder %s87, 0
    %s90 = sadd.s32 %s89, 1
    %s91 = scalar_select %p88, %s89, %s90
    %p94 = pneg %p88
    %p95 = scmp.eq.s32.totalorder %s11, 1
    %p96 = por %p94, %p95
    %p97 = scmp.ne.s32.totalorder %s89, %s92
    %p98 = scmp.eq.s32.totalorder %s11, 0
    %p99 = por %p97, %p98
    %p100 = scmp.ne.s32.totalorder %s89, %s92
    %p101 = scmp.eq.s32.totalorder %s16, 1
    %p102 = por %p100, %p101
    %p103 = scmp.ne.s32.totalorder %s92, %s93
    %p104 = scmp.eq.s32.totalorder %s16, 0
    %p105 = por %p103, %p104
    %p106 = scmp.ne.s32.totalorder %s92, %s93
    %p107 = scmp.eq.s32.totalorder %s17, 1
    %p108 = por %p106, %p107
    %p110 = scmp.ne.s32.totalorder %s93, %s109
    %p111 = scmp.eq.s32.totalorder %s17, 0
    %p112 = por %p110, %p111
    %s113 = ssub.s32 %s11, %s18
    %p114 = scmp.eq.s32.totalorder %s113, 0
    %s116 = sadd.s32 %s115, 1
    %s117 = scalar_select %p114, %s115, %s116
    %p120 = pneg %p114
    %p121 = scmp.eq.s32.totalorder %s11, 1
    %p122 = por %p120, %p121
    %p123 = scmp.ne.s32.totalorder %s115, %s118
    %p124 = scmp.eq.s32.totalorder %s11, 0
    %p125 = por %p123, %p124
    %p126 = scmp.ne.s32.totalorder %s115, %s118
    %p127 = scmp.eq.s32.totalorder %s16, 1
    %p128 = por %p126, %p127
    %p129 = scmp.ne.s32.totalorder %s118, %s119
    %p130 = scmp.eq.s32.totalorder %s16, 0
    %p131 = por %p129, %p130
    %p132 = scmp.ne.s32.totalorder %s118, %s119
    %p133 = scmp.eq.s32.totalorder %s17, 1
    %p134 = por %p132, %p133
    %p136 = scmp.ne.s32.totalorder %s119, %s135
    %p137 = scmp.eq.s32.totalorder %s17, 0
    %p138 = por %p136, %p137
    %p139 = scmp.le.s32.totalorder 1, %s11
    %p140 = scmp.lt.s32.totalorder %s11, 3
    %p141 = pnand %p139, %p140
    %p142 = pneg %p141
    // Predicated region
    $region9: #{ours_forward.2} parent=5 // pred_check
      _
    $region10: #{ours_forward.2} parent=5 // pred_check_branch
      %144 = sbr.rel (%p141) target = $region12
    $region11: #{ours_forward.2} parent=5 // pred_region
      %s145 = ssub.s32 %s11, 1
      // Predicated region
      $region13: #{ours_forward.2} parent=11 // pred_check
        %p146 = pneg %p58
      $region14: #{ours_forward.2} parent=11 // pred_check_branch
        %148 = sbr.rel (%p146) target = $region16
      $region15: #{ours_forward.2} parent=11 // pred_region
        _
      $region16: #{ours_forward.2} parent=11 // pred_fallthru
        _
      // Predicated region
      $region17: #{ours_forward.2} parent=11 // pred_check
        %p149 = pneg %p79
      $region18: #{ours_forward.2} parent=11 // pred_check_branch
        %151 = sbr.rel (%p149) target = $region20
      $region19: #{ours_forward.2} parent=11 // pred_region
        _
      $region20: #{ours_forward.2} parent=11 // pred_fallthru
        _
    $region12: #{ours_forward.2} parent=5 // pred_fallthru
      _
    %p152 = scmp.lt.s32.totalorder %s11, 2
    // Predicated region
    $region21: #{ours_forward.2} parent=5 // pred_check
      %p153 = pneg %p152
    $region22: #{ours_forward.2} parent=5 // pred_check_branch
      %155 = sbr.rel (%p153) target = $region24
    $region23: #{ours_forward.2} parent=5 // pred_region
      // Predicated region
      $region25: #{ours_forward.2} parent=23 // pred_check
        %p156 = pneg %p31
      $region26: #{ours_forward.2} parent=23 // pred_check_branch
        %158 = sbr.rel (%p156) target = $region28
      $region27: #{ours_forward.2} parent=23 // pred_region
        %p159 = scmp.lt.s32.totalorder %s11, 1
        %s160 = scalar_select %p159, %s11, 1
        %s161 = smul.addr %s160, 54
        %s162 = smul.addr %s161, 4
        %s163 = scalar_lea.vmem %s0, %s162
      $region28: #{ours_forward.2} parent=23 // pred_fallthru
        _
    $region24: #{ours_forward.2} parent=5 // pred_fallthru
      _
    %p164 = scmp.le.s32.totalorder 1, %s11
    %p165 = scmp.lt.s32.totalorder %s11, 3
    %p166 = pnand %p164, %p165
    %p167 = pneg %p166
    // Predicated region
    $region29: #{ours_forward.2} parent=5 // pred_check
      _
    $region30: #{ours_forward.2} parent=5 // pred_check_branch
      %169 = sbr.rel (%p166) target = $region32
    $region31: #{ours_forward.2} parent=5 // pred_region
      %s170 = ssub.s32 %s11, 1
      %p171 = scmp.lt.s32.totalorder %s16, 1
      %s172 = scalar_select %p171, %s16, 1
      %s173 = smul.addr %s172, 54
      %s174 = smul.addr %s173, 4
      %s175 = scalar_lea.vmem %s0, %s174
      %p176 = pneg %p37
      %p177 = pneg %p34
      %p178 = pneg %p58
      %p179 = pneg %p55
      %p180 = pneg %p79
      %p181 = pneg %p76
      %p182 = pneg %p105
      %p183 = pneg %p102
      %p184 = scmp.lt.s32.totalorder %s16, 1
      %s185 = scalar_select %p184, %s16, 1
      %s186 = smul.addr %s185, 32
      %s187 = smul.addr %s186, 8
      %s188 = scalar_lea.vmem %s3, %s187
      %p189 = pneg %p131
      %p190 = pneg %p128
      %p191 = scmp.lt.s32.totalorder %s16, 1
      %s192 = scalar_select %p191, %s16, 1
      %s193 = smul.addr %s192, 2
      %s194 = scalar_lea.vmem %s4, %s193
      %p195 = scmp.lt.s32.totalorder %s16, 1
      %s196 = scalar_select %p195, %s16, 1
      %s197 = smul.addr %s196, 54
      %s198 = smul.addr %s197, 4
      %s199 = scalar_lea.vmem %s0, %s198
      %p200 = scmp.lt.s32.totalorder %s16, 1
      %s201 = scalar_select %p200, %s16, 1
      %s202 = smul.addr %s201, 32
      %s203 = smul.addr %s202, 8
      %s204 = scalar_lea.vmem %s3, %s203
      %p205 = scmp.lt.s32.totalorder %s16, 1
      %s206 = scalar_select %p205, %s16, 1
      %s207 = smul.addr %s206, 2
      %s208 = scalar_lea.vmem %s4, %s207
      %v210 = vld [vmem:[%s199] sm:$0xf]
      %v211 = vld [vmem:[%s199 + $0x4] sm:$0xf]
      %v212 = vld [vmem:[%s199 + $0x8] sm:$0x1]
      %v213 = vld [vmem:[%s199 + $0xc] sm:$0xf]
      %v214 = vld [vmem:[%s199 + $0x10] sm:$0xf]
      %v215 = vld [vmem:[%s199 + $0x14] sm:$0x1]
      %v216 = vld [vmem:[%s199 + $0x18] sm:$0xf]
      %v217 = vld [vmem:[%s199 + $0x1c] sm:$0xf]
      %v218 = vld [vmem:[%s199 + $0x20] sm:$0x1]
      %v219 = vld [vmem:[%s199 + $0x24] sm:$0xf]
      %v220 = vld [vmem:[%s199 + $0x28] sm:$0xf]
      %v221 = vld [vmem:[%s199 + $0x2c] sm:$0x1]
      %v222 = vld [vmem:[%s199 + $0x30] sm:$0xf]
      %v223 = vld [vmem:[%s199 + $0x34] sm:$0xf]
      %v224 = vld [vmem:[%s199 + $0x38] sm:$0x1]
      %v225 = vld [vmem:[%s199 + $0x3c] sm:$0xf]
      %v226 = vld [vmem:[%s199 + $0x40] sm:$0xf]
      %v227 = vld [vmem:[%s199 + $0x44] sm:$0x1]
      %v228 = vld [vmem:[%s199 + $0x48] sm:$0xf]
      %v229 = vld [vmem:[%s199 + $0x4c] sm:$0xf]
      %v230 = vld [vmem:[%s199 + $0x50] sm:$0x1]
      %v231 = vld [vmem:[%s199 + $0x54] sm:$0xf]
      %v232 = vld [vmem:[%s199 + $0x58] sm:$0xf]
      %v233 = vld [vmem:[%s199 + $0x5c] sm:$0x1]
      %v234 = vld [vmem:[%s199 + $0x60] sm:$0xf]
      %v235 = vld [vmem:[%s199 + $0x64] sm:$0xf]
      %v236 = vld [vmem:[%s199 + $0x68] sm:$0x1]
      %v237 = vld [vmem:[%s199 + $0x6c] sm:$0xf]
      %v238 = vld [vmem:[%s199 + $0x70] sm:$0xf]
      %v239 = vld [vmem:[%s199 + $0x74] sm:$0x1]
      %v240 = vld [vmem:[%s199 + $0x78] sm:$0xf]
      %v241 = vld [vmem:[%s199 + $0x7c] sm:$0xf]
      %v242 = vld [vmem:[%s199 + $0x80] sm:$0x1]
      %v243 = vld [vmem:[%s199 + $0x84] sm:$0xf]
      %v244 = vld [vmem:[%s199 + $0x88] sm:$0xf]
      %v245 = vld [vmem:[%s199 + $0x8c] sm:$0x1]
      %v246 = vld [vmem:[%s199 + $0x90] sm:$0xf]
      %v247 = vld [vmem:[%s199 + $0x94] sm:$0xf]
      %v248 = vld [vmem:[%s199 + $0x98] sm:$0x1]
      %v249 = vld [vmem:[%s199 + $0x9c] sm:$0xf]
      %v250 = vld [vmem:[%s199 + $0xa0] sm:$0xf]
      %v251 = vld [vmem:[%s199 + $0xa4] sm:$0x1]
      %v252 = vld [vmem:[%s199 + $0xa8] sm:$0xf]
      %v253 = vld [vmem:[%s199 + $0xac] sm:$0xf]
      %v254 = vld [vmem:[%s199 + $0xb0] sm:$0x1]
      %v255 = vld [vmem:[%s199 + $0xb4] sm:$0xf]
      %v256 = vld [vmem:[%s199 + $0xb8] sm:$0xf]
      %v257 = vld [vmem:[%s199 + $0xbc] sm:$0x1]
      %v258 = vld [vmem:[%s199 + $0xc0] sm:$0xf]
      %v259 = vld [vmem:[%s199 + $0xc4] sm:$0xf]
      %v260 = vld [vmem:[%s199 + $0xc8] sm:$0x1]
      %v261 = vld [vmem:[%s199 + $0xcc] sm:$0xf]
      %v262 = vld [vmem:[%s199 + $0xd0] sm:$0xf]
      %v263 = vld [vmem:[%s199 + $0xd4] sm:$0x1]
      %v264 = vld [vmem:[%s1] sm:$0x3]
      %vm265 = vsmask.f32 3328
      %vm266 = vsmask.f32 7440
      %vm267 = vmor %vm265, %vm266
      %v269 = vshrl.u32 %v210, 16
      %v271 = vrot.slane %v269, 4
      %v272 = vshll.u32 %v210, 16
      %v274 = vrot.slane %v272, 5
      %v275 = vor.u32 %v271, %v274
      %v276 = vrot.slane %v275, 4
      %v278 = vshll.u32 %v211, 16
      %v280 = vrot.slane %v278, 5
      %v281 = vsel %vm267, %v276, %v280
      %v282 = vshrl.u32 %v211, 16
      %v284 = vrot.slane %v282, 4
      %v285 = vor.u32 %v284, %v280
      %v286 = vrot.slane %v285, 4
      %v288 = vshll.u32 %v212, 16
      %v290 = vrot.slane %v288, 5
      %v291 = vsel %vm267, %v286, %v290
      %v293 = vshrl.u32 %v213, 16
      %v295 = vrot.slane %v293, 4
      %v296 = vshll.u32 %v213, 16
      %v298 = vrot.slane %v296, 5
      %v299 = vor.u32 %v295, %v298
      %v300 = vrot.slane %v299, 4
      %v302 = vshll.u32 %v214, 16
      %v304 = vrot.slane %v302, 5
      %v305 = vsel %vm267, %v300, %v304
      %v306 = vshrl.u32 %v214, 16
      %v308 = vrot.slane %v306, 4
      %v309 = vor.u32 %v308, %v304
      %v310 = vrot.slane %v309, 4
      %v312 = vshll.u32 %v215, 16
      %v314 = vrot.slane %v312, 5
      %v315 = vsel %vm267, %v310, %v314
      %v317 = vshrl.u32 %v216, 16
      %v319 = vrot.slane %v317, 4
      %v320 = vshll.u32 %v216, 16
      %v322 = vrot.slane %v320, 5
      %v323 = vor.u32 %v319, %v322
      %v324 = vrot.slane %v323, 4
      %v326 = vshll.u32 %v217, 16
      %v328 = vrot.slane %v326, 5
      %v329 = vsel %vm267, %v324, %v328
      %v330 = vshrl.u32 %v217, 16
      %v332 = vrot.slane %v330, 4
      %v333 = vor.u32 %v332, %v328
      %v334 = vrot.slane %v333, 4
      %v336 = vshll.u32 %v218, 16
      %v338 = vrot.slane %v336, 5
      %v339 = vsel %vm267, %v334, %v338
      %v341 = vshrl.u32 %v219, 16
      %v343 = vrot.slane %v341, 4
      %v344 = vshll.u32 %v219, 16
      %v346 = vrot.slane %v344, 5
      %v347 = vor.u32 %v343, %v346
      %v348 = vrot.slane %v347, 4
      %v350 = vshll.u32 %v220, 16
      %v352 = vrot.slane %v350, 5
      %v353 = vsel %vm267, %v348, %v352
      %v354 = vshrl.u32 %v220, 16
      %v356 = vrot.slane %v354, 4
      %v357 = vor.u32 %v356, %v352
      %v358 = vrot.slane %v357, 4
      %v360 = vshll.u32 %v221, 16
      %v362 = vrot.slane %v360, 5
      %v363 = vsel %vm267, %v358, %v362
      %v365 = vshrl.u32 %v222, 16
      %v367 = vrot.slane %v365, 4
      %v368 = vshll.u32 %v222, 16
      %v370 = vrot.slane %v368, 5
      %v371 = vor.u32 %v367, %v370
      %v372 = vrot.slane %v371, 4
      %v374 = vshll.u32 %v223, 16
      %v376 = vrot.slane %v374, 5
      %v377 = vsel %vm267, %v372, %v376
      %v378 = vshrl.u32 %v223, 16
      %v380 = vrot.slane %v378, 4
      %v381 = vor.u32 %v380, %v376
      %v382 = vrot.slane %v381, 4
      %v384 = vshll.u32 %v224, 16
      %v386 = vrot.slane %v384, 5
      %v387 = vsel %vm267, %v382, %v386
      %v389 = vshrl.u32 %v225, 16
      %v391 = vrot.slane %v389, 4
      %v392 = vshll.u32 %v225, 16
      %v394 = vrot.slane %v392, 5
      %v395 = vor.u32 %v391, %v394
      %v396 = vrot.slane %v395, 4
      %v398 = vshll.u32 %v226, 16
      %v400 = vrot.slane %v398, 5
      %v401 = vsel %vm267, %v396, %v400
      %v402 = vshrl.u32 %v226, 16
      %v404 = vrot.slane %v402, 4
      %v405 = vor.u32 %v404, %v400
      %v406 = vrot.slane %v405, 4
      %v408 = vshll.u32 %v227, 16
      %v410 = vrot.slane %v408, 5
      %v411 = vsel %vm267, %v406, %v410
      %v413 = vshrl.u32 %v228, 16
      %v415 = vrot.slane %v413, 4
      %v416 = vshll.u32 %v228, 16
      %v418 = vrot.slane %v416, 5
      %v419 = vor.u32 %v415, %v418
      %v420 = vrot.slane %v419, 4
      %v422 = vshll.u32 %v229, 16
      %v424 = vrot.slane %v422, 5
      %v425 = vsel %vm267, %v420, %v424
      %v426 = vshrl.u32 %v229, 16
      %v428 = vrot.slane %v426, 4
      %v429 = vor.u32 %v428, %v424
      %v430 = vrot.slane %v429, 4
      %v432 = vshll.u32 %v230, 16
      %v434 = vrot.slane %v432, 5
      %v435 = vsel %vm267, %v430, %v434
      %v437 = vshrl.u32 %v231, 16
      %v439 = vrot.slane %v437, 4
      %v440 = vshll.u32 %v231, 16
      %v442 = vrot.slane %v440, 5
      %v443 = vor.u32 %v439, %v442
      %v444 = vrot.slane %v443, 4
      %v446 = vshll.u32 %v232, 16
      %v448 = vrot.slane %v446, 5
      %v449 = vsel %vm267, %v444, %v448
      %v450 = vshrl.u32 %v232, 16
      %v452 = vrot.slane %v450, 4
      %v453 = vor.u32 %v452, %v448
      %v454 = vrot.slane %v453, 4
      %v456 = vshll.u32 %v233, 16
      %v458 = vrot.slane %v456, 5
      %v459 = vsel %vm267, %v454, %v458
      %v461 = vshrl.u32 %v234, 16
      %v463 = vrot.slane %v461, 4
      %v464 = vshll.u32 %v234, 16
      %v466 = vrot.slane %v464, 5
      %v467 = vor.u32 %v463, %v466
      %v468 = vrot.slane %v467, 4
      %v470 = vshll.u32 %v235, 16
      %v472 = vrot.slane %v470, 5
      %v473 = vsel %vm267, %v468, %v472
      %v474 = vshrl.u32 %v235, 16
      %v476 = vrot.slane %v474, 4
      %v477 = vor.u32 %v476, %v472
      %v478 = vrot.slane %v477, 4
      %v480 = vshll.u32 %v236, 16
      %v482 = vrot.slane %v480, 5
      %v483 = vsel %vm267, %v478, %v482
      %v485 = vshrl.u32 %v237, 16
      %v487 = vrot.slane %v485, 4
      %v488 = vshll.u32 %v237, 16
      %v490 = vrot.slane %v488, 5
      %v491 = vor.u32 %v487, %v490
      %v492 = vrot.slane %v491, 4
      %v494 = vshll.u32 %v238, 16
      %v496 = vrot.slane %v494, 5
      %v497 = vsel %vm267, %v492, %v496
      %v498 = vshrl.u32 %v238, 16
      %v500 = vrot.slane %v498, 4
      %v501 = vor.u32 %v500, %v496
      %v502 = vrot.slane %v501, 4
      %v504 = vshll.u32 %v239, 16
      %v506 = vrot.slane %v504, 5
      %v507 = vsel %vm267, %v502, %v506
      %v509 = vshrl.u32 %v240, 16
      %v511 = vrot.slane %v509, 4
      %v512 = vshll.u32 %v240, 16
      %v514 = vrot.slane %v512, 5
      %v515 = vor.u32 %v511, %v514
      %v516 = vrot.slane %v515, 4
      %v518 = vshll.u32 %v241, 16
      %v520 = vrot.slane %v518, 5
      %v521 = vsel %vm267, %v516, %v520
      %v522 = vshrl.u32 %v241, 16
      %v524 = vrot.slane %v522, 4
      %v525 = vor.u32 %v524, %v520
      %v526 = vrot.slane %v525, 4
      %v528 = vshll.u32 %v242, 16
      %v530 = vrot.slane %v528, 5
      %v531 = vsel %vm267, %v526, %v530
      %v533 = vshrl.u32 %v243, 16
      %v535 = vrot.slane %v533, 4
      %v536 = vshll.u32 %v243, 16
      %v538 = vrot.slane %v536, 5
      %v539 = vor.u32 %v535, %v538
      %v540 = vrot.slane %v539, 4
      %v542 = vshll.u32 %v244, 16
      %v544 = vrot.slane %v542, 5
      %v545 = vsel %vm267, %v540, %v544
      %v546 = vshrl.u32 %v244, 16
      %v548 = vrot.slane %v546, 4
      %v549 = vor.u32 %v548, %v544
      %v550 = vrot.slane %v549, 4
      %v552 = vshll.u32 %v245, 16
      %v554 = vrot.slane %v552, 5
      %v555 = vsel %vm267, %v550, %v554
      %v557 = vshrl.u32 %v246, 16
      %v559 = vrot.slane %v557, 4
      %v560 = vshll.u32 %v246, 16
      %v562 = vrot.slane %v560, 5
      %v563 = vor.u32 %v559, %v562
      %v564 = vrot.slane %v563, 4
      %v566 = vshll.u32 %v247, 16
      %v568 = vrot.slane %v566, 5
      %v569 = vsel %vm267, %v564, %v568
      %v570 = vshrl.u32 %v247, 16
      %v572 = vrot.slane %v570, 4
      %v573 = vor.u32 %v572, %v568
      %v574 = vrot.slane %v573, 4
      %v576 = vshll.u32 %v248, 16
      %v578 = vrot.slane %v576, 5
      %v579 = vsel %vm267, %v574, %v578
      %v581 = vshrl.u32 %v249, 16
      %v583 = vrot.slane %v581, 4
      %v584 = vshll.u32 %v249, 16
      %v586 = vrot.slane %v584, 5
      %v587 = vor.u32 %v583, %v586
      %v588 = vrot.slane %v587, 4
      %v590 = vshll.u32 %v250, 16
      %v592 = vrot.slane %v590, 5
      %v593 = vsel %vm267, %v588, %v592
      %v594 = vshrl.u32 %v250, 16
      %v596 = vrot.slane %v594, 4
      %v597 = vor.u32 %v596, %v592
      %v598 = vrot.slane %v597, 4
      %v600 = vshll.u32 %v251, 16
      %v602 = vrot.slane %v600, 5
      %v603 = vsel %vm267, %v598, %v602
      %v605 = vshrl.u32 %v252, 16
      %v607 = vrot.slane %v605, 4
      %v608 = vshll.u32 %v252, 16
      %v610 = vrot.slane %v608, 5
      %v611 = vor.u32 %v607, %v610
      %v612 = vrot.slane %v611, 4
      %v614 = vshll.u32 %v253, 16
      %v616 = vrot.slane %v614, 5
      %v617 = vsel %vm267, %v612, %v616
      %v618 = vshrl.u32 %v253, 16
      %v620 = vrot.slane %v618, 4
      %v621 = vor.u32 %v620, %v616
      %v622 = vrot.slane %v621, 4
      %v624 = vshll.u32 %v254, 16
      %v626 = vrot.slane %v624, 5
      %v627 = vsel %vm267, %v622, %v626
      %v629 = vshrl.u32 %v255, 16
      %v631 = vrot.slane %v629, 4
      %v632 = vshll.u32 %v255, 16
      %v634 = vrot.slane %v632, 5
      %v635 = vor.u32 %v631, %v634
      %v636 = vrot.slane %v635, 4
      %v638 = vshll.u32 %v256, 16
      %v640 = vrot.slane %v638, 5
      %v641 = vsel %vm267, %v636, %v640
      %v642 = vshrl.u32 %v256, 16
      %v644 = vrot.slane %v642, 4
      %v645 = vor.u32 %v644, %v640
      %v646 = vrot.slane %v645, 4
      %v648 = vshll.u32 %v257, 16
      %v650 = vrot.slane %v648, 5
      %v651 = vsel %vm267, %v646, %v650
      %s652 = scalar_lea.vmem %s1, 2
      %v653 = vld [vmem:[%s652] sm:$0x3]
      %v654 = vunpack.c.l.b16 %v281
      %v655 = vunpack.c.l.b16 %v291
      %v656 = vunpack.c.l.b16 %v305
      %v657 = vunpack.c.l.b16 %v315
      %v658 = vunpack.c.l.b16 %v329
      %v659 = vunpack.c.l.b16 %v339
      %v660 = vunpack.c.l.b16 %v353
      %v661 = vunpack.c.l.b16 %v363
      %v662 = vunpack.c.l.b16 %v377
      %v663 = vunpack.c.l.b16 %v387
      %v664 = vunpack.c.l.b16 %v401
      %v665 = vunpack.c.l.b16 %v411
      %v666 = vunpack.c.l.b16 %v425
      %v667 = vunpack.c.l.b16 %v435
      %v668 = vunpack.c.l.b16 %v449
      %v669 = vunpack.c.l.b16 %v459
      %v670 = vunpack.c.l.b16 %v473
      %v671 = vunpack.c.l.b16 %v483
      %v672 = vunpack.c.l.b16 %v497
      %v673 = vunpack.c.l.b16 %v507
      %v674 = vunpack.c.l.b16 %v521
      %v675 = vunpack.c.l.b16 %v531
      %v676 = vunpack.c.l.b16 %v545
      %v677 = vunpack.c.l.b16 %v555
      %v678 = vunpack.c.l.b16 %v569
      %v679 = vunpack.c.l.b16 %v579
      %v680 = vunpack.c.l.b16 %v593
      %v681 = vunpack.c.l.b16 %v603
      %v682 = vunpack.c.l.b16 %v617
      %v683 = vunpack.c.l.b16 %v627
      %v684 = vunpack.c.l.b16 %v641
      %v685 = vunpack.c.l.b16 %v651
      %v686 = vpack.c.b16 %v655, %v654
      %v687 = vpack.c.b16 %v657, %v656
      %v688 = vpack.c.b16 %v659, %v658
      %v689 = vpack.c.b16 %v661, %v660
      %v690 = vpack.c.b16 %v663, %v662
      %v691 = vpack.c.b16 %v665, %v664
      %v692 = vpack.c.b16 %v667, %v666
      %v693 = vpack.c.b16 %v669, %v668
      %v694 = vpack.c.b16 %v671, %v670
      %v695 = vpack.c.b16 %v673, %v672
      %v696 = vpack.c.b16 %v675, %v674
      %v697 = vpack.c.b16 %v677, %v676
      %v698 = vpack.c.b16 %v679, %v678
      %v699 = vpack.c.b16 %v681, %v680
      %v700 = vpack.c.b16 %v683, %v682
      %v701 = vpack.c.b16 %v685, %v684
      %vm702 = vcmask 31744
      %v704 = vsel %vm702, %v686, 0
      %v707 = vsel %vm702, %v687, 0
      %v710 = vsel %vm702, %v688, 0
      %v713 = vsel %vm702, %v689, 0
      %v716 = vsel %vm702, %v690, 0
      %v719 = vsel %vm702, %v691, 0
      %v722 = vsel %vm702, %v692, 0
      %v725 = vsel %vm702, %v693, 0
      %v728 = vsel %vm702, %v694, 0
      %v731 = vsel %vm702, %v695, 0
      %v734 = vsel %vm702, %v696, 0
      %v737 = vsel %vm702, %v697, 0
      %v740 = vsel %vm702, %v698, 0
      %v743 = vsel %vm702, %v699, 0
      %v746 = vsel %vm702, %v700, 0
      %v749 = vsel %vm702, %v701, 0
      %vm751 = vcmask 1041408
      %v753 = vsel %vm751, %v653, 0
      %755 = vmatprep.subr.bf16.mxu0 0
      %756 = vmatpush1.bf16.msra.mxu0 %v753
      %757 = vmatprep.subr.bf16.mxu0 0
      %758 = vmatpush1.bf16.msra.mxu0 0
      %759 = vmatprep.subr.bf16.mxu0 0
      %760 = vmatpush1.bf16.msra.mxu0 0
      %761 = vmatprep.subr.bf16.mxu0 0
      %762 = vmatpush1.bf16.msra.mxu0 0
      %763 = vmatprep.subr.bf16.mxu0 0
      %764 = vmatpush1.bf16.msra.mxu0 0
      %765 = vmatprep.subr.bf16.mxu0 0
      %766 = vmatpush1.bf16.msra.mxu0 0
      %767 = vmatprep.subr.bf16.mxu0 0
      %768 = vmatpush1.bf16.msra.mxu0 0
      %769 = vmatprep.subr.bf16.mxu0 0
      %770 = vmatpush1.bf16.msra.mxu0 0
      %771 = vmatprep.subr.bf16.mxu0 0
      %772 = vmatpush1.bf16.msra.mxu0 0
      %773 = vmatprep.subr.bf16.mxu0 0
      %774 = vmatpush1.bf16.msra.mxu0 0
      %775 = vmatprep.subr.bf16.mxu0 0
      %776 = vmatpush1.bf16.msra.mxu0 0
      %777 = vmatprep.subr.bf16.mxu0 0
      %778 = vmatpush1.bf16.msra.mxu0 0
      %779 = vmatprep.subr.bf16.mxu0 0
      %780 = vmatpush1.bf16.msra.mxu0 0
      %781 = vmatprep.subr.bf16.mxu0 0
      %782 = vmatpush1.bf16.msra.mxu0 0
      %783 = vmatprep.subr.bf16.mxu0 0
      %784 = vmatpush1.bf16.msra.mxu0 0
      %785 = vmatprep.subr.bf16.mxu0 0
      %786 = vmatpush1.bf16.msra.mxu0 0
      %787 = vmatprep.mubr.bf16.mxu0 0
      %788 = vmatmul.mubr.bf16.gmra.mrb[0].mxu0 %v704
      %v789 = vpop.f32.mrb[0].mxu0
      %v790 = vadd.f32 0.0, %v789
      %v791 = vpop.f32.mrb[0].mxu0
      %v792 = vpop.f32.mrb[0].mxu0
      %v793 = vadd.f32 0.0, %v792
      %v794 = vpop.f32.mrb[0].mxu0
      %795 = vmatprep.mubr.bf16.mxu0 0
      %796 = vmatmul.mubr.bf16.gmra.mrb[0].mxu0 %v707
      %v797 = vpop.f32.mrb[0].mxu0
      %v798 = vadd.f32 0.0, %v797
      %v799 = vpop.f32.mrb[0].mxu0
      %v800 = vpop.f32.mrb[0].mxu0
      %v801 = vadd.f32 0.0, %v800
      %v802 = vpop.f32.mrb[0].mxu0
      %803 = vmatprep.mubr.bf16.mxu0 0
      %804 = vmatmul.mubr.bf16.gmra.mrb[0].mxu0 %v710
      %v805 = vpop.f32.mrb[0].mxu0
      %v806 = vadd.f32 0.0, %v805
      %v807 = vpop.f32.mrb[0].mxu0
      %v808 = vpop.f32.mrb[0].mxu0
      %v809 = vadd.f32 0.0, %v808
      %v810 = vpop.f32.mrb[0].mxu0
      %811 = vmatprep.mubr.bf16.mxu0 0
      %812 = vmatmul.mubr.bf16.gmra.mrb[0].mxu0 %v713
      %v813 = vpop.f32.mrb[0].mxu0
      %v814 = vadd.f32 0.0, %v813
      %v815 = vpop.f32.mrb[0].mxu0
      %v816 = vpop.f32.mrb[0].mxu0
      %v817 = vadd.f32 0.0, %v816
      %v818 = vpop.f32.mrb[0].mxu0
      %819 = vmatprep.mubr.bf16.mxu0 0
      %820 = vmatmul.mubr.bf16.gmra.mrb[0].mxu0 %v716
      %v821 = vpop.f32.mrb[0].mxu0
      %v822 = vadd.f32 0.0, %v821
      %v823 = vpop.f32.mrb[0].mxu0
      %v824 = vpop.f32.mrb[0].mxu0
      %v825 = vadd.f32 0.0, %v824
      %v826 = vpop.f32.mrb[0].mxu0
      %827 = vmatprep.mubr.bf16.mxu0 0
      %828 = vmatmul.mubr.bf16.gmra.mrb[0].mxu0 %v719
      %v829 = vpop.f32.mrb[0].mxu0
      %v830 = vadd.f32 0.0, %v829
      %v831 = vpop.f32.mrb[0].mxu0
      %v832 = vpop.f32.mrb[0].mxu0
      %v833 = vadd.f32 0.0, %v832
      %v834 = vpop.f32.mrb[0].mxu0
      %835 = vmatprep.mubr.bf16.mxu0 0
      %836 = vmatmul.mubr.bf16.gmra.mrb[0].mxu0 %v722
      %v837 = vpop.f32.mrb[0].mxu0
      %v838 = vadd.f32 0.0, %v837
      %v839 = vpop.f32.mrb[0].mxu0
      %v840 = vpop.f32.mrb[0].mxu0
      %v841 = vadd.f32 0.0, %v840
      %v842 = vpop.f32.mrb[0].mxu0
      %843 = vmatprep.mubr.bf16.mxu0 0
      %844 = vmatmul.mubr.bf16.gmra.mrb[0].mxu0 %v725
      %v845 = vpop.f32.mrb[0].mxu0
      %v846 = vadd.f32 0.0, %v845
      %v847 = vpop.f32.mrb[0].mxu0
      %v848 = vpop.f32.mrb[0].mxu0
      %v849 = vadd.f32 0.0, %v848
      %v850 = vpop.f32.mrb[0].mxu0
      %851 = vmatprep.mubr.bf16.mxu0 0
      %852 = vmatmul.mubr.bf16.gmra.mrb[0].mxu0 %v728
      %v853 = vpop.f32.mrb[0].mxu0
      %v854 = vadd.f32 0.0, %v853
      %v855 = vpop.f32.mrb[0].mxu0
      %v856 = vpop.f32.mrb[0].mxu0
      %v857 = vadd.f32 0.0, %v856
      %v858 = vpop.f32.mrb[0].mxu0
      %859 = vmatprep.mubr.bf16.mxu0 0
      %860 = vmatmul.mubr.bf16.gmra.mrb[0].mxu0 %v731
      %v861 = vpop.f32.mrb[0].mxu0
      %v862 = vadd.f32 0.0, %v861
      %v863 = vpop.f32.mrb[0].mxu0
      %v864 = vpop.f32.mrb[0].mxu0
      %v865 = vadd.f32 0.0, %v864
      %v866 = vpop.f32.mrb[0].mxu0
      %867 = vmatprep.mubr.bf16.mxu0 0
      %868 = vmatmul.mubr.bf16.gmra.mrb[0].mxu0 %v734
      %v869 = vpop.f32.mrb[0].mxu0
      %v870 = vadd.f32 0.0, %v869
      %v871 = vpop.f32.mrb[0].mxu0
      %v872 = vpop.f32.mrb[0].mxu0
      %v873 = vadd.f32 0.0, %v872
      %v874 = vpop.f32.mrb[0].mxu0
      %875 = vmatprep.mubr.bf16.mxu0 0
      %876 = vmatmul.mubr.bf16.gmra.mrb[0].mxu0 %v737
      %v877 = vpop.f32.mrb[0].mxu0
      %v878 = vadd.f32 0.0, %v877
      %v879 = vpop.f32.mrb[0].mxu0
      %v880 = vpop.f32.mrb[0].mxu0
      %v881 = vadd.f32 0.0, %v880
      %v882 = vpop.f32.mrb[0].mxu0
      %883 = vmatprep.mubr.bf16.mxu0 0
      %884 = vmatmul.mubr.bf16.gmra.mrb[0].mxu0 %v740
      %v885 = vpop.f32.mrb[0].mxu0
      %v886 = vadd.f32 0.0, %v885
      %v887 = vpop.f32.mrb[0].mxu0
      %v888 = vpop.f32.mrb[0].mxu0
      %v889 = vadd.f32 0.0, %v888
      %v890 = vpop.f32.mrb[0].mxu0
      %891 = vmatprep.mubr.bf16.mxu0 0
      %892 = vmatmul.mubr.bf16.gmra.mrb[0].mxu0 %v743
      %v893 = vpop.f32.mrb[0].mxu0
      %v894 = vadd.f32 0.0, %v893
      %v895 = vpop.f32.mrb[0].mxu0
      %v896 = vpop.f32.mrb[0].mxu0
      %v897 = vadd.f32 0.0, %v896
      %v898 = vpop.f32.mrb[0].mxu0
      %899 = vmatprep.mubr.bf16.mxu0 0
      %900 = vmatmul.mubr.bf16.gmra.mrb[0].mxu0 %v746
      %v901 = vpop.f32.mrb[0].mxu0
      %v902 = vadd.f32 0.0, %v901
      %v903 = vpop.f32.mrb[0].mxu0
      %v904 = vpop.f32.mrb[0].mxu0
      %v905 = vadd.f32 0.0, %v904
      %v906 = vpop.f32.mrb[0].mxu0
      %907 = vmatprep.mubr.bf16.mxu0 0
      %908 = vmatmul.mubr.bf16.gmra.mrb[0].mxu0 %v749
      %v909 = vpop.f32.mrb[0].mxu0
      %v910 = vadd.f32 0.0, %v909
      %v911 = vpop.f32.mrb[0].mxu0
      %v912 = vpop.f32.mrb[0].mxu0
      %v913 = vadd.f32 0.0, %v912
      %v914 = vpop.f32.mrb[0].mxu0
      %915 = vdwg.mxu0
      %v948 = vunpack.c.l.b16 %v210
      %v949 = vunpack.c.l.b16 %v211
      %v950 = vunpack.c.l.b16 %v213
      %v951 = vunpack.c.l.b16 %v214
      %v952 = vunpack.c.l.b16 %v216
      %v953 = vunpack.c.l.b16 %v217
      %v954 = vunpack.c.l.b16 %v219
      %v955 = vunpack.c.l.b16 %v220
      %v956 = vunpack.c.l.b16 %v222
      %v957 = vunpack.c.l.b16 %v223
      %v958 = vunpack.c.l.b16 %v225
      %v959 = vunpack.c.l.b16 %v226
      %v960 = vunpack.c.l.b16 %v228
      %v961 = vunpack.c.l.b16 %v229
      %v962 = vunpack.c.l.b16 %v231
      %v963 = vunpack.c.l.b16 %v232
      %v964 = vunpack.c.l.b16 %v234
      %v965 = vunpack.c.l.b16 %v235
      %v966 = vunpack.c.l.b16 %v237
      %v967 = vunpack.c.l.b16 %v238
      %v968 = vunpack.c.l.b16 %v240
      %v969 = vunpack.c.l.b16 %v241
      %v970 = vunpack.c.l.b16 %v243
      %v971 = vunpack.c.l.b16 %v244
      %v972 = vunpack.c.l.b16 %v246
      %v973 = vunpack.c.l.b16 %v247
      %v974 = vunpack.c.l.b16 %v249
      %v975 = vunpack.c.l.b16 %v250
      %v976 = vunpack.c.l.b16 %v252
      %v977 = vunpack.c.l.b16 %v253
      %v978 = vunpack.c.l.b16 %v255
      %v979 = vunpack.c.l.b16 %v256
      %v980 = vpack.c.b16 %v949, %v948
      %v981 = vpack.c.b16 %v951, %v950
      %v982 = vpack.c.b16 %v953, %v952
      %v983 = vpack.c.b16 %v955, %v954
      %v984 = vpack.c.b16 %v957, %v956
      %v985 = vpack.c.b16 %v959, %v958
      %v986 = vpack.c.b16 %v961, %v960
      %v987 = vpack.c.b16 %v963, %v962
      %v988 = vpack.c.b16 %v965, %v964
      %v989 = vpack.c.b16 %v967, %v966
      %v990 = vpack.c.b16 %v969, %v968
      %v991 = vpack.c.b16 %v971, %v970
      %v992 = vpack.c.b16 %v973, %v972
      %v993 = vpack.c.b16 %v975, %v974
      %v994 = vpack.c.b16 %v977, %v976
      %v995 = vpack.c.b16 %v979, %v978
      %v997 = vsel %vm702, %v980, 0
      %v1000 = vsel %vm702, %v981, 0
      %v1003 = vsel %vm702, %v982, 0
      %v1006 = vsel %vm702, %v983, 0
      %v1009 = vsel %vm702, %v984, 0
      %v1012 = vsel %vm702, %v985, 0
      %v1015 = vsel %vm702, %v986, 0
      %v1018 = vsel %vm702, %v987, 0
      %v1021 = vsel %vm702, %v988, 0
      %v1024 = vsel %vm702, %v989, 0
      %v1027 = vsel %vm702, %v990, 0
      %v1030 = vsel %vm702, %v991, 0
      %v1033 = vsel %vm702, %v992, 0
      %v1036 = vsel %vm702, %v993, 0
      %v1039 = vsel %vm702, %v994, 0
      %v1042 = vsel %vm702, %v995, 0
      %v1045 = vsel %vm751, %v264, 0
      %1047 = vmatprep.subr.bf16.mxu0 0
      %1048 = vmatpush1.bf16.msra.mxu0 %v1045
      %1049 = vmatprep.subr.bf16.mxu0 0
      %1050 = vmatpush1.bf16.msra.mxu0 0
      %1051 = vmatprep.subr.bf16.mxu0 0
      %1052 = vmatpush1.bf16.msra.mxu0 0
      %1053 = vmatprep.subr.bf16.mxu0 0
      %1054 = vmatpush1.bf16.msra.mxu0 0
      %1055 = vmatprep.subr.bf16.mxu0 0
      %1056 = vmatpush1.bf16.msra.mxu0 0
      %1057 = vmatprep.subr.bf16.mxu0 0
      %1058 = vmatpush1.bf16.msra.mxu0 0
      %1059 = vmatprep.subr.bf16.mxu0 0
      %1060 = vmatpush1.bf16.msra.mxu0 0
      %1061 = vmatprep.subr.bf16.mxu0 0
      %1062 = vmatpush1.bf16.msra.mxu0 0
      %1063 = vmatprep.subr.bf16.mxu0 0
      %1064 = vmatpush1.bf16.msra.mxu0 0
      %1065 = vmatprep.subr.bf16.mxu0 0
      %1066 = vmatpush1.bf16.msra.mxu0 0
      %1067 = vmatprep.subr.bf16.mxu0 0
      %1068 = vmatpush1.bf16.msra.mxu0 0
      %1069 = vmatprep.subr.bf16.mxu0 0
      %1070 = vmatpush1.bf16.msra.mxu0 0
      %1071 = vmatprep.subr.bf16.mxu0 0
      %1072 = vmatpush1.bf16.msra.mxu0 0
      %1073 = vmatprep.subr.bf16.mxu0 0
      %1074 = vmatpush1.bf16.msra.mxu0 0
      %1075 = vmatprep.subr.bf16.mxu0 0
      %1076 = vmatpush1.bf16.msra.mxu0 0
      %1077 = vmatprep.subr.bf16.mxu0 0
      %1078 = vmatpush1.bf16.msra.mxu0 0
      %1079 = vmatprep.mubr.bf16.mxu0 0
      %1080 = vmatmul.mubr.bf16.gmra.mrb[0].mxu0 %v997
      %v1081 = vpop.f32.mrb[0].mxu0
      %v1082 = vadd.f32 %v790, %v1081
      %v1083 = vpop.f32.mrb[0].mxu0
      %v1084 = vpop.f32.mrb[0].mxu0
      %v1085 = vadd.f32 %v793, %v1084
      %v1086 = vpop.f32.mrb[0].mxu0
      %1087 = vmatprep.mubr.bf16.mxu0 0
      %1088 = vmatmul.mubr.bf16.gmra.mrb[0].mxu0 %v1000
      %v1089 = vpop.f32.mrb[0].mxu0
      %v1090 = vadd.f32 %v798, %v1089
      %v1091 = vpop.f32.mrb[0].mxu0
      %v1092 = vpop.f32.mrb[0].mxu0
      %v1093 = vadd.f32 %v801, %v1092
      %v1094 = vpop.f32.mrb[0].mxu0
      %1095 = vmatprep.mubr.bf16.mxu0 0
      %1096 = vmatmul.mubr.bf16.gmra.mrb[0].mxu0 %v1003
      %v1097 = vpop.f32.mrb[0].mxu0
      %v1098 = vadd.f32 %v806, %v1097
      %v1099 = vpop.f32.mrb[0].mxu0
      %v1100 = vpop.f32.mrb[0].mxu0
      %v1101 = vadd.f32 %v809, %v1100
      %v1102 = vpop.f32.mrb[0].mxu0
      %1103 = vmatprep.mubr.bf16.mxu0 0
      %1104 = vmatmul.mubr.bf16.gmra.mrb[0].mxu0 %v1006
      %v1105 = vpop.f32.mrb[0].mxu0
      %v1106 = vadd.f32 %v814, %v1105
      %v1107 = vpop.f32.mrb[0].mxu0
      %v1108 = vpop.f32.mrb[0].mxu0
      %v1109 = vadd.f32 %v817, %v1108
      %v1110 = vpop.f32.mrb[0].mxu0
      %1111 = vmatprep.mubr.bf16.mxu0 0
      %1112 = vmatmul.mubr.bf16.gmra.mrb[0].mxu0 %v1009
      %v1113 = vpop.f32.mrb[0].mxu0
      %v1114 = vadd.f32 %v822, %v1113
      %v1115 = vpop.f32.mrb[0].mxu0
      %v1116 = vpop.f32.mrb[0].mxu0
      %v1117 = vadd.f32 %v825, %v1116
      %v1118 = vpop.f32.mrb[0].mxu0
      %1119 = vmatprep.mubr.bf16.mxu0 0
      %1120 = vmatmul.mubr.bf16.gmra.mrb[0].mxu0 %v1012
      %v1121 = vpop.f32.mrb[0].mxu0
      %v1122 = vadd.f32 %v830, %v1121
      %v1123 = vpop.f32.mrb[0].mxu0
      %v1124 = vpop.f32.mrb[0].mxu0
      %v1125 = vadd.f32 %v833, %v1124
      %v1126 = vpop.f32.mrb[0].mxu0
      %1127 = vmatprep.mubr.bf16.mxu0 0
      %1128 = vmatmul.mubr.bf16.gmra.mrb[0].mxu0 %v1015
      %v1129 = vpop.f32.mrb[0].mxu0
      %v1130 = vadd.f32 %v838, %v1129
      %v1131 = vpop.f32.mrb[0].mxu0
      %v1132 = vpop.f32.mrb[0].mxu0
      %v1133 = vadd.f32 %v841, %v1132
      %v1134 = vpop.f32.mrb[0].mxu0
      %1135 = vmatprep.mubr.bf16.mxu0 0
      %1136 = vmatmul.mubr.bf16.gmra.mrb[0].mxu0 %v1018
      %v1137 = vpop.f32.mrb[0].mxu0
      %v1138 = vadd.f32 %v846, %v1137
      %v1139 = vpop.f32.mrb[0].mxu0
      %v1140 = vpop.f32.mrb[0].mxu0
      %v1141 = vadd.f32 %v849, %v1140
      %v1142 = vpop.f32.mrb[0].mxu0
      %1143 = vmatprep.mubr.bf16.mxu0 0
      %1144 = vmatmul.mubr.bf16.gmra.mrb[0].mxu0 %v1021
      %v1145 = vpop.f32.mrb[0].mxu0
      %v1146 = vadd.f32 %v854, %v1145
      %v1147 = vpop.f32.mrb[0].mxu0
      %v1148 = vpop.f32.mrb[0].mxu0
      %v1149 = vadd.f32 %v857, %v1148
      %v1150 = vpop.f32.mrb[0].mxu0
      %1151 = vmatprep.mubr.bf16.mxu0 0
      %1152 = vmatmul.mubr.bf16.gmra.mrb[0].mxu0 %v1024
      %v1153 = vpop.f32.mrb[0].mxu0
      %v1154 = vadd.f32 %v862, %v1153
      %v1155 = vpop.f32.mrb[0].mxu0
      %v1156 = vpop.f32.mrb[0].mxu0
      %v1157 = vadd.f32 %v865, %v1156
      %v1158 = vpop.f32.mrb[0].mxu0
      %1159 = vmatprep.mubr.bf16.mxu0 0
      %1160 = vmatmul.mubr.bf16.gmra.mrb[0].mxu0 %v1027
      %v1161 = vpop.f32.mrb[0].mxu0
      %v1162 = vadd.f32 %v870, %v1161
      %v1163 = vpop.f32.mrb[0].mxu0
      %v1164 = vpop.f32.mrb[0].mxu0
      %v1165 = vadd.f32 %v873, %v1164
      %v1166 = vpop.f32.mrb[0].mxu0
      %1167 = vmatprep.mubr.bf16.mxu0 0
      %1168 = vmatmul.mubr.bf16.gmra.mrb[0].mxu0 %v1030
      %v1169 = vpop.f32.mrb[0].mxu0
      %v1170 = vadd.f32 %v878, %v1169
      %v1171 = vpop.f32.mrb[0].mxu0
      %v1172 = vpop.f32.mrb[0].mxu0
      %v1173 = vadd.f32 %v881, %v1172
      %v1174 = vpop.f32.mrb[0].mxu0
      %1175 = vmatprep.mubr.bf16.mxu0 0
      %1176 = vmatmul.mubr.bf16.gmra.mrb[0].mxu0 %v1033
      %v1177 = vpop.f32.mrb[0].mxu0
      %v1178 = vadd.f32 %v886, %v1177
      %v1179 = vpop.f32.mrb[0].mxu0
      %v1180 = vpop.f32.mrb[0].mxu0
      %v1181 = vadd.f32 %v889, %v1180
      %v1182 = vpop.f32.mrb[0].mxu0
      %1183 = vmatprep.mubr.bf16.mxu0 0
      %1184 = vmatmul.mubr.bf16.gmra.mrb[0].mxu0 %v1036
      %v1185 = vpop.f32.mrb[0].mxu0
      %v1186 = vadd.f32 %v894, %v1185
      %v1187 = vpop.f32.mrb[0].mxu0
      %v1188 = vpop.f32.mrb[0].mxu0
      %v1189 = vadd.f32 %v897, %v1188
      %v1190 = vpop.f32.mrb[0].mxu0
      %1191 = vmatprep.mubr.bf16.mxu0 0
      %1192 = vmatmul.mubr.bf16.gmra.mrb[0].mxu0 %v1039
      %v1193 = vpop.f32.mrb[0].mxu0
      %v1194 = vadd.f32 %v902, %v1193
      %v1195 = vpop.f32.mrb[0].mxu0
      %v1196 = vpop.f32.mrb[0].mxu0
      %v1197 = vadd.f32 %v905, %v1196
      %v1198 = vpop.f32.mrb[0].mxu0
      %1199 = vmatprep.mubr.bf16.mxu0 0
      %1200 = vmatmul.mubr.bf16.gmra.mrb[0].mxu0 %v1042
      %v1201 = vpop.f32.mrb[0].mxu0
      %v1202 = vadd.f32 %v910, %v1201
      %v1203 = vpop.f32.mrb[0].mxu0
      %v1204 = vpop.f32.mrb[0].mxu0
      %v1205 = vadd.f32 %v913, %v1204
      %v1206 = vpop.f32.mrb[0].mxu0
      %1207 = vdwg.mxu0
      %vm1224 = vcmask 1042432
      %vm1225 = vcmask 1046532
      %vm1226 = vmor %vm1224, %vm1225
      %v1227 = vrot.slane %v210, 5
      %v1228 = vrot.slane %v1227, 4
      %v1229 = vrot.slane %v211, 5
      %v1230 = vsel %vm1226, %v1228, %v1229
      %v1231 = vrot.slane %v1229, 4
      %v1232 = vrot.slane %v212, 5
      %v1233 = vsel %vm1226, %v1231, %v1232
      %v1234 = vrot.slane %v213, 5
      %v1235 = vrot.slane %v1234, 4
      %v1236 = vrot.slane %v214, 5
      %v1237 = vsel %vm1226, %v1235, %v1236
      %v1238 = vrot.slane %v1236, 4
      %v1239 = vrot.slane %v215, 5
      %v1240 = vsel %vm1226, %v1238, %v1239
      %v1241 = vrot.slane %v216, 5
      %v1242 = vrot.slane %v1241, 4
      %v1243 = vrot.slane %v217, 5
      %v1244 = vsel %vm1226, %v1242, %v1243
      %v1245 = vrot.slane %v1243, 4
      %v1246 = vrot.slane %v218, 5
      %v1247 = vsel %vm1226, %v1245, %v1246
      %v1248 = vrot.slane %v219, 5
      %v1249 = vrot.slane %v1248, 4
      %v1250 = vrot.slane %v220, 5
      %v1251 = vsel %vm1226, %v1249, %v1250
      %v1252 = vrot.slane %v1250, 4
      %v1253 = vrot.slane %v221, 5
      %v1254 = vsel %vm1226, %v1252, %v1253
      %v1255 = vrot.slane %v222, 5
      %v1256 = vrot.slane %v1255, 4
      %v1257 = vrot.slane %v223, 5
      %v1258 = vsel %vm1226, %v1256, %v1257
      %v1259 = vrot.slane %v1257, 4
      %v1260 = vrot.slane %v224, 5
      %v1261 = vsel %vm1226, %v1259, %v1260
      %v1262 = vrot.slane %v225, 5
      %v1263 = vrot.slane %v1262, 4
      %v1264 = vrot.slane %v226, 5
      %v1265 = vsel %vm1226, %v1263, %v1264
      %v1266 = vrot.slane %v1264, 4
      %v1267 = vrot.slane %v227, 5
      %v1268 = vsel %vm1226, %v1266, %v1267
      %v1269 = vrot.slane %v228, 5
      %v1270 = vrot.slane %v1269, 4
      %v1271 = vrot.slane %v229, 5
      %v1272 = vsel %vm1226, %v1270, %v1271
      %v1273 = vrot.slane %v1271, 4
      %v1274 = vrot.slane %v230, 5
      %v1275 = vsel %vm1226, %v1273, %v1274
      %v1276 = vrot.slane %v231, 5
      %v1277 = vrot.slane %v1276, 4
      %v1278 = vrot.slane %v232, 5
      %v1279 = vsel %vm1226, %v1277, %v1278
      %v1280 = vrot.slane %v1278, 4
      %v1281 = vrot.slane %v233, 5
      %v1282 = vsel %vm1226, %v1280, %v1281
      %v1283 = vrot.slane %v234, 5
      %v1284 = vrot.slane %v1283, 4
      %v1285 = vrot.slane %v235, 5
      %v1286 = vsel %vm1226, %v1284, %v1285
      %v1287 = vrot.slane %v1285, 4
      %v1288 = vrot.slane %v236, 5
      %v1289 = vsel %vm1226, %v1287, %v1288
      %v1290 = vrot.slane %v237, 5
      %v1291 = vrot.slane %v1290, 4
      %v1292 = vrot.slane %v238, 5
      %v1293 = vsel %vm1226, %v1291, %v1292
      %v1294 = vrot.slane %v1292, 4
      %v1295 = vrot.slane %v239, 5
      %v1296 = vsel %vm1226, %v1294, %v1295
      %v1297 = vrot.slane %v240, 5
      %v1298 = vrot.slane %v1297, 4
      %v1299 = vrot.slane %v241, 5
      %v1300 = vsel %vm1226, %v1298, %v1299
      %v1301 = vrot.slane %v1299, 4
      %v1302 = vrot.slane %v242, 5
      %v1303 = vsel %vm1226, %v1301, %v1302
      %v1304 = vrot.slane %v243, 5
      %v1305 = vrot.slane %v1304, 4
      %v1306 = vrot.slane %v244, 5
      %v1307 = vsel %vm1226, %v1305, %v1306
      %v1308 = vrot.slane %v1306, 4
      %v1309 = vrot.slane %v245, 5
      %v1310 = vsel %vm1226, %v1308, %v1309
      %v1311 = vrot.slane %v246, 5
      %v1312 = vrot.slane %v1311, 4
      %v1313 = vrot.slane %v247, 5
      %v1314 = vsel %vm1226, %v1312, %v1313
      %v1315 = vrot.slane %v1313, 4
      %v1316 = vrot.slane %v248, 5
      %v1317 = vsel %vm1226, %v1315, %v1316
      %v1318 = vrot.slane %v249, 5
      %v1319 = vrot.slane %v1318, 4
      %v1320 = vrot.slane %v250, 5
      %v1321 = vsel %vm1226, %v1319, %v1320
      %v1322 = vrot.slane %v1320, 4
      %v1323 = vrot.slane %v251, 5
      %v1324 = vsel %vm1226, %v1322, %v1323
      %v1325 = vrot.slane %v252, 5
      %v1326 = vrot.slane %v1325, 4
      %v1327 = vrot.slane %v253, 5
      %v1328 = vsel %vm1226, %v1326, %v1327
      %v1329 = vrot.slane %v1327, 4
      %v1330 = vrot.slane %v254, 5
      %v1331 = vsel %vm1226, %v1329, %v1330
      %v1332 = vrot.slane %v255, 5
      %v1333 = vrot.slane %v1332, 4
      %v1334 = vrot.slane %v256, 5
      %v1335 = vsel %vm1226, %v1333, %v1334
      %v1336 = vrot.slane %v1334, 4
      %v1337 = vrot.slane %v257, 5
      %v1338 = vsel %vm1226, %v1336, %v1337
      %s1339 = scalar_lea.vmem %s1, 4
      %v1340 = vld [vmem:[%s1339] sm:$0x3]
      %v1341 = vunpack.c.l.b16 %v1230
      %v1342 = vunpack.c.l.b16 %v1233
      %v1343 = vunpack.c.l.b16 %v1237
      %v1344 = vunpack.c.l.b16 %v1240
      %v1345 = vunpack.c.l.b16 %v1244
      %v1346 = vunpack.c.l.b16 %v1247
      %v1347 = vunpack.c.l.b16 %v1251
      %v1348 = vunpack.c.l.b16 %v1254
      %v1349 = vunpack.c.l.b16 %v1258
      %v1350 = vunpack.c.l.b16 %v1261
      %v1351 = vunpack.c.l.b16 %v1265
      %v1352 = vunpack.c.l.b16 %v1268
      %v1353 = vunpack.c.l.b16 %v1272
      %v1354 = vunpack.c.l.b16 %v1275
      %v1355 = vunpack.c.l.b16 %v1279
      %v1356 = vunpack.c.l.b16 %v1282
      %v1357 = vunpack.c.l.b16 %v1286
      %v1358 = vunpack.c.l.b16 %v1289
      %v1359 = vunpack.c.l.b16 %v1293
      %v1360 = vunpack.c.l.b16 %v1296
      %v1361 = vunpack.c.l.b16 %v1300
      %v1362 = vunpack.c.l.b16 %v1303
      %v1363 = vunpack.c.l.b16 %v1307
      %v1364 = vunpack.c.l.b16 %v1310
      %v1365 = vunpack.c.l.b16 %v1314
      %v1366 = vunpack.c.l.b16 %v1317
      %v1367 = vunpack.c.l.b16 %v1321
      %v1368 = vunpack.c.l.b16 %v1324
      %v1369 = vunpack.c.l.b16 %v1328
      %v1370 = vunpack.c.l.b16 %v1331
      %v1371 = vunpack.c.l.b16 %v1335
      %v1372 = vunpack.c.l.b16 %v1338
      %v1373 = vpack.c.b16 %v1342, %v1341
      %v1374 = vpack.c.b16 %v1344, %v1343
      %v1375 = vpack.c.b16 %v1346, %v1345
      %v1376 = vpack.c.b16 %v1348, %v1347
      %v1377 = vpack.c.b16 %v1350, %v1349
      %v1378 = vpack.c.b16 %v1352, %v1351
      %v1379 = vpack.c.b16 %v1354, %v1353
      %v1380 = vpack.c.b16 %v1356, %v1355
      %v1381 = vpack.c.b16 %v1358, %v1357
      %v1382 = vpack.c.b16 %v1360, %v1359
      %v1383 = vpack.c.b16 %v1362, %v1361
      %v1384 = vpack.c.b16 %v1364, %v1363
      %v1385 = vpack.c.b16 %v1366, %v1365
      %v1386 = vpack.c.b16 %v1368, %v1367
      %v1387 = vpack.c.b16 %v1370, %v1369
      %v1388 = vpack.c.b16 %v1372, %v1371
      %v1390 = vsel %vm702, %v1373, 0
      %v1393 = vsel %vm702, %v1374, 0
      %v1396 = vsel %vm702, %v1375, 0
      %v1399 = vsel %vm702, %v1376, 0
      %v1402 = vsel %vm702, %v1377, 0
      %v1405 = vsel %vm702, %v1378, 0
      %v1408 = vsel %vm702, %v1379, 0
      %v1411 = vsel %vm702, %v1380, 0
      %v1414 = vsel %vm702, %v1381, 0
      %v1417 = vsel %vm702, %v1382, 0
      %v1420 = vsel %vm702, %v1383, 0
      %v1423 = vsel %vm702, %v1384, 0
      %v1426 = vsel %vm702, %v1385, 0
      %v1429 = vsel %vm702, %v1386, 0
      %v1432 = vsel %vm702, %v1387, 0
      %v1435 = vsel %vm702, %v1388, 0
      %v1438 = vsel %vm751, %v1340, 0
      %1440 = vmatprep.subr.bf16.mxu0 0
      %1441 = vmatpush1.bf16.msra.mxu0 %v1438
      %1442 = vmatprep.subr.bf16.mxu0 0
      %1443 = vmatpush1.bf16.msra.mxu0 0
      %1444 = vmatprep.subr.bf16.mxu0 0
      %1445 = vmatpush1.bf16.msra.mxu0 0
      %1446 = vmatprep.subr.bf16.mxu0 0
      %1447 = vmatpush1.bf16.msra.mxu0 0
      %1448 = vmatprep.subr.bf16.mxu0 0
      %1449 = vmatpush1.bf16.msra.mxu0 0
      %1450 = vmatprep.subr.bf16.mxu0 0
      %1451 = vmatpush1.bf16.msra.mxu0 0
      %1452 = vmatprep.subr.bf16.mxu0 0
      %1453 = vmatpush1.bf16.msra.mxu0 0
      %1454 = vmatprep.subr.bf16.mxu0 0
      %1455 = vmatpush1.bf16.msra.mxu0 0
      %1456 = vmatprep.subr.bf16.mxu0 0
      %1457 = vmatpush1.bf16.msra.mxu0 0
      %1458 = vmatprep.subr.bf16.mxu0 0
      %1459 = vmatpush1.bf16.msra.mxu0 0
      %1460 = vmatprep.subr.bf16.mxu0 0
      %1461 = vmatpush1.bf16.msra.mxu0 0
      %1462 = vmatprep.subr.bf16.mxu0 0
      %1463 = vmatpush1.bf16.msra.mxu0 0
      %1464 = vmatprep.subr.bf16.mxu0 0
      %1465 = vmatpush1.bf16.msra.mxu0 0
      %1466 = vmatprep.subr.bf16.mxu0 0
      %1467 = vmatpush1.bf16.msra.mxu0 0
      %1468 = vmatprep.subr.bf16.mxu0 0
      %1469 = vmatpush1.bf16.msra.mxu0 0
      %1470 = vmatprep.subr.bf16.mxu0 0
      %1471 = vmatpush1.bf16.msra.mxu0 0
      %1472 = vmatprep.mubr.bf16.mxu0 0
      %1473 = vmatmul.mubr.bf16.gmra.mrb[0].mxu0 %v1390
      %v1474 = vpop.f32.mrb[0].mxu0
      %v1475 = vadd.f32 0.0, %v1474
      %v1476 = vpop.f32.mrb[0].mxu0
      %v1477 = vpop.f32.mrb[0].mxu0
      %v1478 = vadd.f32 0.0, %v1477
      %v1479 = vpop.f32.mrb[0].mxu0
      %1480 = vmatprep.mubr.bf16.mxu0 0
      %1481 = vmatmul.mubr.bf16.gmra.mrb[0].mxu0 %v1393
      %v1482 = vpop.f32.mrb[0].mxu0
      %v1483 = vadd.f32 0.0, %v1482
      %v1484 = vpop.f32.mrb[0].mxu0
      %v1485 = vpop.f32.mrb[0].mxu0
      %v1486 = vadd.f32 0.0, %v1485
      %v1487 = vpop.f32.mrb[0].mxu0
      %1488 = vmatprep.mubr.bf16.mxu0 0
      %1489 = vmatmul.mubr.bf16.gmra.mrb[0].mxu0 %v1396
      %v1490 = vpop.f32.mrb[0].mxu0
      %v1491 = vadd.f32 0.0, %v1490
      %v1492 = vpop.f32.mrb[0].mxu0
      %v1493 = vpop.f32.mrb[0].mxu0
      %v1494 = vadd.f32 0.0, %v1493
      %v1495 = vpop.f32.mrb[0].mxu0
      %1496 = vmatprep.mubr.bf16.mxu0 0
      %1497 = vmatmul.mubr.bf16.gmra.mrb[0].mxu0 %v1399
      %v1498 = vpop.f32.mrb[0].mxu0
      %v1499 = vadd.f32 0.0, %v1498
      %v1500 = vpop.f32.mrb[0].mxu0
      %v1501 = vpop.f32.mrb[0].mxu0
      %v1502 = vadd.f32 0.0, %v1501
      %v1503 = vpop.f32.mrb[0].mxu0
      %1504 = vmatprep.mubr.bf16.mxu0 0
      %1505 = vmatmul.mubr.bf16.gmra.mrb[0].mxu0 %v1402
      %v1506 = vpop.f32.mrb[0].mxu0
      %v1507 = vadd.f32 0.0, %v1506
      %v1508 = vpop.f32.mrb[0].mxu0
      %v1509 = vpop.f32.mrb[0].mxu0
      %v1510 = vadd.f32 0.0, %v1509
      %v1511 = vpop.f32.mrb[0].mxu0
      %1512 = vmatprep.mubr.bf16.mxu0 0
      %1513 = vmatmul.mubr.bf16.gmra.mrb[0].mxu0 %v1405
      %v1514 = vpop.f32.mrb[0].mxu0
      %v1515 = vadd.f32 0.0, %v1514
      %v1516 = vpop.f32.mrb[0].mxu0
      %v1517 = vpop.f32.mrb[0].mxu0
      %v1518 = vadd.f32 0.0, %v1517
      %v1519 = vpop.f32.mrb[0].mxu0
      %1520 = vmatprep.mubr.bf16.mxu0 0
      %1521 = vmatmul.mubr.bf16.gmra.mrb[0].mxu0 %v1408
      %v1522 = vpop.f32.mrb[0].mxu0
      %v1523 = vadd.f32 0.0, %v1522
      %v1524 = vpop.f32.mrb[0].mxu0
      %v1525 = vpop.f32.mrb[0].mxu0
      %v1526 = vadd.f32 0.0, %v1525
      %v1527 = vpop.f32.mrb[0].mxu0
      %1528 = vmatprep.mubr.bf16.mxu0 0
      %1529 = vmatmul.mubr.bf16.gmra.mrb[0].mxu0 %v1411
      %v1530 = vpop.f32.mrb[0].mxu0
      %v1531 = vadd.f32 0.0, %v1530
      %v1532 = vpop.f32.mrb[0].mxu0
      %v1533 = vpop.f32.mrb[0].mxu0
      %v1534 = vadd.f32 0.0, %v1533
      %v1535 = vpop.f32.mrb[0].mxu0
      %1536 = vmatprep.mubr.bf16.mxu0 0
      %1537 = vmatmul.mubr.bf16.gmra.mrb[0].mxu0 %v1414
      %v1538 = vpop.f32.mrb[0].mxu0
      %v1539 = vadd.f32 0.0, %v1538
      %v1540 = vpop.f32.mrb[0].mxu0
      %v1541 = vpop.f32.mrb[0].mxu0
      %v1542 = vadd.f32 0.0, %v1541
      %v1543 = vpop.f32.mrb[0].mxu0
      %1544 = vmatprep.mubr.bf16.mxu0 0
      %1545 = vmatmul.mubr.bf16.gmra.mrb[0].mxu0 %v1417
      %v1546 = vpop.f32.mrb[0].mxu0
      %v1547 = vadd.f32 0.0, %v1546
      %v1548 = vpop.f32.mrb[0].mxu0
      %v1549 = vpop.f32.mrb[0].mxu0
      %v1550 = vadd.f32 0.0, %v1549
      %v1551 = vpop.f32.mrb[0].mxu0
      %1552 = vmatprep.mubr.bf16.mxu0 0
      %1553 = vmatmul.mubr.bf16.gmra.mrb[0].mxu0 %v1420
      %v1554 = vpop.f32.mrb[0].mxu0
      %v1555 = vadd.f32 0.0, %v1554
      %v1556 = vpop.f32.mrb[0].mxu0
      %v1557 = vpop.f32.mrb[0].mxu0
      %v1558 = vadd.f32 0.0, %v1557
      %v1559 = vpop.f32.mrb[0].mxu0
      %1560 = vmatprep.mubr.bf16.mxu0 0
      %1561 = vmatmul.mubr.bf16.gmra.mrb[0].mxu0 %v1423
      %v1562 = vpop.f32.mrb[0].mxu0
      %v1563 = vadd.f32 0.0, %v1562
      %v1564 = vpop.f32.mrb[0].mxu0
      %v1565 = vpop.f32.mrb[0].mxu0
      %v1566 = vadd.f32 0.0, %v1565
      %v1567 = vpop.f32.mrb[0].mxu0
      %1568 = vmatprep.mubr.bf16.mxu0 0
      %1569 = vmatmul.mubr.bf16.gmra.mrb[0].mxu0 %v1426
      %v1570 = vpop.f32.mrb[0].mxu0
      %v1571 = vadd.f32 0.0, %v1570
      %v1572 = vpop.f32.mrb[0].mxu0
      %v1573 = vpop.f32.mrb[0].mxu0
      %v1574 = vadd.f32 0.0, %v1573
      %v1575 = vpop.f32.mrb[0].mxu0
      %1576 = vmatprep.mubr.bf16.mxu0 0
      %1577 = vmatmul.mubr.bf16.gmra.mrb[0].mxu0 %v1429
      %v1578 = vpop.f32.mrb[0].mxu0
      %v1579 = vadd.f32 0.0, %v1578
      %v1580 = vpop.f32.mrb[0].mxu0
      %v1581 = vpop.f32.mrb[0].mxu0
      %v1582 = vadd.f32 0.0, %v1581
      %v1583 = vpop.f32.mrb[0].mxu0
      %1584 = vmatprep.mubr.bf16.mxu0 0
      %1585 = vmatmul.mubr.bf16.gmra.mrb[0].mxu0 %v1432
      %v1586 = vpop.f32.mrb[0].mxu0
      %v1587 = vadd.f32 0.0, %v1586
      %v1588 = vpop.f32.mrb[0].mxu0
      %v1589 = vpop.f32.mrb[0].mxu0
      %v1590 = vadd.f32 0.0, %v1589
      %v1591 = vpop.f32.mrb[0].mxu0
      %1592 = vmatprep.mubr.bf16.mxu0 0
      %1593 = vmatmul.mubr.bf16.gmra.mrb[0].mxu0 %v1435
      %v1594 = vpop.f32.mrb[0].mxu0
      %v1595 = vadd.f32 0.0, %v1594
      %v1596 = vpop.f32.mrb[0].mxu0
      %v1597 = vpop.f32.mrb[0].mxu0
      %v1598 = vadd.f32 0.0, %v1597
      %v1599 = vpop.f32.mrb[0].mxu0
      %1600 = vdwg.mxu0
      %v1601 = vadd.f32 %v1082, %v1475
      %v1602 = vadd.f32 %v1085, %v1478
      %v1603 = vadd.f32 %v1090, %v1483
      %v1604 = vadd.f32 %v1093, %v1486
      %v1605 = vadd.f32 %v1098, %v1491
      %v1606 = vadd.f32 %v1101, %v1494
      %v1607 = vadd.f32 %v1106, %v1499
      %v1608 = vadd.f32 %v1109, %v1502
      %v1609 = vadd.f32 %v1114, %v1507
      %v1610 = vadd.f32 %v1117, %v1510
      %v1611 = vadd.f32 %v1122, %v1515
      %v1612 = vadd.f32 %v1125, %v1518
      %v1613 = vadd.f32 %v1130, %v1523
      %v1614 = vadd.f32 %v1133, %v1526
      %v1615 = vadd.f32 %v1138, %v1531
      %v1616 = vadd.f32 %v1141, %v1534
      %v1617 = vadd.f32 %v1146, %v1539
      %v1618 = vadd.f32 %v1149, %v1542
      %v1619 = vadd.f32 %v1154, %v1547
      %v1620 = vadd.f32 %v1157, %v1550
      %v1621 = vadd.f32 %v1162, %v1555
      %v1622 = vadd.f32 %v1165, %v1558
      %v1623 = vadd.f32 %v1170, %v1563
      %v1624 = vadd.f32 %v1173, %v1566
      %v1625 = vadd.f32 %v1178, %v1571
      %v1626 = vadd.f32 %v1181, %v1574
      %v1627 = vadd.f32 %v1186, %v1579
      %v1628 = vadd.f32 %v1189, %v1582
      %v1629 = vadd.f32 %v1194, %v1587
      %v1630 = vadd.f32 %v1197, %v1590
      %v1631 = vadd.f32 %v1202, %v1595
      %v1632 = vadd.f32 %v1205, %v1598
      %s1633 = scalar_lea.vmem %s1, 6
      %v1634 = vld [vmem:[%s1633] sm:$0x3]
      %v1637 = vunpack.c.l.b16 %v258
      %v1638 = vunpack.c.l.b16 %v259
      %v1639 = vpack.c.b16 %v1638, %v1637
      %v1641 = vsel %vm702, %v1639, 0
      %v1644 = vsel %vm751, %v1634, 0
      %1646 = vmatprep.subr.bf16.mxu0 0
      %1647 = vmatpush1.bf16.msra.mxu0 %v1644
      %1648 = vmatprep.subr.bf16.mxu0 0
      %1649 = vmatpush1.bf16.msra.mxu0 0
      %1650 = vmatprep.subr.bf16.mxu0 0
      %1651 = vmatpush1.bf16.msra.mxu0 0
      %1652 = vmatprep.subr.bf16.mxu0 0
      %1653 = vmatpush1.bf16.msra.mxu0 0
      %1654 = vmatprep.subr.bf16.mxu0 0
      %1655 = vmatpush1.bf16.msra.mxu0 0
      %1656 = vmatprep.subr.bf16.mxu0 0
      %1657 = vmatpush1.bf16.msra.mxu0 0
      %1658 = vmatprep.subr.bf16.mxu0 0
      %1659 = vmatpush1.bf16.msra.mxu0 0
      %1660 = vmatprep.subr.bf16.mxu0 0
      %1661 = vmatpush1.bf16.msra.mxu0 0
      %1662 = vmatprep.subr.bf16.mxu0 0
      %1663 = vmatpush1.bf16.msra.mxu0 0
      %1664 = vmatprep.subr.bf16.mxu0 0
      %1665 = vmatpush1.bf16.msra.mxu0 0
      %1666 = vmatprep.subr.bf16.mxu0 0
      %1667 = vmatpush1.bf16.msra.mxu0 0
      %1668 = vmatprep.subr.bf16.mxu0 0
      %1669 = vmatpush1.bf16.msra.mxu0 0
      %1670 = vmatprep.subr.bf16.mxu0 0
      %1671 = vmatpush1.bf16.msra.mxu0 0
      %1672 = vmatprep.subr.bf16.mxu0 0
      %1673 = vmatpush1.bf16.msra.mxu0 0
      %1674 = vmatprep.subr.bf16.mxu0 0
      %1675 = vmatpush1.bf16.msra.mxu0 0
      %1676 = vmatprep.subr.bf16.mxu0 0
      %1677 = vmatpush1.bf16.msra.mxu0 0
      %1678 = vmatprep.mubr.bf16.mxu0 0
      %1679 = vmatmul.mubr.bf16.gmra.mrb[0].mxu0 %v1000
      %v1680 = vpop.f32.mrb[0].mxu0
      %v1681 = vadd.f32 0.0, %v1680
      %v1682 = vpop.f32.mrb[0].mxu0
      %v1683 = vpop.f32.mrb[0].mxu0
      %v1684 = vadd.f32 0.0, %v1683
      %v1685 = vpop.f32.mrb[0].mxu0
      %1686 = vmatprep.mubr.bf16.mxu0 0
      %1687 = vmatmul.mubr.bf16.gmra.mrb[0].mxu0 %v1003
      %v1688 = vpop.f32.mrb[0].mxu0
      %v1689 = vadd.f32 0.0, %v1688
      %v1690 = vpop.f32.mrb[0].mxu0
      %v1691 = vpop.f32.mrb[0].mxu0
      %v1692 = vadd.f32 0.0, %v1691
      %v1693 = vpop.f32.mrb[0].mxu0
      %1694 = vmatprep.mubr.bf16.mxu0 0
      %1695 = vmatmul.mubr.bf16.gmra.mrb[0].mxu0 %v1006
      %v1696 = vpop.f32.mrb[0].mxu0
      %v1697 = vadd.f32 0.0, %v1696
      %v1698 = vpop.f32.mrb[0].mxu0
      %v1699 = vpop.f32.mrb[0].mxu0
      %v1700 = vadd.f32 0.0, %v1699
      %v1701 = vpop.f32.mrb[0].mxu0
      %1702 = vmatprep.mubr.bf16.mxu0 0
      %1703 = vmatmul.mubr.bf16.gmra.mrb[0].mxu0 %v1009
      %v1704 = vpop.f32.mrb[0].mxu0
      %v1705 = vadd.f32 0.0, %v1704
      %v1706 = vpop.f32.mrb[0].mxu0
      %v1707 = vpop.f32.mrb[0].mxu0
      %v1708 = vadd.f32 0.0, %v1707
      %v1709 = vpop.f32.mrb[0].mxu0
      %1710 = vmatprep.mubr.bf16.mxu0 0
      %1711 = vmatmul.mubr.bf16.gmra.mrb[0].mxu0 %v1012
      %v1712 = vpop.f32.mrb[0].mxu0
      %v1713 = vadd.f32 0.0, %v1712
      %v1714 = vpop.f32.mrb[0].mxu0
      %v1715 = vpop.f32.mrb[0].mxu0
      %v1716 = vadd.f32 0.0, %v1715
      %v1717 = vpop.f32.mrb[0].mxu0
      %1718 = vmatprep.mubr.bf16.mxu0 0
      %1719 = vmatmul.mubr.bf16.gmra.mrb[0].mxu0 %v1015
      %v1720 = vpop.f32.mrb[0].mxu0
      %v1721 = vadd.f32 0.0, %v1720
      %v1722 = vpop.f32.mrb[0].mxu0
      %v1723 = vpop.f32.mrb[0].mxu0
      %v1724 = vadd.f32 0.0, %v1723
      %v1725 = vpop.f32.mrb[0].mxu0
      %1726 = vmatprep.mubr.bf16.mxu0 0
      %1727 = vmatmul.mubr.bf16.gmra.mrb[0].mxu0 %v1018
      %v1728 = vpop.f32.mrb[0].mxu0
      %v1729 = vadd.f32 0.0, %v1728
      %v1730 = vpop.f32.mrb[0].mxu0
      %v1731 = vpop.f32.mrb[0].mxu0
      %v1732 = vadd.f32 0.0, %v1731
      %v1733 = vpop.f32.mrb[0].mxu0
      %1734 = vmatprep.mubr.bf16.mxu0 0
      %1735 = vmatmul.mubr.bf16.gmra.mrb[0].mxu0 %v1021
      %v1736 = vpop.f32.mrb[0].mxu0
      %v1737 = vadd.f32 0.0, %v1736
      %v1738 = vpop.f32.mrb[0].mxu0
      %v1739 = vpop.f32.mrb[0].mxu0
      %v1740 = vadd.f32 0.0, %v1739
      %v1741 = vpop.f32.mrb[0].mxu0
      %1742 = vmatprep.mubr.bf16.mxu0 0
      %1743 = vmatmul.mubr.bf16.gmra.mrb[0].mxu0 %v1024
      %v1744 = vpop.f32.mrb[0].mxu0
      %v1745 = vadd.f32 0.0, %v1744
      %v1746 = vpop.f32.mrb[0].mxu0
      %v1747 = vpop.f32.mrb[0].mxu0
      %v1748 = vadd.f32 0.0, %v1747
      %v1749 = vpop.f32.mrb[0].mxu0
      %1750 = vmatprep.mubr.bf16.mxu0 0
      %1751 = vmatmul.mubr.bf16.gmra.mrb[0].mxu0 %v1027
      %v1752 = vpop.f32.mrb[0].mxu0
      %v1753 = vadd.f32 0.0, %v1752
      %v1754 = vpop.f32.mrb[0].mxu0
      %v1755 = vpop.f32.mrb[0].mxu0
      %v1756 = vadd.f32 0.0, %v1755
      %v1757 = vpop.f32.mrb[0].mxu0
      %1758 = vmatprep.mubr.bf16.mxu0 0
      %1759 = vmatmul.mubr.bf16.gmra.mrb[0].mxu0 %v1030
      %v1760 = vpop.f32.mrb[0].mxu0
      %v1761 = vadd.f32 0.0, %v1760
      %v1762 = vpop.f32.mrb[0].mxu0
      %v1763 = vpop.f32.mrb[0].mxu0
      %v1764 = vadd.f32 0.0, %v1763
      %v1765 = vpop.f32.mrb[0].mxu0
      %1766 = vmatprep.mubr.bf16.mxu0 0
      %1767 = vmatmul.mubr.bf16.gmra.mrb[0].mxu0 %v1033
      %v1768 = vpop.f32.mrb[0].mxu0
      %v1769 = vadd.f32 0.0, %v1768
      %v1770 = vpop.f32.mrb[0].mxu0
      %v1771 = vpop.f32.mrb[0].mxu0
      %v1772 = vadd.f32 0.0, %v1771
      %v1773 = vpop.f32.mrb[0].mxu0
      %1774 = vmatprep.mubr.bf16.mxu0 0
      %1775 = vmatmul.mubr.bf16.gmra.mrb[0].mxu0 %v1036
      %v1776 = vpop.f32.mrb[0].mxu0
      %v1777 = vadd.f32 0.0, %v1776
      %v1778 = vpop.f32.mrb[0].mxu0
      %v1779 = vpop.f32.mrb[0].mxu0
      %v1780 = vadd.f32 0.0, %v1779
      %v1781 = vpop.f32.mrb[0].mxu0
      %1782 = vmatprep.mubr.bf16.mxu0 0
      %1783 = vmatmul.mubr.bf16.gmra.mrb[0].mxu0 %v1039
      %v1784 = vpop.f32.mrb[0].mxu0
      %v1785 = vadd.f32 0.0, %v1784
      %v1786 = vpop.f32.mrb[0].mxu0
      %v1787 = vpop.f32.mrb[0].mxu0
      %v1788 = vadd.f32 0.0, %v1787
      %v1789 = vpop.f32.mrb[0].mxu0
      %1790 = vmatprep.mubr.bf16.mxu0 0
      %1791 = vmatmul.mubr.bf16.gmra.mrb[0].mxu0 %v1042
      %v1792 = vpop.f32.mrb[0].mxu0
      %v1793 = vadd.f32 0.0, %v1792
      %v1794 = vpop.f32.mrb[0].mxu0
      %v1795 = vpop.f32.mrb[0].mxu0
      %v1796 = vadd.f32 0.0, %v1795
      %v1797 = vpop.f32.mrb[0].mxu0
      %1798 = vmatprep.mubr.bf16.mxu0 0
      %1799 = vmatmul.mubr.bf16.gmra.mrb[0].mxu0 %v1641
      %v1800 = vpop.f32.mrb[0].mxu0
      %v1801 = vadd.f32 0.0, %v1800
      %v1802 = vpop.f32.mrb[0].mxu0
      %v1803 = vpop.f32.mrb[0].mxu0
      %v1804 = vadd.f32 0.0, %v1803
      %v1805 = vpop.f32.mrb[0].mxu0
      %1806 = vdwg.mxu0
      %v1807 = vadd.f32 %v1601, %v1681
      %v1808 = vadd.f32 %v1602, %v1684
      %v1809 = vadd.f32 %v1603, %v1689
      %v1810 = vadd.f32 %v1604, %v1692
      %v1811 = vadd.f32 %v1605, %v1697
      %v1812 = vadd.f32 %v1606, %v1700
      %v1813 = vadd.f32 %v1607, %v1705
      %v1814 = vadd.f32 %v1608, %v1708
      %v1815 = vadd.f32 %v1609, %v1713
      %v1816 = vadd.f32 %v1610, %v1716
      %v1817 = vadd.f32 %v1611, %v1721
      %v1818 = vadd.f32 %v1612, %v1724
      %v1819 = vadd.f32 %v1613, %v1729
      %v1820 = vadd.f32 %v1614, %v1732
      %v1821 = vadd.f32 %v1615, %v1737
      %v1822 = vadd.f32 %v1616, %v1740
      %v1823 = vadd.f32 %v1617, %v1745
      %v1824 = vadd.f32 %v1618, %v1748
      %v1825 = vadd.f32 %v1619, %v1753
      %v1826 = vadd.f32 %v1620, %v1756
      %v1827 = vadd.f32 %v1621, %v1761
      %v1828 = vadd.f32 %v1622, %v1764
      %v1829 = vadd.f32 %v1623, %v1769
      %v1830 = vadd.f32 %v1624, %v1772
      %v1831 = vadd.f32 %v1625, %v1777
      %v1832 = vadd.f32 %v1626, %v1780
      %v1833 = vadd.f32 %v1627, %v1785
      %v1834 = vadd.f32 %v1628, %v1788
      %v1835 = vadd.f32 %v1629, %v1793
      %v1836 = vadd.f32 %v1630, %v1796
      %v1837 = vadd.f32 %v1631, %v1801
      %v1838 = vadd.f32 %v1632, %v1804
      %v1840 = vshrl.u32 %v258, 16
      %v1842 = vrot.slane %v1840, 4
      %v1843 = vshll.u32 %v258, 16
      %v1845 = vrot.slane %v1843, 5
      %v1846 = vor.u32 %v1842, %v1845
      %v1847 = vrot.slane %v1846, 4
      %v1849 = vshll.u32 %v259, 16
      %v1851 = vrot.slane %v1849, 5
      %v1852 = vsel %vm267, %v1847, %v1851
      %v1853 = vshrl.u32 %v259, 16
      %v1855 = vrot.slane %v1853, 4
      %v1856 = vor.u32 %v1855, %v1851
      %v1857 = vrot.slane %v1856, 4
      %v1859 = vshll.u32 %v260, 16
      %v1861 = vrot.slane %v1859, 5
      %v1862 = vsel %vm267, %v1857, %v1861
      %s1863 = scalar_lea.vmem %s1, 8
      %v1864 = vld [vmem:[%s1863] sm:$0x3]
      %v1865 = vunpack.c.l.b16 %v1852
      %v1866 = vunpack.c.l.b16 %v1862
      %v1867 = vpack.c.b16 %v1866, %v1865
      %v1869 = vsel %vm702, %v1867, 0
      %v1872 = vsel %vm751, %v1864, 0
      %1874 = vmatprep.subr.bf16.mxu0 0
      %1875 = vmatpush1.bf16.msra.mxu0 %v1872
      %1876 = vmatprep.subr.bf16.mxu0 0
      %1877 = vmatpush1.bf16.msra.mxu0 0
      %1878 = vmatprep.subr.bf16.mxu0 0
      %1879 = vmatpush1.bf16.msra.mxu0 0
      %1880 = vmatprep.subr.bf16.mxu0 0
      %1881 = vmatpush1.bf16.msra.mxu0 0
      %1882 = vmatprep.subr.bf16.mxu0 0
      %1883 = vmatpush1.bf16.msra.mxu0 0
      %1884 = vmatprep.subr.bf16.mxu0 0
      %1885 = vmatpush1.bf16.msra.mxu0 0
      %1886 = vmatprep.subr.bf16.mxu0 0
      %1887 = vmatpush1.bf16.msra.mxu0 0
      %1888 = vmatprep.subr.bf16.mxu0 0
      %1889 = vmatpush1.bf16.msra.mxu0 0
      %1890 = vmatprep.subr.bf16.mxu0 0
      %1891 = vmatpush1.bf16.msra.mxu0 0
      %1892 = vmatprep.subr.bf16.mxu0 0
      %1893 = vmatpush1.bf16.msra.mxu0 0
      %1894 = vmatprep.subr.bf16.mxu0 0
      %1895 = vmatpush1.bf16.msra.mxu0 0
      %1896 = vmatprep.subr.bf16.mxu0 0
      %1897 = vmatpush1.bf16.msra.mxu0 0
      %1898 = vmatprep.subr.bf16.mxu0 0
      %1899 = vmatpush1.bf16.msra.mxu0 0
      %1900 = vmatprep.subr.bf16.mxu0 0
      %1901 = vmatpush1.bf16.msra.mxu0 0
      %1902 = vmatprep.subr.bf16.mxu0 0
      %1903 = vmatpush1.bf16.msra.mxu0 0
      %1904 = vmatprep.subr.bf16.mxu0 0
      %1905 = vmatpush1.bf16.msra.mxu0 0
      %1906 = vmatprep.mubr.bf16.mxu0 0
      %1907 = vmatmul.mubr.bf16.gmra.mrb[0].mxu0 %v707
      %v1908 = vpop.f32.mrb[0].mxu0
      %v1909 = vadd.f32 0.0, %v1908
      %v1910 = vpop.f32.mrb[0].mxu0
      %v1911 = vpop.f32.mrb[0].mxu0
      %v1912 = vadd.f32 0.0, %v1911
      %v1913 = vpop.f32.mrb[0].mxu0
      %1914 = vmatprep.mubr.bf16.mxu0 0
      %1915 = vmatmul.mubr.bf16.gmra.mrb[0].mxu0 %v710
      %v1916 = vpop.f32.mrb[0].mxu0
      %v1917 = vadd.f32 0.0, %v1916
      %v1918 = vpop.f32.mrb[0].mxu0
      %v1919 = vpop.f32.mrb[0].mxu0
      %v1920 = vadd.f32 0.0, %v1919
      %v1921 = vpop.f32.mrb[0].mxu0
      %1922 = vmatprep.mubr.bf16.mxu0 0
      %1923 = vmatmul.mubr.bf16.gmra.mrb[0].mxu0 %v713
      %v1924 = vpop.f32.mrb[0].mxu0
      %v1925 = vadd.f32 0.0, %v1924
      %v1926 = vpop.f32.mrb[0].mxu0
      %v1927 = vpop.f32.mrb[0].mxu0
      %v1928 = vadd.f32 0.0, %v1927
      %v1929 = vpop.f32.mrb[0].mxu0
      %1930 = vmatprep.mubr.bf16.mxu0 0
      %1931 = vmatmul.mubr.bf16.gmra.mrb[0].mxu0 %v716
      %v1932 = vpop.f32.mrb[0].mxu0
      %v1933 = vadd.f32 0.0, %v1932
      %v1934 = vpop.f32.mrb[0].mxu0
      %v1935 = vpop.f32.mrb[0].mxu0
      %v1936 = vadd.f32 0.0, %v1935
      %v1937 = vpop.f32.mrb[0].mxu0
      %1938 = vmatprep.mubr.bf16.mxu0 0
      %1939 = vmatmul.mubr.bf16.gmra.mrb[0].mxu0 %v719
      %v1940 = vpop.f32.mrb[0].mxu0
      %v1941 = vadd.f32 0.0, %v1940
      %v1942 = vpop.f32.mrb[0].mxu0
      %v1943 = vpop.f32.mrb[0].mxu0
      %v1944 = vadd.f32 0.0, %v1943
      %v1945 = vpop.f32.mrb[0].mxu0
      %1946 = vmatprep.mubr.bf16.mxu0 0
      %1947 = vmatmul.mubr.bf16.gmra.mrb[0].mxu0 %v722
      %v1948 = vpop.f32.mrb[0].mxu0
      %v1949 = vadd.f32 0.0, %v1948
      %v1950 = vpop.f32.mrb[0].mxu0
      %v1951 = vpop.f32.mrb[0].mxu0
      %v1952 = vadd.f32 0.0, %v1951
      %v1953 = vpop.f32.mrb[0].mxu0
      %1954 = vmatprep.mubr.bf16.mxu0 0
      %1955 = vmatmul.mubr.bf16.gmra.mrb[0].mxu0 %v725
      %v1956 = vpop.f32.mrb[0].mxu0
      %v1957 = vadd.f32 0.0, %v1956
      %v1958 = vpop.f32.mrb[0].mxu0
      %v1959 = vpop.f32.mrb[0].mxu0
      %v1960 = vadd.f32 0.0, %v1959
      %v1961 = vpop.f32.mrb[0].mxu0
      %1962 = vmatprep.mubr.bf16.mxu0 0
      %1963 = vmatmul.mubr.bf16.gmra.mrb[0].mxu0 %v728
      %v1964 = vpop.f32.mrb[0].mxu0
      %v1965 = vadd.f32 0.0, %v1964
      %v1966 = vpop.f32.mrb[0].mxu0
      %v1967 = vpop.f32.mrb[0].mxu0
      %v1968 = vadd.f32 0.0, %v1967
      %v1969 = vpop.f32.mrb[0].mxu0
      %1970 = vmatprep.mubr.bf16.mxu0 0
      %1971 = vmatmul.mubr.bf16.gmra.mrb[0].mxu0 %v731
      %v1972 = vpop.f32.mrb[0].mxu0
      %v1973 = vadd.f32 0.0, %v1972
      %v1974 = vpop.f32.mrb[0].mxu0
      %v1975 = vpop.f32.mrb[0].mxu0
      %v1976 = vadd.f32 0.0, %v1975
      %v1977 = vpop.f32.mrb[0].mxu0
      %1978 = vmatprep.mubr.bf16.mxu0 0
      %1979 = vmatmul.mubr.bf16.gmra.mrb[0].mxu0 %v734
      %v1980 = vpop.f32.mrb[0].mxu0
      %v1981 = vadd.f32 0.0, %v1980
      %v1982 = vpop.f32.mrb[0].mxu0
      %v1983 = vpop.f32.mrb[0].mxu0
      %v1984 = vadd.f32 0.0, %v1983
      %v1985 = vpop.f32.mrb[0].mxu0
      %1986 = vmatprep.mubr.bf16.mxu0 0
      %1987 = vmatmul.mubr.bf16.gmra.mrb[0].mxu0 %v737
      %v1988 = vpop.f32.mrb[0].mxu0
      %v1989 = vadd.f32 0.0, %v1988
      %v1990 = vpop.f32.mrb[0].mxu0
      %v1991 = vpop.f32.mrb[0].mxu0
      %v1992 = vadd.f32 0.0, %v1991
      %v1993 = vpop.f32.mrb[0].mxu0
      %1994 = vmatprep.mubr.bf16.mxu0 0
      %1995 = vmatmul.mubr.bf16.gmra.mrb[0].mxu0 %v740
      %v1996 = vpop.f32.mrb[0].mxu0
      %v1997 = vadd.f32 0.0, %v1996
      %v1998 = vpop.f32.mrb[0].mxu0
      %v1999 = vpop.f32.mrb[0].mxu0
      %v2000 = vadd.f32 0.0, %v1999
      %v2001 = vpop.f32.mrb[0].mxu0
      %2002 = vmatprep.mubr.bf16.mxu0 0
      %2003 = vmatmul.mubr.bf16.gmra.mrb[0].mxu0 %v743
      %v2004 = vpop.f32.mrb[0].mxu0
      %v2005 = vadd.f32 0.0, %v2004
      %v2006 = vpop.f32.mrb[0].mxu0
      %v2007 = vpop.f32.mrb[0].mxu0
      %v2008 = vadd.f32 0.0, %v2007
      %v2009 = vpop.f32.mrb[0].mxu0
      %2010 = vmatprep.mubr.bf16.mxu0 0
      %2011 = vmatmul.mubr.bf16.gmra.mrb[0].mxu0 %v746
      %v2012 = vpop.f32.mrb[0].mxu0
      %v2013 = vadd.f32 0.0, %v2012
      %v2014 = vpop.f32.mrb[0].mxu0
      %v2015 = vpop.f32.mrb[0].mxu0
      %v2016 = vadd.f32 0.0, %v2015
      %v2017 = vpop.f32.mrb[0].mxu0
      %2018 = vmatprep.mubr.bf16.mxu0 0
      %2019 = vmatmul.mubr.bf16.gmra.mrb[0].mxu0 %v749
      %v2020 = vpop.f32.mrb[0].mxu0
      %v2021 = vadd.f32 0.0, %v2020
      %v2022 = vpop.f32.mrb[0].mxu0
      %v2023 = vpop.f32.mrb[0].mxu0
      %v2024 = vadd.f32 0.0, %v2023
      %v2025 = vpop.f32.mrb[0].mxu0
      %2026 = vmatprep.mubr.bf16.mxu0 0
      %2027 = vmatmul.mubr.bf16.gmra.mrb[0].mxu0 %v1869
      %v2028 = vpop.f32.mrb[0].mxu0
      %v2029 = vadd.f32 0.0, %v2028
      %v2030 = vpop.f32.mrb[0].mxu0
      %v2031 = vpop.f32.mrb[0].mxu0
      %v2032 = vadd.f32 0.0, %v2031
      %v2033 = vpop.f32.mrb[0].mxu0
      %2034 = vdwg.mxu0
      %v2035 = vadd.f32 %v1807, %v1909
      %v2036 = vadd.f32 %v1808, %v1912
      %v2037 = vadd.f32 %v1809, %v1917
      %v2038 = vadd.f32 %v1810, %v1920
      %v2039 = vadd.f32 %v1811, %v1925
      %v2040 = vadd.f32 %v1812, %v1928
      %v2041 = vadd.f32 %v1813, %v1933
      %v2042 = vadd.f32 %v1814, %v1936
      %v2043 = vadd.f32 %v1815, %v1941
      %v2044 = vadd.f32 %v1816, %v1944
      %v2045 = vadd.f32 %v1817, %v1949
      %v2046 = vadd.f32 %v1818, %v1952
      %v2047 = vadd.f32 %v1819, %v1957
      %v2048 = vadd.f32 %v1820, %v1960
      %v2049 = vadd.f32 %v1821, %v1965
      %v2050 = vadd.f32 %v1822, %v1968
      %v2051 = vadd.f32 %v1823, %v1973
      %v2052 = vadd.f32 %v1824, %v1976
      %v2053 = vadd.f32 %v1825, %v1981
      %v2054 = vadd.f32 %v1826, %v1984
      %v2055 = vadd.f32 %v1827, %v1989
      %v2056 = vadd.f32 %v1828, %v1992
      %v2057 = vadd.f32 %v1829, %v1997
      %v2058 = vadd.f32 %v1830, %v2000
      %v2059 = vadd.f32 %v1831, %v2005
      %v2060 = vadd.f32 %v1832, %v2008
      %v2061 = vadd.f32 %v1833, %v2013
      %v2062 = vadd.f32 %v1834, %v2016
      %v2063 = vadd.f32 %v1835, %v2021
      %v2064 = vadd.f32 %v1836, %v2024
      %v2065 = vadd.f32 %v1837, %v2029
      %v2066 = vadd.f32 %v1838, %v2032
      %v2068 = vrot.slane %v258, 5
      %v2069 = vrot.slane %v2068, 4
      %v2070 = vrot.slane %v259, 5
      %v2071 = vsel %vm1226, %v2069, %v2070
      %v2072 = vrot.slane %v2070, 4
      %v2073 = vrot.slane %v260, 5
      %v2074 = vsel %vm1226, %v2072, %v2073
      %s2075 = scalar_lea.vmem %s1, 10
      %v2076 = vld [vmem:[%s2075] sm:$0x3]
      %v2077 = vunpack.c.l.b16 %v2071
      %v2078 = vunpack.c.l.b16 %v2074
      %v2079 = vpack.c.b16 %v2078, %v2077
      %v2081 = vsel %vm702, %v2079, 0
      %v2084 = vsel %vm751, %v2076, 0
      %2086 = vmatprep.subr.bf16.mxu0 0
      %2087 = vmatpush1.bf16.msra.mxu0 %v2084
      %2088 = vmatprep.subr.bf16.mxu0 0
      %2089 = vmatpush1.bf16.msra.mxu0 0
      %2090 = vmatprep.subr.bf16.mxu0 0
      %2091 = vmatpush1.bf16.msra.mxu0 0
      %2092 = vmatprep.subr.bf16.mxu0 0
      %2093 = vmatpush1.bf16.msra.mxu0 0
      %2094 = vmatprep.subr.bf16.mxu0 0
      %2095 = vmatpush1.bf16.msra.mxu0 0
      %2096 = vmatprep.subr.bf16.mxu0 0
      %2097 = vmatpush1.bf16.msra.mxu0 0
      %2098 = vmatprep.subr.bf16.mxu0 0
      %2099 = vmatpush1.bf16.msra.mxu0 0
      %2100 = vmatprep.subr.bf16.mxu0 0
      %2101 = vmatpush1.bf16.msra.mxu0 0
      %2102 = vmatprep.subr.bf16.mxu0 0
      %2103 = vmatpush1.bf16.msra.mxu0 0
      %2104 = vmatprep.subr.bf16.mxu0 0
      %2105 = vmatpush1.bf16.msra.mxu0 0
      %2106 = vmatprep.subr.bf16.mxu0 0
      %2107 = vmatpush1.bf16.msra.mxu0 0
      %2108 = vmatprep.subr.bf16.mxu0 0
      %2109 = vmatpush1.bf16.msra.mxu0 0
      %2110 = vmatprep.subr.bf16.mxu0 0
      %2111 = vmatpush1.bf16.msra.mxu0 0
      %2112 = vmatprep.subr.bf16.mxu0 0
      %2113 = vmatpush1.bf16.msra.mxu0 0
      %2114 = vmatprep.subr.bf16.mxu0 0
      %2115 = vmatpush1.bf16.msra.mxu0 0
      %2116 = vmatprep.subr.bf16.mxu0 0
      %2117 = vmatpush1.bf16.msra.mxu0 0
      %2118 = vmatprep.mubr.bf16.mxu0 0
      %2119 = vmatmul.mubr.bf16.gmra.mrb[0].mxu0 %v1393
      %v2120 = vpop.f32.mrb[0].mxu0
      %v2121 = vadd.f32 0.0, %v2120
      %v2122 = vpop.f32.mrb[0].mxu0
      %v2123 = vpop.f32.mrb[0].mxu0
      %v2124 = vadd.f32 0.0, %v2123
      %v2125 = vpop.f32.mrb[0].mxu0
      %2126 = vmatprep.mubr.bf16.mxu0 0
      %2127 = vmatmul.mubr.bf16.gmra.mrb[0].mxu0 %v1396
      %v2128 = vpop.f32.mrb[0].mxu0
      %v2129 = vadd.f32 0.0, %v2128
      %v2130 = vpop.f32.mrb[0].mxu0
      %v2131 = vpop.f32.mrb[0].mxu0
      %v2132 = vadd.f32 0.0, %v2131
      %v2133 = vpop.f32.mrb[0].mxu0
      %2134 = vmatprep.mubr.bf16.mxu0 0
      %2135 = vmatmul.mubr.bf16.gmra.mrb[0].mxu0 %v1399
      %v2136 = vpop.f32.mrb[0].mxu0
      %v2137 = vadd.f32 0.0, %v2136
      %v2138 = vpop.f32.mrb[0].mxu0
      %v2139 = vpop.f32.mrb[0].mxu0
      %v2140 = vadd.f32 0.0, %v2139
      %v2141 = vpop.f32.mrb[0].mxu0
      %2142 = vmatprep.mubr.bf16.mxu0 0
      %2143 = vmatmul.mubr.bf16.gmra.mrb[0].mxu0 %v1402
      %v2144 = vpop.f32.mrb[0].mxu0
      %v2145 = vadd.f32 0.0, %v2144
      %v2146 = vpop.f32.mrb[0].mxu0
      %v2147 = vpop.f32.mrb[0].mxu0
      %v2148 = vadd.f32 0.0, %v2147
      %v2149 = vpop.f32.mrb[0].mxu0
      %2150 = vmatprep.mubr.bf16.mxu0 0
      %2151 = vmatmul.mubr.bf16.gmra.mrb[0].mxu0 %v1405
      %v2152 = vpop.f32.mrb[0].mxu0
      %v2153 = vadd.f32 0.0, %v2152
      %v2154 = vpop.f32.mrb[0].mxu0
      %v2155 = vpop.f32.mrb[0].mxu0
      %v2156 = vadd.f32 0.0, %v2155
      %v2157 = vpop.f32.mrb[0].mxu0
      %2158 = vmatprep.mubr.bf16.mxu0 0
      %2159 = vmatmul.mubr.bf16.gmra.mrb[0].mxu0 %v1408
      %v2160 = vpop.f32.mrb[0].mxu0
      %v2161 = vadd.f32 0.0, %v2160
      %v2162 = vpop.f32.mrb[0].mxu0
      %v2163 = vpop.f32.mrb[0].mxu0
      %v2164 = vadd.f32 0.0, %v2163
      %v2165 = vpop.f32.mrb[0].mxu0
      %2166 = vmatprep.mubr.bf16.mxu0 0
      %2167 = vmatmul.mubr.bf16.gmra.mrb[0].mxu0 %v1411
      %v2168 = vpop.f32.mrb[0].mxu0
      %v2169 = vadd.f32 0.0, %v2168
      %v2170 = vpop.f32.mrb[0].mxu0
      %v2171 = vpop.f32.mrb[0].mxu0
      %v2172 = vadd.f32 0.0, %v2171
      %v2173 = vpop.f32.mrb[0].mxu0
      %2174 = vmatprep.mubr.bf16.mxu0 0
      %2175 = vmatmul.mubr.bf16.gmra.mrb[0].mxu0 %v1414
      %v2176 = vpop.f32.mrb[0].mxu0
      %v2177 = vadd.f32 0.0, %v2176
      %v2178 = vpop.f32.mrb[0].mxu0
      %v2179 = vpop.f32.mrb[0].mxu0
      %v2180 = vadd.f32 0.0, %v2179
      %v2181 = vpop.f32.mrb[0].mxu0
      %2182 = vmatprep.mubr.bf16.mxu0 0
      %2183 = vmatmul.mubr.bf16.gmra.mrb[0].mxu0 %v1417
      %v2184 = vpop.f32.mrb[0].mxu0
      %v2185 = vadd.f32 0.0, %v2184
      %v2186 = vpop.f32.mrb[0].mxu0
      %v2187 = vpop.f32.mrb[0].mxu0
      %v2188 = vadd.f32 0.0, %v2187
      %v2189 = vpop.f32.mrb[0].mxu0
      %2190 = vmatprep.mubr.bf16.mxu0 0
      %2191 = vmatmul.mubr.bf16.gmra.mrb[0].mxu0 %v1420
      %v2192 = vpop.f32.mrb[0].mxu0
      %v2193 = vadd.f32 0.0, %v2192
      %v2194 = vpop.f32.mrb[0].mxu0
      %v2195 = vpop.f32.mrb[0].mxu0
      %v2196 = vadd.f32 0.0, %v2195
      %v2197 = vpop.f32.mrb[0].mxu0
      %2198 = vmatprep.mubr.bf16.mxu0 0
      %2199 = vmatmul.mubr.bf16.gmra.mrb[0].mxu0 %v1423
      %v2200 = vpop.f32.mrb[0].mxu0
      %v2201 = vadd.f32 0.0, %v2200
      %v2202 = vpop.f32.mrb[0].mxu0
      %v2203 = vpop.f32.mrb[0].mxu0
      %v2204 = vadd.f32 0.0, %v2203
      %v2205 = vpop.f32.mrb[0].mxu0
      %2206 = vmatprep.mubr.bf16.mxu0 0
      %2207 = vmatmul.mubr.bf16.gmra.mrb[0].mxu0 %v1426
      %v2208 = vpop.f32.mrb[0].mxu0
      %v2209 = vadd.f32 0.0, %v2208
      %v2210 = vpop.f32.mrb[0].mxu0
      %v2211 = vpop.f32.mrb[0].mxu0
      %v2212 = vadd.f32 0.0, %v2211
      %v2213 = vpop.f32.mrb[0].mxu0
      %2214 = vmatprep.mubr.bf16.mxu0 0
      %2215 = vmatmul.mubr.bf16.gmra.mrb[0].mxu0 %v1429
      %v2216 = vpop.f32.mrb[0].mxu0
      %v2217 = vadd.f32 0.0, %v2216
      %v2218 = vpop.f32.mrb[0].mxu0
      %v2219 = vpop.f32.mrb[0].mxu0
      %v2220 = vadd.f32 0.0, %v2219
      %v2221 = vpop.f32.mrb[0].mxu0
      %2222 = vmatprep.mubr.bf16.mxu0 0
      %2223 = vmatmul.mubr.bf16.gmra.mrb[0].mxu0 %v1432
      %v2224 = vpop.f32.mrb[0].mxu0
      %v2225 = vadd.f32 0.0, %v2224
      %v2226 = vpop.f32.mrb[0].mxu0
      %v2227 = vpop.f32.mrb[0].mxu0
      %v2228 = vadd.f32 0.0, %v2227
      %v2229 = vpop.f32.mrb[0].mxu0
      %2230 = vmatprep.mubr.bf16.mxu0 0
      %2231 = vmatmul.mubr.bf16.gmra.mrb[0].mxu0 %v1435
      %v2232 = vpop.f32.mrb[0].mxu0
      %v2233 = vadd.f32 0.0, %v2232
      %v2234 = vpop.f32.mrb[0].mxu0
      %v2235 = vpop.f32.mrb[0].mxu0
      %v2236 = vadd.f32 0.0, %v2235
      %v2237 = vpop.f32.mrb[0].mxu0
      %2238 = vmatprep.mubr.bf16.mxu0 0
      %2239 = vmatmul.mubr.bf16.gmra.mrb[0].mxu0 %v2081
      %v2240 = vpop.f32.mrb[0].mxu0
      %v2241 = vadd.f32 0.0, %v2240
      %v2242 = vpop.f32.mrb[0].mxu0
      %v2243 = vpop.f32.mrb[0].mxu0
      %v2244 = vadd.f32 0.0, %v2243
      %v2245 = vpop.f32.mrb[0].mxu0
      %2246 = vdwg.mxu0
      %v2247 = vadd.f32 %v2035, %v2121
      %v2248 = vadd.f32 %v2036, %v2124
      %v2249 = vadd.f32 %v2037, %v2129
      %v2250 = vadd.f32 %v2038, %v2132
      %v2251 = vadd.f32 %v2039, %v2137
      %v2252 = vadd.f32 %v2040, %v2140
      %v2253 = vadd.f32 %v2041, %v2145
      %v2254 = vadd.f32 %v2042, %v2148
      %v2255 = vadd.f32 %v2043, %v2153
      %v2256 = vadd.f32 %v2044, %v2156
      %v2257 = vadd.f32 %v2045, %v2161
      %v2258 = vadd.f32 %v2046, %v2164
      %v2259 = vadd.f32 %v2047, %v2169
      %v2260 = vadd.f32 %v2048, %v2172
      %v2261 = vadd.f32 %v2049, %v2177
      %v2262 = vadd.f32 %v2050, %v2180
      %v2263 = vadd.f32 %v2051, %v2185
      %v2264 = vadd.f32 %v2052, %v2188
      %v2265 = vadd.f32 %v2053, %v2193
      %v2266 = vadd.f32 %v2054, %v2196
      %v2267 = vadd.f32 %v2055, %v2201
      %v2268 = vadd.f32 %v2056, %v2204
      %v2269 = vadd.f32 %v2057, %v2209
      %v2270 = vadd.f32 %v2058, %v2212
      %v2271 = vadd.f32 %v2059, %v2217
      %v2272 = vadd.f32 %v2060, %v2220
      %v2273 = vadd.f32 %v2061, %v2225
      %v2274 = vadd.f32 %v2062, %v2228
      %v2275 = vadd.f32 %v2063, %v2233
      %v2276 = vadd.f32 %v2064, %v2236
      %v2277 = vadd.f32 %v2065, %v2241
      %v2278 = vadd.f32 %v2066, %v2244
      %s2279 = scalar_lea.vmem %s1, 12
      %v2280 = vld [vmem:[%s2279] sm:$0x3]
      %v2283 = vunpack.c.l.b16 %v261
      %v2284 = vunpack.c.l.b16 %v262
      %v2285 = vpack.c.b16 %v2284, %v2283
      %v2287 = vsel %vm702, %v2285, 0
      %v2290 = vsel %vm751, %v2280, 0
      %2292 = vmatprep.subr.bf16.mxu0 0
      %2293 = vmatpush1.bf16.msra.mxu0 %v2290
      %2294 = vmatprep.subr.bf16.mxu0 0
      %2295 = vmatpush1.bf16.msra.mxu0 0
      %2296 = vmatprep.subr.bf16.mxu0 0
      %2297 = vmatpush1.bf16.msra.mxu0 0
      %2298 = vmatprep.subr.bf16.mxu0 0
      %2299 = vmatpush1.bf16.msra.mxu0 0
      %2300 = vmatprep.subr.bf16.mxu0 0
      %2301 = vmatpush1.bf16.msra.mxu0 0
      %2302 = vmatprep.subr.bf16.mxu0 0
      %2303 = vmatpush1.bf16.msra.mxu0 0
      %2304 = vmatprep.subr.bf16.mxu0 0
      %2305 = vmatpush1.bf16.msra.mxu0 0
      %2306 = vmatprep.subr.bf16.mxu0 0
      %2307 = vmatpush1.bf16.msra.mxu0 0
      %2308 = vmatprep.subr.bf16.mxu0 0
      %2309 = vmatpush1.bf16.msra.mxu0 0
      %2310 = vmatprep.subr.bf16.mxu0 0
      %2311 = vmatpush1.bf16.msra.mxu0 0
      %2312 = vmatprep.subr.bf16.mxu0 0
      %2313 = vmatpush1.bf16.msra.mxu0 0
      %2314 = vmatprep.subr.bf16.mxu0 0
      %2315 = vmatpush1.bf16.msra.mxu0 0
      %2316 = vmatprep.subr.bf16.mxu0 0
      %2317 = vmatpush1.bf16.msra.mxu0 0
      %2318 = vmatprep.subr.bf16.mxu0 0
      %2319 = vmatpush1.bf16.msra.mxu0 0
      %2320 = vmatprep.subr.bf16.mxu0 0
      %2321 = vmatpush1.bf16.msra.mxu0 0
      %2322 = vmatprep.subr.bf16.mxu0 0
      %2323 = vmatpush1.bf16.msra.mxu0 0
      %2324 = vmatprep.mubr.bf16.mxu0 0
      %2325 = vmatmul.mubr.bf16.gmra.mrb[0].mxu0 %v1003
      %v2326 = vpop.f32.mrb[0].mxu0
      %v2327 = vadd.f32 0.0, %v2326
      %v2328 = vpop.f32.mrb[0].mxu0
      %v2329 = vpop.f32.mrb[0].mxu0
      %v2330 = vadd.f32 0.0, %v2329
      %v2331 = vpop.f32.mrb[0].mxu0
      %2332 = vmatprep.mubr.bf16.mxu0 0
      %2333 = vmatmul.mubr.bf16.gmra.mrb[0].mxu0 %v1006
      %v2334 = vpop.f32.mrb[0].mxu0
      %v2335 = vadd.f32 0.0, %v2334
      %v2336 = vpop.f32.mrb[0].mxu0
      %v2337 = vpop.f32.mrb[0].mxu0
      %v2338 = vadd.f32 0.0, %v2337
      %v2339 = vpop.f32.mrb[0].mxu0
      %2340 = vmatprep.mubr.bf16.mxu0 0
      %2341 = vmatmul.mubr.bf16.gmra.mrb[0].mxu0 %v1009
      %v2342 = vpop.f32.mrb[0].mxu0
      %v2343 = vadd.f32 0.0, %v2342
      %v2344 = vpop.f32.mrb[0].mxu0
      %v2345 = vpop.f32.mrb[0].mxu0
      %v2346 = vadd.f32 0.0, %v2345
      %v2347 = vpop.f32.mrb[0].mxu0
      %2348 = vmatprep.mubr.bf16.mxu0 0
      %2349 = vmatmul.mubr.bf16.gmra.mrb[0].mxu0 %v1012
      %v2350 = vpop.f32.mrb[0].mxu0
      %v2351 = vadd.f32 0.0, %v2350
      %v2352 = vpop.f32.mrb[0].mxu0
      %v2353 = vpop.f32.mrb[0].mxu0
      %v2354 = vadd.f32 0.0, %v2353
      %v2355 = vpop.f32.mrb[0].mxu0
      %2356 = vmatprep.mubr.bf16.mxu0 0
      %2357 = vmatmul.mubr.bf16.gmra.mrb[0].mxu0 %v1015
      %v2358 = vpop.f32.mrb[0].mxu0
      %v2359 = vadd.f32 0.0, %v2358
      %v2360 = vpop.f32.mrb[0].mxu0
      %v2361 = vpop.f32.mrb[0].mxu0
      %v2362 = vadd.f32 0.0, %v2361
      %v2363 = vpop.f32.mrb[0].mxu0
      %2364 = vmatprep.mubr.bf16.mxu0 0
      %2365 = vmatmul.mubr.bf16.gmra.mrb[0].mxu0 %v1018
      %v2366 = vpop.f32.mrb[0].mxu0
      %v2367 = vadd.f32 0.0, %v2366
      %v2368 = vpop.f32.mrb[0].mxu0
      %v2369 = vpop.f32.mrb[0].mxu0
      %v2370 = vadd.f32 0.0, %v2369
      %v2371 = vpop.f32.mrb[0].mxu0
      %2372 = vmatprep.mubr.bf16.mxu0 0
      %2373 = vmatmul.mubr.bf16.gmra.mrb[0].mxu0 %v1021
      %v2374 = vpop.f32.mrb[0].mxu0
      %v2375 = vadd.f32 0.0, %v2374
      %v2376 = vpop.f32.mrb[0].mxu0
      %v2377 = vpop.f32.mrb[0].mxu0
      %v2378 = vadd.f32 0.0, %v2377
      %v2379 = vpop.f32.mrb[0].mxu0
      %2380 = vmatprep.mubr.bf16.mxu0 0
      %2381 = vmatmul.mubr.bf16.gmra.mrb[0].mxu0 %v1024
      %v2382 = vpop.f32.mrb[0].mxu0
      %v2383 = vadd.f32 0.0, %v2382
      %v2384 = vpop.f32.mrb[0].mxu0
      %v2385 = vpop.f32.mrb[0].mxu0
      %v2386 = vadd.f32 0.0, %v2385
      %v2387 = vpop.f32.mrb[0].mxu0
      %2388 = vmatprep.mubr.bf16.mxu0 0
      %2389 = vmatmul.mubr.bf16.gmra.mrb[0].mxu0 %v1027
      %v2390 = vpop.f32.mrb[0].mxu0
      %v2391 = vadd.f32 0.0, %v2390
      %v2392 = vpop.f32.mrb[0].mxu0
      %v2393 = vpop.f32.mrb[0].mxu0
      %v2394 = vadd.f32 0.0, %v2393
      %v2395 = vpop.f32.mrb[0].mxu0
      %2396 = vmatprep.mubr.bf16.mxu0 0
      %2397 = vmatmul.mubr.bf16.gmra.mrb[0].mxu0 %v1030
      %v2398 = vpop.f32.mrb[0].mxu0
      %v2399 = vadd.f32 0.0, %v2398
      %v2400 = vpop.f32.mrb[0].mxu0
      %v2401 = vpop.f32.mrb[0].mxu0
      %v2402 = vadd.f32 0.0, %v2401
      %v2403 = vpop.f32.mrb[0].mxu0
      %2404 = vmatprep.mubr.bf16.mxu0 0
      %2405 = vmatmul.mubr.bf16.gmra.mrb[0].mxu0 %v1033
      %v2406 = vpop.f32.mrb[0].mxu0
      %v2407 = vadd.f32 0.0, %v2406
      %v2408 = vpop.f32.mrb[0].mxu0
      %v2409 = vpop.f32.mrb[0].mxu0
      %v2410 = vadd.f32 0.0, %v2409
      %v2411 = vpop.f32.mrb[0].mxu0
      %2412 = vmatprep.mubr.bf16.mxu0 0
      %2413 = vmatmul.mubr.bf16.gmra.mrb[0].mxu0 %v1036
      %v2414 = vpop.f32.mrb[0].mxu0
      %v2415 = vadd.f32 0.0, %v2414
      %v2416 = vpop.f32.mrb[0].mxu0
      %v2417 = vpop.f32.mrb[0].mxu0
      %v2418 = vadd.f32 0.0, %v2417
      %v2419 = vpop.f32.mrb[0].mxu0
      %2420 = vmatprep.mubr.bf16.mxu0 0
      %2421 = vmatmul.mubr.bf16.gmra.mrb[0].mxu0 %v1039
      %v2422 = vpop.f32.mrb[0].mxu0
      %v2423 = vadd.f32 0.0, %v2422
      %v2424 = vpop.f32.mrb[0].mxu0
      %v2425 = vpop.f32.mrb[0].mxu0
      %v2426 = vadd.f32 0.0, %v2425
      %v2427 = vpop.f32.mrb[0].mxu0
      %2428 = vmatprep.mubr.bf16.mxu0 0
      %2429 = vmatmul.mubr.bf16.gmra.mrb[0].mxu0 %v1042
      %v2430 = vpop.f32.mrb[0].mxu0
      %v2431 = vadd.f32 0.0, %v2430
      %v2432 = vpop.f32.mrb[0].mxu0
      %v2433 = vpop.f32.mrb[0].mxu0
      %v2434 = vadd.f32 0.0, %v2433
      %v2435 = vpop.f32.mrb[0].mxu0
      %2436 = vmatprep.mubr.bf16.mxu0 0
      %2437 = vmatmul.mubr.bf16.gmra.mrb[0].mxu0 %v1641
      %v2438 = vpop.f32.mrb[0].mxu0
      %v2439 = vadd.f32 0.0, %v2438
      %v2440 = vpop.f32.mrb[0].mxu0
      %v2441 = vpop.f32.mrb[0].mxu0
      %v2442 = vadd.f32 0.0, %v2441
      %v2443 = vpop.f32.mrb[0].mxu0
      %2444 = vmatprep.mubr.bf16.mxu0 0
      %2445 = vmatmul.mubr.bf16.gmra.mrb[0].mxu0 %v2287
      %v2446 = vpop.f32.mrb[0].mxu0
      %v2447 = vadd.f32 0.0, %v2446
      %v2448 = vpop.f32.mrb[0].mxu0
      %v2449 = vpop.f32.mrb[0].mxu0
      %v2450 = vadd.f32 0.0, %v2449
      %v2451 = vpop.f32.mrb[0].mxu0
      %2452 = vdwg.mxu0
      %v2453 = vadd.f32 %v2247, %v2327
      %v2454 = vadd.f32 %v2248, %v2330
      %v2455 = vadd.f32 %v2249, %v2335
      %v2456 = vadd.f32 %v2250, %v2338
      %v2457 = vadd.f32 %v2251, %v2343
      %v2458 = vadd.f32 %v2252, %v2346
      %v2459 = vadd.f32 %v2253, %v2351
      %v2460 = vadd.f32 %v2254, %v2354
      %v2461 = vadd.f32 %v2255, %v2359
      %v2462 = vadd.f32 %v2256, %v2362
      %v2463 = vadd.f32 %v2257, %v2367
      %v2464 = vadd.f32 %v2258, %v2370
      %v2465 = vadd.f32 %v2259, %v2375
      %v2466 = vadd.f32 %v2260, %v2378
      %v2467 = vadd.f32 %v2261, %v2383
      %v2468 = vadd.f32 %v2262, %v2386
      %v2469 = vadd.f32 %v2263, %v2391
      %v2470 = vadd.f32 %v2264, %v2394
      %v2471 = vadd.f32 %v2265, %v2399
      %v2472 = vadd.f32 %v2266, %v2402
      %v2473 = vadd.f32 %v2267, %v2407
      %v2474 = vadd.f32 %v2268, %v2410
      %v2475 = vadd.f32 %v2269, %v2415
      %v2476 = vadd.f32 %v2270, %v2418
      %v2477 = vadd.f32 %v2271, %v2423
      %v2478 = vadd.f32 %v2272, %v2426
      %v2479 = vadd.f32 %v2273, %v2431
      %v2480 = vadd.f32 %v2274, %v2434
      %v2481 = vadd.f32 %v2275, %v2439
      %v2482 = vadd.f32 %v2276, %v2442
      %v2483 = vadd.f32 %v2277, %v2447
      %v2484 = vadd.f32 %v2278, %v2450
      %v2486 = vshrl.u32 %v261, 16
      %v2488 = vrot.slane %v2486, 4
      %v2489 = vshll.u32 %v261, 16
      %v2491 = vrot.slane %v2489, 5
      %v2492 = vor.u32 %v2488, %v2491
      %v2493 = vrot.slane %v2492, 4
      %v2495 = vshll.u32 %v262, 16
      %v2497 = vrot.slane %v2495, 5
      %v2498 = vsel %vm267, %v2493, %v2497
      %v2499 = vshrl.u32 %v262, 16
      %v2501 = vrot.slane %v2499, 4
      %v2502 = vor.u32 %v2501, %v2497
      %v2503 = vrot.slane %v2502, 4
      %v2505 = vshll.u32 %v263, 16
      %v2507 = vrot.slane %v2505, 5
      %v2508 = vsel %vm267, %v2503, %v2507
      %s2509 = scalar_lea.vmem %s1, 14
      %v2510 = vld [vmem:[%s2509] sm:$0x3]
      %v2511 = vunpack.c.l.b16 %v2498
      %v2512 = vunpack.c.l.b16 %v2508
      %v2513 = vpack.c.b16 %v2512, %v2511
      %v2515 = vsel %vm702, %v2513, 0
      %v2518 = vsel %vm751, %v2510, 0
      %2520 = vmatprep.subr.bf16.mxu0 0
      %2521 = vmatpush1.bf16.msra.mxu0 %v2518
      %2522 = vmatprep.subr.bf16.mxu0 0
      %2523 = vmatpush1.bf16.msra.mxu0 0
      %2524 = vmatprep.subr.bf16.mxu0 0
      %2525 = vmatpush1.bf16.msra.mxu0 0
      %2526 = vmatprep.subr.bf16.mxu0 0
      %2527 = vmatpush1.bf16.msra.mxu0 0
      %2528 = vmatprep.subr.bf16.mxu0 0
      %2529 = vmatpush1.bf16.msra.mxu0 0
      %2530 = vmatprep.subr.bf16.mxu0 0
      %2531 = vmatpush1.bf16.msra.mxu0 0
      %2532 = vmatprep.subr.bf16.mxu0 0
      %2533 = vmatpush1.bf16.msra.mxu0 0
      %2534 = vmatprep.subr.bf16.mxu0 0
      %2535 = vmatpush1.bf16.msra.mxu0 0
      %2536 = vmatprep.subr.bf16.mxu0 0
      %2537 = vmatpush1.bf16.msra.mxu0 0
      %2538 = vmatprep.subr.bf16.mxu0 0
      %2539 = vmatpush1.bf16.msra.mxu0 0
      %2540 = vmatprep.subr.bf16.mxu0 0
      %2541 = vmatpush1.bf16.msra.mxu0 0
      %2542 = vmatprep.subr.bf16.mxu0 0
      %2543 = vmatpush1.bf16.msra.mxu0 0
      %2544 = vmatprep.subr.bf16.mxu0 0
      %2545 = vmatpush1.bf16.msra.mxu0 0
      %2546 = vmatprep.subr.bf16.mxu0 0
      %2547 = vmatpush1.bf16.msra.mxu0 0
      %2548 = vmatprep.subr.bf16.mxu0 0
      %2549 = vmatpush1.bf16.msra.mxu0 0
      %2550 = vmatprep.subr.bf16.mxu0 0
      %2551 = vmatpush1.bf16.msra.mxu0 0
      %2552 = vmatprep.mubr.bf16.mxu0 0
      %2553 = vmatmul.mubr.bf16.gmra.mrb[0].mxu0 %v710
      %v2554 = vpop.f32.mrb[0].mxu0
      %v2555 = vadd.f32 0.0, %v2554
      %v2556 = vpop.f32.mrb[0].mxu0
      %v2557 = vpop.f32.mrb[0].mxu0
      %v2558 = vadd.f32 0.0, %v2557
      %v2559 = vpop.f32.mrb[0].mxu0
      %2560 = vmatprep.mubr.bf16.mxu0 0
      %2561 = vmatmul.mubr.bf16.gmra.mrb[0].mxu0 %v713
      %v2562 = vpop.f32.mrb[0].mxu0
      %v2563 = vadd.f32 0.0, %v2562
      %v2564 = vpop.f32.mrb[0].mxu0
      %v2565 = vpop.f32.mrb[0].mxu0
      %v2566 = vadd.f32 0.0, %v2565
      %v2567 = vpop.f32.mrb[0].mxu0
      %2568 = vmatprep.mubr.bf16.mxu0 0
      %2569 = vmatmul.mubr.bf16.gmra.mrb[0].mxu0 %v716
      %v2570 = vpop.f32.mrb[0].mxu0
      %v2571 = vadd.f32 0.0, %v2570
      %v2572 = vpop.f32.mrb[0].mxu0
      %v2573 = vpop.f32.mrb[0].mxu0
      %v2574 = vadd.f32 0.0, %v2573
      %v2575 = vpop.f32.mrb[0].mxu0
      %2576 = vmatprep.mubr.bf16.mxu0 0
      %2577 = vmatmul.mubr.bf16.gmra.mrb[0].mxu0 %v719
      %v2578 = vpop.f32.mrb[0].mxu0
      %v2579 = vadd.f32 0.0, %v2578
      %v2580 = vpop.f32.mrb[0].mxu0
      %v2581 = vpop.f32.mrb[0].mxu0
      %v2582 = vadd.f32 0.0, %v2581
      %v2583 = vpop.f32.mrb[0].mxu0
      %2584 = vmatprep.mubr.bf16.mxu0 0
      %2585 = vmatmul.mubr.bf16.gmra.mrb[0].mxu0 %v722
      %v2586 = vpop.f32.mrb[0].mxu0
      %v2587 = vadd.f32 0.0, %v2586
      %v2588 = vpop.f32.mrb[0].mxu0
      %v2589 = vpop.f32.mrb[0].mxu0
      %v2590 = vadd.f32 0.0, %v2589
      %v2591 = vpop.f32.mrb[0].mxu0
      %2592 = vmatprep.mubr.bf16.mxu0 0
      %2593 = vmatmul.mubr.bf16.gmra.mrb[0].mxu0 %v725
      %v2594 = vpop.f32.mrb[0].mxu0
      %v2595 = vadd.f32 0.0, %v2594
      %v2596 = vpop.f32.mrb[0].mxu0
      %v2597 = vpop.f32.mrb[0].mxu0
      %v2598 = vadd.f32 0.0, %v2597
      %v2599 = vpop.f32.mrb[0].mxu0
      %2600 = vmatprep.mubr.bf16.mxu0 0
      %2601 = vmatmul.mubr.bf16.gmra.mrb[0].mxu0 %v728
      %v2602 = vpop.f32.mrb[0].mxu0
      %v2603 = vadd.f32 0.0, %v2602
      %v2604 = vpop.f32.mrb[0].mxu0
      %v2605 = vpop.f32.mrb[0].mxu0
      %v2606 = vadd.f32 0.0, %v2605
      %v2607 = vpop.f32.mrb[0].mxu0
      %2608 = vmatprep.mubr.bf16.mxu0 0
      %2609 = vmatmul.mubr.bf16.gmra.mrb[0].mxu0 %v731
      %v2610 = vpop.f32.mrb[0].mxu0
      %v2611 = vadd.f32 0.0, %v2610
      %v2612 = vpop.f32.mrb[0].mxu0
      %v2613 = vpop.f32.mrb[0].mxu0
      %v2614 = vadd.f32 0.0, %v2613
      %v2615 = vpop.f32.mrb[0].mxu0
      %2616 = vmatprep.mubr.bf16.mxu0 0
      %2617 = vmatmul.mubr.bf16.gmra.mrb[0].mxu0 %v734
      %v2618 = vpop.f32.mrb[0].mxu0
      %v2619 = vadd.f32 0.0, %v2618
      %v2620 = vpop.f32.mrb[0].mxu0
      %v2621 = vpop.f32.mrb[0].mxu0
      %v2622 = vadd.f32 0.0, %v2621
      %v2623 = vpop.f32.mrb[0].mxu0
      %2624 = vmatprep.mubr.bf16.mxu0 0
      %2625 = vmatmul.mubr.bf16.gmra.mrb[0].mxu0 %v737
      %v2626 = vpop.f32.mrb[0].mxu0
      %v2627 = vadd.f32 0.0, %v2626
      %v2628 = vpop.f32.mrb[0].mxu0
      %v2629 = vpop.f32.mrb[0].mxu0
      %v2630 = vadd.f32 0.0, %v2629
      %v2631 = vpop.f32.mrb[0].mxu0
      %2632 = vmatprep.mubr.bf16.mxu0 0
      %2633 = vmatmul.mubr.bf16.gmra.mrb[0].mxu0 %v740
      %v2634 = vpop.f32.mrb[0].mxu0
      %v2635 = vadd.f32 0.0, %v2634
      %v2636 = vpop.f32.mrb[0].mxu0
      %v2637 = vpop.f32.mrb[0].mxu0
      %v2638 = vadd.f32 0.0, %v2637
      %v2639 = vpop.f32.mrb[0].mxu0
      %2640 = vmatprep.mubr.bf16.mxu0 0
      %2641 = vmatmul.mubr.bf16.gmra.mrb[0].mxu0 %v743
      %v2642 = vpop.f32.mrb[0].mxu0
      %v2643 = vadd.f32 0.0, %v2642
      %v2644 = vpop.f32.mrb[0].mxu0
      %v2645 = vpop.f32.mrb[0].mxu0
      %v2646 = vadd.f32 0.0, %v2645
      %v2647 = vpop.f32.mrb[0].mxu0
      %2648 = vmatprep.mubr.bf16.mxu0 0
      %2649 = vmatmul.mubr.bf16.gmra.mrb[0].mxu0 %v746
      %v2650 = vpop.f32.mrb[0].mxu0
      %v2651 = vadd.f32 0.0, %v2650
      %v2652 = vpop.f32.mrb[0].mxu0
      %v2653 = vpop.f32.mrb[0].mxu0
      %v2654 = vadd.f32 0.0, %v2653
      %v2655 = vpop.f32.mrb[0].mxu0
      %2656 = vmatprep.mubr.bf16.mxu0 0
      %2657 = vmatmul.mubr.bf16.gmra.mrb[0].mxu0 %v749
      %v2658 = vpop.f32.mrb[0].mxu0
      %v2659 = vadd.f32 0.0, %v2658
      %v2660 = vpop.f32.mrb[0].mxu0
      %v2661 = vpop.f32.mrb[0].mxu0
      %v2662 = vadd.f32 0.0, %v2661
      %v2663 = vpop.f32.mrb[0].mxu0
      %2664 = vmatprep.mubr.bf16.mxu0 0
      %2665 = vmatmul.mubr.bf16.gmra.mrb[0].mxu0 %v1869
      %v2666 = vpop.f32.mrb[0].mxu0
      %v2667 = vadd.f32 0.0, %v2666
      %v2668 = vpop.f32.mrb[0].mxu0
      %v2669 = vpop.f32.mrb[0].mxu0
      %v2670 = vadd.f32 0.0, %v2669
      %v2671 = vpop.f32.mrb[0].mxu0
      %2672 = vmatprep.mubr.bf16.mxu0 0
      %2673 = vmatmul.mubr.bf16.gmra.mrb[0].mxu0 %v2515
      %v2674 = vpop.f32.mrb[0].mxu0
      %v2675 = vadd.f32 0.0, %v2674
      %v2676 = vpop.f32.mrb[0].mxu0
      %v2677 = vpop.f32.mrb[0].mxu0
      %v2678 = vadd.f32 0.0, %v2677
      %v2679 = vpop.f32.mrb[0].mxu0
      %2680 = vdwg.mxu0
      %v2681 = vadd.f32 %v2453, %v2555
      %v2682 = vadd.f32 %v2454, %v2558
      %v2683 = vadd.f32 %v2455, %v2563
      %v2684 = vadd.f32 %v2456, %v2566
      %v2685 = vadd.f32 %v2457, %v2571
      %v2686 = vadd.f32 %v2458, %v2574
      %v2687 = vadd.f32 %v2459, %v2579
      %v2688 = vadd.f32 %v2460, %v2582
      %v2689 = vadd.f32 %v2461, %v2587
      %v2690 = vadd.f32 %v2462, %v2590
      %v2691 = vadd.f32 %v2463, %v2595
      %v2692 = vadd.f32 %v2464, %v2598
      %v2693 = vadd.f32 %v2465, %v2603
      %v2694 = vadd.f32 %v2466, %v2606
      %v2695 = vadd.f32 %v2467, %v2611
      %v2696 = vadd.f32 %v2468, %v2614
      %v2697 = vadd.f32 %v2469, %v2619
      %v2698 = vadd.f32 %v2470, %v2622
      %v2699 = vadd.f32 %v2471, %v2627
      %v2700 = vadd.f32 %v2472, %v2630
      %v2701 = vadd.f32 %v2473, %v2635
      %v2702 = vadd.f32 %v2474, %v2638
      %v2703 = vadd.f32 %v2475, %v2643
      %v2704 = vadd.f32 %v2476, %v2646
      %v2705 = vadd.f32 %v2477, %v2651
      %v2706 = vadd.f32 %v2478, %v2654
      %v2707 = vadd.f32 %v2479, %v2659
      %v2708 = vadd.f32 %v2480, %v2662
      %v2709 = vadd.f32 %v2481, %v2667
      %v2710 = vadd.f32 %v2482, %v2670
      %v2711 = vadd.f32 %v2483, %v2675
      %v2712 = vadd.f32 %v2484, %v2678
      %v2714 = vrot.slane %v261, 5
      %v2715 = vrot.slane %v2714, 4
      %v2716 = vrot.slane %v262, 5
      %v2717 = vsel %vm1226, %v2715, %v2716
      %v2718 = vrot.slane %v2716, 4
      %v2719 = vrot.slane %v263, 5
      %v2720 = vsel %vm1226, %v2718, %v2719
      %s2721 = scalar_lea.vmem %s1, 16
      %v2722 = vld [vmem:[%s2721] sm:$0x3]
      %v2723 = vunpack.c.l.b16 %v2717
      %v2724 = vunpack.c.l.b16 %v2720
      %v2725 = vpack.c.b16 %v2724, %v2723
      %v2727 = vsel %vm702, %v2725, 0
      %v2730 = vsel %vm751, %v2722, 0
      %2732 = vmatprep.subr.bf16.mxu0 0
      %2733 = vmatpush1.bf16.msra.mxu0 %v2730
      %2734 = vmatprep.subr.bf16.mxu0 0
      %2735 = vmatpush1.bf16.msra.mxu0 0
      %2736 = vmatprep.subr.bf16.mxu0 0
      %2737 = vmatpush1.bf16.msra.mxu0 0
      %2738 = vmatprep.subr.bf16.mxu0 0
      %2739 = vmatpush1.bf16.msra.mxu0 0
      %2740 = vmatprep.subr.bf16.mxu0 0
      %2741 = vmatpush1.bf16.msra.mxu0 0
      %2742 = vmatprep.subr.bf16.mxu0 0
      %2743 = vmatpush1.bf16.msra.mxu0 0
      %2744 = vmatprep.subr.bf16.mxu0 0
      %2745 = vmatpush1.bf16.msra.mxu0 0
      %2746 = vmatprep.subr.bf16.mxu0 0
      %2747 = vmatpush1.bf16.msra.mxu0 0
      %2748 = vmatprep.subr.bf16.mxu0 0
      %2749 = vmatpush1.bf16.msra.mxu0 0
      %2750 = vmatprep.subr.bf16.mxu0 0
      %2751 = vmatpush1.bf16.msra.mxu0 0
      %2752 = vmatprep.subr.bf16.mxu0 0
      %2753 = vmatpush1.bf16.msra.mxu0 0
      %2754 = vmatprep.subr.bf16.mxu0 0
      %2755 = vmatpush1.bf16.msra.mxu0 0
      %2756 = vmatprep.subr.bf16.mxu0 0
      %2757 = vmatpush1.bf16.msra.mxu0 0
      %2758 = vmatprep.subr.bf16.mxu0 0
      %2759 = vmatpush1.bf16.msra.mxu0 0
      %2760 = vmatprep.subr.bf16.mxu0 0
      %2761 = vmatpush1.bf16.msra.mxu0 0
      %2762 = vmatprep.subr.bf16.mxu0 0
      %2763 = vmatpush1.bf16.msra.mxu0 0
      %2764 = vmatprep.mubr.bf16.mxu0 0
      %2765 = vmatmul.mubr.bf16.gmra.mrb[0].mxu0 %v1396
      %v2766 = vpop.f32.mrb[0].mxu0
      %v2767 = vadd.f32 0.0, %v2766
      %v2768 = vpop.f32.mrb[0].mxu0
      %v2769 = vpop.f32.mrb[0].mxu0
      %v2770 = vadd.f32 0.0, %v2769
      %v2771 = vpop.f32.mrb[0].mxu0
      %2772 = vmatprep.mubr.bf16.mxu0 0
      %2773 = vmatmul.mubr.bf16.gmra.mrb[0].mxu0 %v1399
      %v2774 = vpop.f32.mrb[0].mxu0
      %v2775 = vadd.f32 0.0, %v2774
      %v2776 = vpop.f32.mrb[0].mxu0
      %v2777 = vpop.f32.mrb[0].mxu0
      %v2778 = vadd.f32 0.0, %v2777
      %v2779 = vpop.f32.mrb[0].mxu0
      %2780 = vmatprep.mubr.bf16.mxu0 0
      %2781 = vmatmul.mubr.bf16.gmra.mrb[0].mxu0 %v1402
      %v2782 = vpop.f32.mrb[0].mxu0
      %v2783 = vadd.f32 0.0, %v2782
      %v2784 = vpop.f32.mrb[0].mxu0
      %v2785 = vpop.f32.mrb[0].mxu0
      %v2786 = vadd.f32 0.0, %v2785
      %v2787 = vpop.f32.mrb[0].mxu0
      %2788 = vmatprep.mubr.bf16.mxu0 0
      %2789 = vmatmul.mubr.bf16.gmra.mrb[0].mxu0 %v1405
      %v2790 = vpop.f32.mrb[0].mxu0
      %v2791 = vadd.f32 0.0, %v2790
      %v2792 = vpop.f32.mrb[0].mxu0
      %v2793 = vpop.f32.mrb[0].mxu0
      %v2794 = vadd.f32 0.0, %v2793
      %v2795 = vpop.f32.mrb[0].mxu0
      %2796 = vmatprep.mubr.bf16.mxu0 0
      %2797 = vmatmul.mubr.bf16.gmra.mrb[0].mxu0 %v1408
      %v2798 = vpop.f32.mrb[0].mxu0
      %v2799 = vadd.f32 0.0, %v2798
      %v2800 = vpop.f32.mrb[0].mxu0
      %v2801 = vpop.f32.mrb[0].mxu0
      %v2802 = vadd.f32 0.0, %v2801
      %v2803 = vpop.f32.mrb[0].mxu0
      %2804 = vmatprep.mubr.bf16.mxu0 0
      %2805 = vmatmul.mubr.bf16.gmra.mrb[0].mxu0 %v1411
      %v2806 = vpop.f32.mrb[0].mxu0
      %v2807 = vadd.f32 0.0, %v2806
      %v2808 = vpop.f32.mrb[0].mxu0
      %v2809 = vpop.f32.mrb[0].mxu0
      %v2810 = vadd.f32 0.0, %v2809
      %v2811 = vpop.f32.mrb[0].mxu0
      %2812 = vmatprep.mubr.bf16.mxu0 0
      %2813 = vmatmul.mubr.bf16.gmra.mrb[0].mxu0 %v1414
      %v2814 = vpop.f32.mrb[0].mxu0
      %v2815 = vadd.f32 0.0, %v2814
      %v2816 = vpop.f32.mrb[0].mxu0
      %v2817 = vpop.f32.mrb[0].mxu0
      %v2818 = vadd.f32 0.0, %v2817
      %v2819 = vpop.f32.mrb[0].mxu0
      %2820 = vmatprep.mubr.bf16.mxu0 0
      %2821 = vmatmul.mubr.bf16.gmra.mrb[0].mxu0 %v1417
      %v2822 = vpop.f32.mrb[0].mxu0
      %v2823 = vadd.f32 0.0, %v2822
      %v2824 = vpop.f32.mrb[0].mxu0
      %v2825 = vpop.f32.mrb[0].mxu0
      %v2826 = vadd.f32 0.0, %v2825
      %v2827 = vpop.f32.mrb[0].mxu0
      %2828 = vmatprep.mubr.bf16.mxu0 0
      %2829 = vmatmul.mubr.bf16.gmra.mrb[0].mxu0 %v1420
      %v2830 = vpop.f32.mrb[0].mxu0
      %v2831 = vadd.f32 0.0, %v2830
      %v2832 = vpop.f32.mrb[0].mxu0
      %v2833 = vpop.f32.mrb[0].mxu0
      %v2834 = vadd.f32 0.0, %v2833
      %v2835 = vpop.f32.mrb[0].mxu0
      %2836 = vmatprep.mubr.bf16.mxu0 0
      %2837 = vmatmul.mubr.bf16.gmra.mrb[0].mxu0 %v1423
      %v2838 = vpop.f32.mrb[0].mxu0
      %v2839 = vadd.f32 0.0, %v2838
      %v2840 = vpop.f32.mrb[0].mxu0
      %v2841 = vpop.f32.mrb[0].mxu0
      %v2842 = vadd.f32 0.0, %v2841
      %v2843 = vpop.f32.mrb[0].mxu0
      %2844 = vmatprep.mubr.bf16.mxu0 0
      %2845 = vmatmul.mubr.bf16.gmra.mrb[0].mxu0 %v1426
      %v2846 = vpop.f32.mrb[0].mxu0
      %v2847 = vadd.f32 0.0, %v2846
      %v2848 = vpop.f32.mrb[0].mxu0
      %v2849 = vpop.f32.mrb[0].mxu0
      %v2850 = vadd.f32 0.0, %v2849
      %v2851 = vpop.f32.mrb[0].mxu0
      %2852 = vmatprep.mubr.bf16.mxu0 0
      %2853 = vmatmul.mubr.bf16.gmra.mrb[0].mxu0 %v1429
      %v2854 = vpop.f32.mrb[0].mxu0
      %v2855 = vadd.f32 0.0, %v2854
      %v2856 = vpop.f32.mrb[0].mxu0
      %v2857 = vpop.f32.mrb[0].mxu0
      %v2858 = vadd.f32 0.0, %v2857
      %v2859 = vpop.f32.mrb[0].mxu0
      %2860 = vmatprep.mubr.bf16.mxu0 0
      %2861 = vmatmul.mubr.bf16.gmra.mrb[0].mxu0 %v1432
      %v2862 = vpop.f32.mrb[0].mxu0
      %v2863 = vadd.f32 0.0, %v2862
      %v2864 = vpop.f32.mrb[0].mxu0
      %v2865 = vpop.f32.mrb[0].mxu0
      %v2866 = vadd.f32 0.0, %v2865
      %v2867 = vpop.f32.mrb[0].mxu0
      %2868 = vmatprep.mubr.bf16.mxu0 0
      %2869 = vmatmul.mubr.bf16.gmra.mrb[0].mxu0 %v1435
      %v2870 = vpop.f32.mrb[0].mxu0
      %v2871 = vadd.f32 0.0, %v2870
      %v2872 = vpop.f32.mrb[0].mxu0
      %v2873 = vpop.f32.mrb[0].mxu0
      %v2874 = vadd.f32 0.0, %v2873
      %v2875 = vpop.f32.mrb[0].mxu0
      %2876 = vmatprep.mubr.bf16.mxu0 0
      %2877 = vmatmul.mubr.bf16.gmra.mrb[0].mxu0 %v2081
      %v2878 = vpop.f32.mrb[0].mxu0
      %v2879 = vadd.f32 0.0, %v2878
      %v2880 = vpop.f32.mrb[0].mxu0
      %v2881 = vpop.f32.mrb[0].mxu0
      %v2882 = vadd.f32 0.0, %v2881
      %v2883 = vpop.f32.mrb[0].mxu0
      %2884 = vmatprep.mubr.bf16.mxu0 0
      %2885 = vmatmul.mubr.bf16.gmra.mrb[0].mxu0 %v2727
      %v2886 = vpop.f32.mrb[0].mxu0
      %v2887 = vadd.f32 0.0, %v2886
      %v2888 = vpop.f32.mrb[0].mxu0
      %v2889 = vpop.f32.mrb[0].mxu0
      %v2890 = vadd.f32 0.0, %v2889
      %v2891 = vpop.f32.mrb[0].mxu0
      %2892 = vdwg.mxu0
      %v2893 = vadd.f32 %v2681, %v2767
      %v2894 = vadd.f32 %v2682, %v2770
      %v2895 = vadd.f32 %v2683, %v2775
      %v2896 = vadd.f32 %v2684, %v2778
      %v2897 = vadd.f32 %v2685, %v2783
      %v2898 = vadd.f32 %v2686, %v2786
      %v2899 = vadd.f32 %v2687, %v2791
      %v2900 = vadd.f32 %v2688, %v2794
      %v2901 = vadd.f32 %v2689, %v2799
      %v2902 = vadd.f32 %v2690, %v2802
      %v2903 = vadd.f32 %v2691, %v2807
      %v2904 = vadd.f32 %v2692, %v2810
      %v2905 = vadd.f32 %v2693, %v2815
      %v2906 = vadd.f32 %v2694, %v2818
      %v2907 = vadd.f32 %v2695, %v2823
      %v2908 = vadd.f32 %v2696, %v2826
      %v2909 = vadd.f32 %v2697, %v2831
      %v2910 = vadd.f32 %v2698, %v2834
      %v2911 = vadd.f32 %v2699, %v2839
      %v2912 = vadd.f32 %v2700, %v2842
      %v2913 = vadd.f32 %v2701, %v2847
      %v2914 = vadd.f32 %v2702, %v2850
      %v2915 = vadd.f32 %v2703, %v2855
      %v2916 = vadd.f32 %v2704, %v2858
      %v2917 = vadd.f32 %v2705, %v2863
      %v2918 = vadd.f32 %v2706, %v2866
      %v2919 = vadd.f32 %v2707, %v2871
      %v2920 = vadd.f32 %v2708, %v2874
      %v2921 = vadd.f32 %v2709, %v2879
      %v2922 = vadd.f32 %v2710, %v2882
      %v2923 = vadd.f32 %v2711, %v2887
      %v2924 = vadd.f32 %v2712, %v2890
      %v2925 = vld [vmem:[%s2] sm:$0x1]
      %v2927 = vlaneseq
      %v2928 = vshrl.u32 %v2927, 7
      %v2929 = vsub.s32 0, %v2928
      %v2930 = vrot.slane %v2925, %v2929
      %v2932 = vadd.f32 %v2893, %v2930
      %v2933 = vadd.f32 %v2894, %v2930
      %v2934 = vadd.f32 %v2895, %v2930
      %v2935 = vadd.f32 %v2896, %v2930
      %v2936 = vadd.f32 %v2897, %v2930
      %v2937 = vadd.f32 %v2898, %v2930
      %v2938 = vadd.f32 %v2899, %v2930
      %v2939 = vadd.f32 %v2900, %v2930
      %v2940 = vadd.f32 %v2901, %v2930
      %v2941 = vadd.f32 %v2902, %v2930
      %v2942 = vadd.f32 %v2903, %v2930
      %v2943 = vadd.f32 %v2904, %v2930
      %v2944 = vadd.f32 %v2905, %v2930
      %v2945 = vadd.f32 %v2906, %v2930
      %v2946 = vadd.f32 %v2907, %v2930
      %v2947 = vadd.f32 %v2908, %v2930
      %v2948 = vadd.f32 %v2909, %v2930
      %v2949 = vadd.f32 %v2910, %v2930
      %v2950 = vadd.f32 %v2911, %v2930
      %v2951 = vadd.f32 %v2912, %v2930
      %v2952 = vadd.f32 %v2913, %v2930
      %v2953 = vadd.f32 %v2914, %v2930
      %v2954 = vadd.f32 %v2915, %v2930
      %v2955 = vadd.f32 %v2916, %v2930
      %v2956 = vadd.f32 %v2917, %v2930
      %v2957 = vadd.f32 %v2918, %v2930
      %v2958 = vadd.f32 %v2919, %v2930
      %v2959 = vadd.f32 %v2920, %v2930
      %v2960 = vadd.f32 %v2921, %v2930
      %v2961 = vadd.f32 %v2922, %v2930
      %v2962 = vadd.f32 %v2923, %v2930
      %v2963 = vadd.f32 %v2924, %v2930
      %2964 = vst [vmem:[%s204] sm:$0xff] %v2932
      %2965 = vst [vmem:[%s204 + $0x8] sm:$0xff] %v2933
      %2966 = vst [vmem:[%s204 + $0x10] sm:$0xff] %v2934
      %2967 = vst [vmem:[%s204 + $0x18] sm:$0xff] %v2935
      %2968 = vst [vmem:[%s204 + $0x20] sm:$0xff] %v2936
      %2969 = vst [vmem:[%s204 + $0x28] sm:$0xff] %v2937
      %2970 = vst [vmem:[%s204 + $0x30] sm:$0xff] %v2938
      %2971 = vst [vmem:[%s204 + $0x38] sm:$0xff] %v2939
      %2972 = vst [vmem:[%s204 + $0x40] sm:$0xff] %v2940
      %2973 = vst [vmem:[%s204 + $0x48] sm:$0xff] %v2941
      %2974 = vst [vmem:[%s204 + $0x50] sm:$0xff] %v2942
      %2975 = vst [vmem:[%s204 + $0x58] sm:$0xff] %v2943
      %2976 = vst [vmem:[%s204 + $0x60] sm:$0xff] %v2944
      %2977 = vst [vmem:[%s204 + $0x68] sm:$0xff] %v2945
      %2978 = vst [vmem:[%s204 + $0x70] sm:$0xff] %v2946
      %2979 = vst [vmem:[%s204 + $0x78] sm:$0xff] %v2947
      %2980 = vst [vmem:[%s204 + $0x80] sm:$0xff] %v2948
      %2981 = vst [vmem:[%s204 + $0x88] sm:$0xff] %v2949
      %2982 = vst [vmem:[%s204 + $0x90] sm:$0xff] %v2950
      %2983 = vst [vmem:[%s204 + $0x98] sm:$0xff] %v2951
      %2984 = vst [vmem:[%s204 + $0xa0] sm:$0xff] %v2952
      %2985 = vst [vmem:[%s204 + $0xa8] sm:$0xff] %v2953
      %2986 = vst [vmem:[%s204 + $0xb0] sm:$0xff] %v2954
      %2987 = vst [vmem:[%s204 + $0xb8] sm:$0xff] %v2955
      %2988 = vst [vmem:[%s204 + $0xc0] sm:$0xff] %v2956
      %2989 = vst [vmem:[%s204 + $0xc8] sm:$0xff] %v2957
      %2990 = vst [vmem:[%s204 + $0xd0] sm:$0xff] %v2958
      %2991 = vst [vmem:[%s204 + $0xd8] sm:$0xff] %v2959
      %2992 = vst [vmem:[%s204 + $0xe0] sm:$0xff] %v2960
      %2993 = vst [vmem:[%s204 + $0xe8] sm:$0xff] %v2961
      %2994 = vst [vmem:[%s204 + $0xf0] sm:$0xff] %v2962
      %2995 = vst [vmem:[%s204 + $0xf8] sm:$0xff] %v2963
      %v2996 = vadd.f32 %v2932, %v2933
      %v2997 = vadd.f32 %v2996, %v2934
      %v2998 = vadd.f32 %v2997, %v2935
      %v2999 = vadd.f32 %v2998, %v2936
      %v3000 = vadd.f32 %v2999, %v2937
      %v3001 = vadd.f32 %v3000, %v2938
      %v3002 = vadd.f32 %v3001, %v2939
      %v3003 = vadd.f32 %v3002, %v2940
      %v3004 = vadd.f32 %v3003, %v2941
      %v3005 = vadd.f32 %v3004, %v2942
      %v3006 = vadd.f32 %v3005, %v2943
      %v3007 = vadd.f32 %v3006, %v2944
      %v3008 = vadd.f32 %v3007, %v2945
      %v3009 = vadd.f32 %v3008, %v2946
      %v3010 = vadd.f32 %v3009, %v2947
      %v3011 = vadd.f32 %v3010, %v2948
      %v3012 = vadd.f32 %v3011, %v2949
      %v3013 = vadd.f32 %v3012, %v2950
      %v3014 = vadd.f32 %v3013, %v2951
      %v3015 = vadd.f32 %v3014, %v2952
      %v3016 = vadd.f32 %v3015, %v2953
      %v3017 = vadd.f32 %v3016, %v2954
      %v3018 = vadd.f32 %v3017, %v2955
      %v3019 = vadd.f32 %v3018, %v2956
      %v3020 = vadd.f32 %v3019, %v2957
      %v3021 = vadd.f32 %v3020, %v2958
      %v3022 = vadd.f32 %v3021, %v2959
      %v3023 = vadd.f32 %v3022, %v2960
      %v3024 = vadd.f32 %v3023, %v2961
      %v3025 = vadd.f32 %v3024, %v2962
      %v3026 = vadd.f32 %v3025, %v2963
      %v3027 = vrot.slane %v3026, 4
      %v3028 = vadd.f32 %v3026, %v3027
      %v3029 = vrot.slane %v3028, 2
      %v3030 = vadd.f32 %v3028, %v3029
      %v3031 = vrot.slane %v3030, 1
      %v3032 = vadd.f32 %v3030, %v3031
      %v3033 = vmul.f32 %v2932, %v2932
      %v3034 = vmul.f32 %v2933, %v2933
      %v3035 = vmul.f32 %v2934, %v2934
      %v3036 = vmul.f32 %v2935, %v2935
      %v3037 = vmul.f32 %v2936, %v2936
      %v3038 = vmul.f32 %v2937, %v2937
      %v3039 = vmul.f32 %v2938, %v2938
      %v3040 = vmul.f32 %v2939, %v2939
      %v3041 = vmul.f32 %v2940, %v2940
      %v3042 = vmul.f32 %v2941, %v2941
      %v3043 = vmul.f32 %v2942, %v2942
      %v3044 = vmul.f32 %v2943, %v2943
      %v3045 = vmul.f32 %v2944, %v2944
      %v3046 = vmul.f32 %v2945, %v2945
      %v3047 = vmul.f32 %v2946, %v2946
      %v3048 = vmul.f32 %v2947, %v2947
      %v3049 = vmul.f32 %v2948, %v2948
      %v3050 = vmul.f32 %v2949, %v2949
      %v3051 = vmul.f32 %v2950, %v2950
      %v3052 = vmul.f32 %v2951, %v2951
      %v3053 = vmul.f32 %v2952, %v2952
      %v3054 = vmul.f32 %v2953, %v2953
      %v3055 = vmul.f32 %v2954, %v2954
      %v3056 = vmul.f32 %v2955, %v2955
      %v3057 = vmul.f32 %v2956, %v2956
      %v3058 = vmul.f32 %v2957, %v2957
      %v3059 = vmul.f32 %v2958, %v2958
      %v3060 = vmul.f32 %v2959, %v2959
      %v3061 = vmul.f32 %v2960, %v2960
      %v3062 = vmul.f32 %v2961, %v2961
      %v3063 = vmul.f32 %v2962, %v2962
      %v3064 = vmul.f32 %v2963, %v2963
      %v3065 = vadd.f32 %v3033, %v3034
      %v3066 = vadd.f32 %v3065, %v3035
      %v3067 = vadd.f32 %v3066, %v3036
      %v3068 = vadd.f32 %v3067, %v3037
      %v3069 = vadd.f32 %v3068, %v3038
      %v3070 = vadd.f32 %v3069, %v3039
      %v3071 = vadd.f32 %v3070, %v3040
      %v3072 = vadd.f32 %v3071, %v3041
      %v3073 = vadd.f32 %v3072, %v3042
      %v3074 = vadd.f32 %v3073, %v3043
      %v3075 = vadd.f32 %v3074, %v3044
      %v3076 = vadd.f32 %v3075, %v3045
      %v3077 = vadd.f32 %v3076, %v3046
      %v3078 = vadd.f32 %v3077, %v3047
      %v3079 = vadd.f32 %v3078, %v3048
      %v3080 = vadd.f32 %v3079, %v3049
      %v3081 = vadd.f32 %v3080, %v3050
      %v3082 = vadd.f32 %v3081, %v3051
      %v3083 = vadd.f32 %v3082, %v3052
      %v3084 = vadd.f32 %v3083, %v3053
      %v3085 = vadd.f32 %v3084, %v3054
      %v3086 = vadd.f32 %v3085, %v3055
      %v3087 = vadd.f32 %v3086, %v3056
      %v3088 = vadd.f32 %v3087, %v3057
      %v3089 = vadd.f32 %v3088, %v3058
      %v3090 = vadd.f32 %v3089, %v3059
      %v3091 = vadd.f32 %v3090, %v3060
      %v3092 = vadd.f32 %v3091, %v3061
      %v3093 = vadd.f32 %v3092, %v3062
      %v3094 = vadd.f32 %v3093, %v3063
      %v3095 = vadd.f32 %v3094, %v3064
      %v3096 = vrot.slane %v3095, 4
      %v3097 = vadd.f32 %v3095, %v3096
      %v3098 = vrot.slane %v3097, 2
      %v3099 = vadd.f32 %v3097, %v3098
      %v3100 = vrot.slane %v3099, 1
      %v3101 = vadd.f32 %v3099, %v3100
      %vm3102 = vcmask 1040384
      %v3103 = vsel %vm3102, %v3032, %v3101
      %3104 = vst [vmem:[%s208] sm:$0x3] %v3103
      %p3105 = scmp.lt.s32.totalorder %s16, 1
      %s3106 = scalar_select %p3105, %s16, 1
      %s3107 = smul.addr %s3106, 32
      %s3108 = smul.addr %s3107, 8
      %s3109 = scalar_lea.vmem %s3, %s3108
      %p3110 = scmp.lt.s32.totalorder %s16, 1
      %s3111 = scalar_select %p3110, %s16, 1
      %s3112 = smul.addr %s3111, 2
      %s3113 = scalar_lea.vmem %s4, %s3112
      // Predicated region
      $region33: #{ours_forward.2} parent=31 // pred_check
        %p3114 = pneg %p102
      $region34: #{ours_forward.2} parent=31 // pred_check_branch
        %3116 = sbr.rel (%p3114) target = $region36
      $region35: #{ours_forward.2} parent=31 // pred_region
        _
      $region36: #{ours_forward.2} parent=31 // pred_fallthru
        _
      // Predicated region
      $region37: #{ours_forward.2} parent=31 // pred_check
        %p3117 = pneg %p128
      $region38: #{ours_forward.2} parent=31 // pred_check_branch
        %3119 = sbr.rel (%p3117) target = $region40
      $region39: #{ours_forward.2} parent=31 // pred_region
        _
      $region40: #{ours_forward.2} parent=31 // pred_fallthru
        _
    $region32: #{ours_forward.2} parent=5 // pred_fallthru
      _
    %p3120 = scmp.le.s32.totalorder 2, %s11
    // Predicated region
    $region41: #{ours_forward.2} parent=5 // pred_check
      %p3121 = pneg %p3120
    $region42: #{ours_forward.2} parent=5 // pred_check_branch
      %3123 = sbr.rel (%p3121) target = $region44
    $region43: #{ours_forward.2} parent=5 // pred_region
      %s3124 = ssub.s32 %s11, 2
      // Predicated region
      $region45: #{ours_forward.2} parent=43 // pred_check
        %p3125 = pneg %p108
      $region46: #{ours_forward.2} parent=43 // pred_check_branch
        %3127 = sbr.rel (%p3125) target = $region48
      $region47: #{ours_forward.2} parent=43 // pred_region
        %p3128 = scmp.lt.s32.totalorder %s17, 1
        %s3129 = scalar_select %p3128, %s17, 1
        %s3130 = smul.addr %s3129, 32
        %s3131 = smul.addr %s3130, 8
        %s3132 = scalar_lea.vmem %s3, %s3131
      $region48: #{ours_forward.2} parent=43 // pred_fallthru
        _
      // Predicated region
      $region49: #{ours_forward.2} parent=43 // pred_check
        %p3133 = pneg %p134
      $region50: #{ours_forward.2} parent=43 // pred_check_branch
        %3135 = sbr.rel (%p3133) target = $region52
      $region51: #{ours_forward.2} parent=43 // pred_region
        %p3136 = scmp.lt.s32.totalorder %s17, 1
        %s3137 = scalar_select %p3136, %s17, 1
        %s3138 = smul.addr %s3137, 2
        %s3139 = scalar_lea.vmem %s4, %s3138
      $region52: #{ours_forward.2} parent=43 // pred_fallthru
        _
    $region44: #{ours_forward.2} parent=5 // pred_fallthru
      _
  $region6: #{ours_forward.2} parent=0 // loop_footer
    %s15 = sadd.s32 1, %s11
  $region7: #{ours_forward.2} parent=0 // loop_footer_branch
    %10 = sbr.rel target = $region3
  $region8: #{ours_forward.2} parent=0 // loop_exit
    _

</llo_original>
